<compile_context>
chip_gen: v6e
topology: v6e:2x2x1
jax: 0.10.0
libtpu: 0.0.40
codegen_flags: <defaults>
</compile_context>

<pallas_src>
from functools import partial
import math

import jax
import jax.numpy as jnp
from jax.experimental import pallas as pl
from jax.experimental.pallas import tpu as pltpu


# ---------------------------------------------------------------------------
# In-kernel helpers
# ---------------------------------------------------------------------------

def _mm(a, b):
    """MXU matmul with bf16 operands, f32 accumulation."""
    return jnp.dot(a.astype(jnp.bfloat16), b.astype(jnp.bfloat16),
                   preferred_element_type=jnp.float32)


def _l2n(x):
    """x / (||x||_2 over channel dim + 1e-5), denominator via EUP reciprocal."""
    nrm = jnp.sqrt(jnp.sum(x * x, axis=0, keepdims=True))
    return x * pl.reciprocal(nrm + 1e-5, approx=True)


def _mosaic_params(grid_len, block_shapes):
    """parallel grid axes + vmem limit sized from block bytes (x2 double-buffer)."""
    blk = sum(math.prod(s) for s in block_shapes) * 4
    vmem = int(min(32 << 20, max(4 << 20, 2 * blk + (2 << 20))))
    return pltpu.CompilerParams(
        dimension_semantics=("parallel",) * grid_len,
        vmem_limit_bytes=vmem)


# ---------------------------------------------------------------------------
# Fused backbone / side-branch / classifier kernels (one per resolution)
# ---------------------------------------------------------------------------

def _stage01_kernel(w0_ref, w1_ref, ws1_ref, x_ref, x1_ref, s1n_ref):
    x = x_ref[0]                                        # (3, HW)
    h0 = jnp.maximum(_mm(w0_ref[...], x), 0.0)          # stage0
    x1 = jnp.maximum(_mm(w1_ref[...], h0), 0.0)         # stage1
    x1_ref[0] = x1
    s1n_ref[0] = _l2n(_mm(ws1_ref[...], x1))            # side1 + L2 norm


def backbone_stage01(w0, w1, ws1, x_s4):
    N, Cin, H, W = x_s4.shape
    HW = H * W
    C1, Cs1 = w1.shape[0], ws1.shape[0]
    blocks = [w0.shape, w1.shape, ws1.shape,
              (1, Cin, HW), (1, C1, HW), (1, Cs1, HW)]
    x1, s1n = pl.pallas_call(
        _stage01_kernel,
        out_shape=(jax.ShapeDtypeStruct((N, C1, HW), jnp.float32),
                   jax.ShapeDtypeStruct((N, Cs1, HW), jnp.float32)),
        grid=(N,),
        in_specs=[pl.BlockSpec(w0.shape, lambda i: (0, 0)),
                  pl.BlockSpec(w1.shape, lambda i: (0, 0)),
                  pl.BlockSpec(ws1.shape, lambda i: (0, 0)),
                  pl.BlockSpec((1, Cin, HW), lambda i: (i, 0, 0))],
        out_specs=(pl.BlockSpec((1, C1, HW), lambda i: (i, 0, 0)),
                   pl.BlockSpec((1, Cs1, HW), lambda i: (i, 0, 0))),
        compiler_params=_mosaic_params(1, blocks),
    )(w0, w1, ws1, x_s4.reshape(N, Cin, HW))
    return x1.reshape(N, C1, H, W), s1n.reshape(N, Cs1, H, W)


def _stage2_kernel(w2_ref, ws2_ref, x_ref, x2_ref, s2n_ref):
    x2 = jnp.maximum(_mm(w2_ref[...], x_ref[0]), 0.0)   # stage2
    x2_ref[0] = x2
    s2n_ref[0] = _l2n(_mm(ws2_ref[...], x2))            # side2 + L2 norm


def backbone_stage2(w2, ws2, x1_s2):
    N, Cin, H, W = x1_s2.shape
    HW = H * W
    C2, Cs2 = w2.shape[0], ws2.shape[0]
    blocks = [w2.shape, ws2.shape, (1, Cin, HW), (1, C2, HW), (1, Cs2, HW)]
    x2, s2n = pl.pallas_call(
        _stage2_kernel,
        out_shape=(jax.ShapeDtypeStruct((N, C2, HW), jnp.float32),
                   jax.ShapeDtypeStruct((N, Cs2, HW), jnp.float32)),
        grid=(N,),
        in_specs=[pl.BlockSpec(w2.shape, lambda i: (0, 0)),
                  pl.BlockSpec(ws2.shape, lambda i: (0, 0)),
                  pl.BlockSpec((1, Cin, HW), lambda i: (i, 0, 0))],
        out_specs=(pl.BlockSpec((1, C2, HW), lambda i: (i, 0, 0)),
                   pl.BlockSpec((1, Cs2, HW), lambda i: (i, 0, 0))),
        compiler_params=_mosaic_params(1, blocks),
    )(w2, ws2, x1_s2.reshape(N, Cin, HW))
    return x2.reshape(N, C2, H, W), s2n.reshape(N, Cs2, H, W)


def _stage34_kernel(w3_ref, w4_ref, ws3_ref, ws4_ref, wc_ref, x_ref,
                    x4_ref, s3n_ref, s4n_ref, cam_ref):
    x3 = jnp.maximum(_mm(w3_ref[...], x_ref[0]), 0.0)   # stage3
    x4 = jnp.maximum(_mm(w4_ref[...], x3), 0.0)         # stage4
    x4_ref[0] = x4
    s3n_ref[0] = _l2n(_mm(ws3_ref[...], x3))            # side3 + L2 norm
    s4n_ref[0] = _l2n(_mm(ws4_ref[...], x4))            # side4 + L2 norm
    cam_ref[0] = _mm(wc_ref[...], x4)                   # classifier (row 0 / padded rows = 0)


def backbone_stage34(w3, w4, ws3, ws4, wc_pad, x2_s2):
    N, Cin, H, W = x2_s2.shape
    HW = H * W
    C4, Cs3, Cs4, Cc = w4.shape[0], ws3.shape[0], ws4.shape[0], wc_pad.shape[0]
    blocks = [w3.shape, w4.shape, ws3.shape, ws4.shape, wc_pad.shape,
              (1, Cin, HW), (1, C4, HW), (1, Cs3, HW), (1, Cs4, HW), (1, Cc, HW)]
    x4, s3n, s4n, cam = pl.pallas_call(
        _stage34_kernel,
        out_shape=(jax.ShapeDtypeStruct((N, C4, HW), jnp.float32),
                   jax.ShapeDtypeStruct((N, Cs3, HW), jnp.float32),
                   jax.ShapeDtypeStruct((N, Cs4, HW), jnp.float32),
                   jax.ShapeDtypeStruct((N, Cc, HW), jnp.float32)),
        grid=(N,),
        in_specs=[pl.BlockSpec(w3.shape, lambda i: (0, 0)),
                  pl.BlockSpec(w4.shape, lambda i: (0, 0)),
                  pl.BlockSpec(ws3.shape, lambda i: (0, 0)),
                  pl.BlockSpec(ws4.shape, lambda i: (0, 0)),
                  pl.BlockSpec(wc_pad.shape, lambda i: (0, 0)),
                  pl.BlockSpec((1, Cin, HW), lambda i: (i, 0, 0))],
        out_specs=(pl.BlockSpec((1, C4, HW), lambda i: (i, 0, 0)),
                   pl.BlockSpec((1, Cs3, HW), lambda i: (i, 0, 0)),
                   pl.BlockSpec((1, Cs4, HW), lambda i: (i, 0, 0)),
                   pl.BlockSpec((1, Cc, HW), lambda i: (i, 0, 0))),
        compiler_params=_mosaic_params(1, blocks),
    )(w3, w4, ws3, ws4, wc_pad, x2_s2.reshape(N, Cin, HW))
    return (x4.reshape(N, C4, H, W), s3n.reshape(N, Cs3, H, W),
            s4n.reshape(N, Cs4, H, W), cam.reshape(N, Cc, H, W))


# ---------------------------------------------------------------------------
# CAM normalization (relu -> spatial max-norm -> background channel in row 0)
# ---------------------------------------------------------------------------

def _cam_norm_kernel(cam_ref, o_ref):
    cam = jnp.maximum(cam_ref[0], 0.0)                   # (C_pad, HW); row 0 & pads are 0
    mx = jnp.max(cam, axis=1, keepdims=True)             # adaptive_max_pool2d (per-channel)
    norm = cam * pl.reciprocal(mx + 1e-5, approx=True)
    bkg = 1.0 - jnp.max(norm, axis=0, keepdims=True)     # (1, HW); zero rows never raise max
    C, HW = norm.shape
    ch = jax.lax.broadcasted_iota(jnp.int32, (C, HW), 0)
    # Background lands in the (already-reserved, zero) row 0: one full aligned
    # tile store, no sublane-offset slice stores.
    o_ref[0] = jnp.where(ch == 0, bkg, norm)


def cam_normalize(cam_pad):
    # cam_pad: (N, C_pad, H, W); row 0 (bkg slot) and rows >= num_cls are zero.
    N, Cc, H, W = cam_pad.shape
    HW = H * W
    blocks = [(1, Cc, HW), (1, Cc, HW)]
    out = pl.pallas_call(
        _cam_norm_kernel,
        out_shape=jax.ShapeDtypeStruct((N, Cc, HW), jnp.float32),
        grid=(N,),
        in_specs=[pl.BlockSpec((1, Cc, HW), lambda i: (i, 0, 0))],
        out_specs=pl.BlockSpec((1, Cc, HW), lambda i: (i, 0, 0)),
        compiler_params=_mosaic_params(1, blocks),
    )(cam_pad.reshape(N, Cc, HW))
    return out.reshape(N, Cc, H, W)


# ---------------------------------------------------------------------------
# PCM (f9 1x1-conv projection fused in)
# ---------------------------------------------------------------------------

def _pcm_kernel(wf9_ref, cam_ref, pin_ref, o_ref):
    # f = f9(cat(x, x4)); normalize over channels
    f = _l2n(_mm(wf9_ref[...], pin_ref[0]))              # (Cf, HW)
    fb = f.astype(jnp.bfloat16)
    # aff[i, j] = sum_c f[c, i] * f[c, j]
    aff = jax.lax.dot_general(fb, fb, (((0,), (0,)), ((), ())),
                              preferred_element_type=jnp.float32)    # (HW, HW)
    aff = jnp.maximum(aff, 0.0)
    hw = aff.shape[0]
    # column sums (torch: sum over dim=1) as an MXU matvec instead of an XLU
    # cross-sublane reduction.
    colsum = jnp.dot(jnp.ones((1, hw), jnp.float32), aff,
                     preferred_element_type=jnp.float32)             # (1, HW)
    aff = aff * pl.reciprocal(colsum + 1e-5, approx=True)
    affb = aff.astype(jnp.bfloat16)
    cam = cam_ref[0]                                                 # (C_pad, HW)
    c1 = jnp.dot(cam.astype(jnp.bfloat16), affb, preferred_element_type=jnp.float32)
    c2 = jnp.dot(c1.astype(jnp.bfloat16), affb, preferred_element_type=jnp.float32)
    o_ref[0] = c2
    # TODO(synk): for large HW, block aff over HW-column tiles so the (HW, HW)
    # affinity never fully materializes in VMEM (v7x has 64 MiB physical VMEM).


def pcm_refine(wf9, cam_pad, pcm_in):
    N, Cc, H, W = cam_pad.shape
    Cpin = pcm_in.shape[1]
    HW = H * W
    blocks = [wf9.shape, (1, Cc, HW), (1, Cpin, HW), (1, Cc, HW), (HW, HW)]
    out = pl.pallas_call(
        _pcm_kernel,
        out_shape=jax.ShapeDtypeStruct((N, Cc, HW), jnp.float32),
        grid=(N,),
        in_specs=[pl.BlockSpec(wf9.shape, lambda i: (0, 0)),
                  pl.BlockSpec((1, Cc, HW), lambda i: (i, 0, 0)),
                  pl.BlockSpec((1, Cpin, HW), lambda i: (i, 0, 0))],
        out_specs=pl.BlockSpec((1, Cc, HW), lambda i: (i, 0, 0)),
        compiler_params=_mosaic_params(1, blocks),
    )(wf9, cam_pad.reshape(N, Cc, HW), pcm_in.reshape(N, Cpin, HW))
    return out.reshape(N, Cc, H, W)


# ---------------------------------------------------------------------------
# prototype() : seeds -> masked avg-pool prototypes -> relu(cosine similarity)
# ---------------------------------------------------------------------------

def _proto_kernel(valid_ref, cam_ref, feat_ref, o_ref):
    cam = cam_ref[0]                                     # (C_pad, HW)
    C, HW = cam.shape
    ch = jax.lax.broadcasted_iota(jnp.int32, (C, HW), 0)
    cam = cam * jnp.where(ch == 0, 0.3, 1.0)             # norm_cam[:,0] *= 0.3
    # argmax over channel (first index on ties) -> one-hot seeds.  Padded rows
    # are all-zero so they can never beat channel 0 under min-index tie-break.
    mx = jnp.max(cam, axis=0, keepdims=True)
    cand = jnp.where(cam == mx, ch, C)
    belonging = jnp.min(cand, axis=0, keepdims=True)     # (1, HW)
    seeds = (ch == belonging).astype(jnp.float32)        # (C, HW)
    # per-class valid mask assembled from SMEM scalars (no VMEM tile / DMA)
    ch_col = jax.lax.broadcasted_iota(jnp.int32, (C, 1), 0)
    mask = jnp.zeros((C, 1), jnp.float32)
    for c in range(C):                                   # static unroll, C_pad small
        mask = jnp.where(ch_col == c, valid_ref[c], mask)
    seeds = seeds * mask
    feat = feat_ref[0]                                   # (Cs, HW)
    seeds_b = seeds.astype(jnp.bfloat16)
    feat_b = feat.astype(jnp.bfloat16)
    # prototype[c] = mean over HW of seeds[c, p] * feat[:, p]   (MXU)
    proto = jax.lax.dot_general(seeds_b, feat_b, (((1,), (1,)), ((), ())),
                                preferred_element_type=jnp.float32) * (1.0 / HW)
    dots = jnp.dot(proto.astype(jnp.bfloat16), feat_b,
                   preferred_element_type=jnp.float32)   # (C, HW)
    pn = jnp.sqrt(jnp.sum(proto * proto, axis=1, keepdims=True))    # (C, 1)
    fn = jnp.sqrt(jnp.sum(feat * feat, axis=0, keepdims=True))      # (1, HW)
    denom = jnp.maximum(pn, 1e-8) * jnp.maximum(fn, 1e-8)
    cos = dots * pl.reciprocal(denom, approx=True)
    o_ref[0] = jnp.maximum(cos, 0.0)


def prototype_is_cam(norm_cam_pad, feature, valid_pad):
    N, Cc, H, W = norm_cam_pad.shape
    Cs = feature.shape[1]
    HW = H * W
    blocks = [(1, Cc, HW), (1, Cs, HW), (1, Cc, HW)]
    out = pl.pallas_call(
        _proto_kernel,
        out_shape=jax.ShapeDtypeStruct((N, Cc, HW), jnp.float32),
        grid=(N,),
        in_specs=[pl.BlockSpec(memory_space=pltpu.MemorySpace.SMEM),
                  pl.BlockSpec((1, Cc, HW), lambda i: (i, 0, 0)),
                  pl.BlockSpec((1, Cs, HW), lambda i: (i, 0, 0))],
        out_specs=pl.BlockSpec((1, Cc, HW), lambda i: (i, 0, 0)),
        compiler_params=_mosaic_params(1, blocks),
    )(valid_pad, norm_cam_pad.reshape(N, Cc, HW), feature.reshape(N, Cs, HW))
    return out.reshape(N, Cc, H, W)


# ---------------------------------------------------------------------------
# Plain-JAX glue: bilinear resize matching F.interpolate semantics
# ---------------------------------------------------------------------------

def interpolate_bilinear(x, out_hw, align_corners):
    N, C, H, W = x.shape
    oh, ow = out_hw
    if (H, W) == (oh, ow):
        return x
    if align_corners:
        ys = jnp.linspace(0.0, H - 1.0, oh) if oh > 1 else jnp.zeros((oh,), jnp.float32)
        xs = jnp.linspace(0.0, W - 1.0, ow) if ow > 1 else jnp.zeros((ow,), jnp.float32)
    else:
        ys = jnp.clip((jnp.arange(oh) + 0.5) * (H / oh) - 0.5, 0.0, H - 1.0)
        xs = jnp.clip((jnp.arange(ow) + 0.5) * (W / ow) - 0.5, 0.0, W - 1.0)
    y0 = jnp.floor(ys).astype(jnp.int32); y1 = jnp.minimum(y0 + 1, H - 1)
    x0 = jnp.floor(xs).astype(jnp.int32); x1 = jnp.minimum(x0 + 1, W - 1)
    wy = (ys - y0.astype(jnp.float32))[None, None, :, None]
    wx = (xs - x0.astype(jnp.float32))[None, None, None, :]
    g = lambda yi, xi: x[:, :, yi, :][:, :, :, xi]
    top = g(y0, x0) * (1.0 - wx) + g(y0, x1) * wx
    bot = g(y1, x0) * (1.0 - wx) + g(y1, x1) * wx
    return top * (1.0 - wy) + bot * wy


# ---------------------------------------------------------------------------
# CAM forward
# ---------------------------------------------------------------------------

def cam_forward(params, x, label):
    num_cls = params['num_cls']
    c_pad = params['classifier_pad'].shape[0]

    # ---- backbone stand-in + side branches + classifier (3 fused kernels) ----
    x1, side1n = backbone_stage01(params['stage0'], params['stage1'],
                                  params['side1'], x[:, :, ::4, ::4])
    x2, side2n = backbone_stage2(params['stage2'], params['side2'],
                                 x1[:, :, ::2, ::2])
    x4, side3n, side4n, cam = backbone_stage34(
        params['stage3'], params['stage4'], params['side3'], params['side4'],
        params['classifier_pad'], x2[:, :, ::2, ::2])

    tgt = (side3n.shape[2], side3n.shape[3])
    hie_fea = jnp.concatenate([
        interpolate_bilinear(side1n, tgt, align_corners=False),
        interpolate_bilinear(side2n, tgt, align_corners=False),
        interpolate_bilinear(side3n, tgt, align_corners=False),
        interpolate_bilinear(side4n, tgt, align_corners=False),
    ], axis=1)

    # ---- flip-and-add fusion of the two augmented views (batch 2 -> 1) ----
    cam = (cam[0] + jnp.flip(cam[1], axis=-1))[None]
    hie_fea = (hie_fea[0] + jnp.flip(hie_fea[1], axis=-1))[None]

    norm_cam = cam_normalize(cam)                                    # relu/max-norm/bkg
    norm_cam = interpolate_bilinear(norm_cam, tgt, align_corners=True)
    orignal_cam = norm_cam

    x_f = (x[0] + jnp.flip(x[1], axis=-1))[None]
    x4_f = (x4[0] + jnp.flip(x4[1], axis=-1))[None]
    # (x3 flip-add is computed in the PyTorch code but unused)

    # ---- PCM (f9 projection fused inside the kernel) ----
    pcm_in = jnp.concatenate(
        [interpolate_bilinear(x_f, tgt, align_corners=True), x4_f], axis=1)
    cam_in = interpolate_bilinear(norm_cam, (pcm_in.shape[2], pcm_in.shape[3]),
                                  align_corners=True)
    norm_cam = pcm_refine(params['f9'], cam_in, pcm_in)

    # ---- prototype / IS_cam (per-class valid mask in SMEM) ----
    valid_pad = jnp.zeros((c_pad,), jnp.float32).at[:num_cls].set(
        label.reshape(num_cls))
    IS_cam = prototype_is_cam(norm_cam, hie_fea, valid_pad)

    # slice off the sublane padding of the CAM path
    return (norm_cam[0, :num_cls], IS_cam[0, :num_cls], orignal_cam[0, :num_cls])


# ---------------------------------------------------------------------------
# Deterministic parameter init (shapes follow the module, scaled down)
# ---------------------------------------------------------------------------

def init_params(key, num_cls):
    C0, C1, C2, C3, C4 = 8, 16, 32, 64, 128
    names_shapes = [
        ('stage0', (C0, 3)), ('stage1', (C1, C0)), ('stage2', (C2, C1)),
        ('stage3', (C3, C2)), ('stage4', (C4, C3)),
        ('side1', (32, C1)), ('side2', (32, C2)),
        ('side3', (64, C3)), ('side4', (64, C4)),
        ('classifier', (num_cls - 1, C4)), ('f9', (C4, 3 + C4)),
    ]
    keys = jax.random.split(key, len(names_shapes))
    params = {n: 0.1 * jax.random.normal(k, s, jnp.float32)
              for (n, s), k in zip(names_shapes, keys)}
    # Pad classifier output rows to a multiple of 8 sublanes and reserve row 0
    # for the background channel (stays exactly zero through the classifier
    # matmul), so cam_normalize can overwrite row 0 in place with a single
    # aligned full-tile store.  Padded rows are exactly zero, so they never win
    # the CAM argmax or the background max.
    c_pad = ((num_cls + 7) // 8) * 8
    params['classifier_pad'] = jnp.zeros((c_pad, C4), jnp.float32).at[
        1:num_cls].set(params['classifier'])
    params['num_cls'] = num_cls
    return params


if __name__ == "__main__":
    num_cls = 5
    key = jax.random.PRNGKey(0)
    kx, kp = jax.random.split(key)
    x = jax.random.normal(kx, (2, 3, 64, 64), jnp.float32)
    label = jnp.ones((num_cls, 1, 1), jnp.float32)   # image-level labels incl. background
    params = init_params(kp, num_cls)

    fwd = jax.jit(partial(cam_forward, params))
    norm_cam, is_cam, orig_cam = fwd(x, label)
    jax.block_until_ready((norm_cam, is_cam, orig_cam))

    assert norm_cam.shape == (num_cls, 4, 4)
    assert is_cam.shape == (num_cls, 4, 4)
    assert orig_cam.shape == (num_cls, 4, 4)
    print("KERNEL_OK")
</pallas_src>

<mosaic_0001>
module attributes {stable_mosaic.version = 11 : i64} {
  func.func @_stage01_kernel(%arg0: i32, %arg1: memref<8x3xf32, #tpu.memory_space<vmem>>, %arg2: memref<16x8xf32, #tpu.memory_space<vmem>>, %arg3: memref<32x16xf32, #tpu.memory_space<vmem>>, %arg4: memref<1x3x256xf32, #tpu.memory_space<vmem>>, %arg5: memref<1x16x256xf32, #tpu.memory_space<vmem>>, %arg6: memref<1x32x256xf32, #tpu.memory_space<vmem>>) attributes {dimension_semantics = [#tpu.dimension_semantics<parallel>], iteration_bounds = array<i64: 2>, scalar_prefetch = 0 : i64, scratch_operands = 0 : i64, tpu.core_type = #tpu.core_type<tc>, window_params = [{pipeline_mode = #tpu.pipeline_mode<synchronous>, transform_indices = @transform_0, window_bounds = array<i64: 8, 3>}, {pipeline_mode = #tpu.pipeline_mode<synchronous>, transform_indices = @transform_1, window_bounds = array<i64: 16, 8>}, {pipeline_mode = #tpu.pipeline_mode<synchronous>, transform_indices = @transform_2, window_bounds = array<i64: 32, 16>}, {transform_indices = @transform_3, window_bounds = array<i64: 1, 3, 256>}, {transform_indices = @transform_4, window_bounds = array<i64: 1, 16, 256>}, {transform_indices = @transform_5, window_bounds = array<i64: 1, 32, 256>}]} {
    %c0 = arith.constant 0 : index
    %c0_0 = arith.constant 0 : index
    %c0_1 = arith.constant 0 : index
    %0 = vector.load %arg4[%c0, %c0_0, %c0_1] : memref<1x3x256xf32, #tpu.memory_space<vmem>>, vector<1x3x256xf32>
    %1 = vector.shape_cast %0 : vector<1x3x256xf32> to vector<3x256xf32>
    %c0_2 = arith.constant 0 : index
    %c0_3 = arith.constant 0 : index
    %2 = vector.load %arg1[%c0_2, %c0_3] : memref<8x3xf32, #tpu.memory_space<vmem>>, vector<8x3xf32>
    %3 = arith.truncf %2 : vector<8x3xf32> to vector<8x3xbf16>
    %4 = arith.truncf %1 : vector<3x256xf32> to vector<3x256xbf16>
    %cst = arith.constant dense<0.000000e+00> : vector<8x256xf32>
    %5 = tpu.matmul %3, %4, %cst {dimension_numbers = #tpu.dot_dimension_numbers<[1], [0], [0], [1], [0, 0, 1, 1], [], []>} : vector<8x3xbf16>, vector<3x256xbf16>, vector<8x256xf32> -> vector<8x256xf32>
    %cst_4 = arith.constant 0.000000e+00 : f32
    %6 = vector.broadcast %cst_4 : f32 to vector<8x256xf32>
    %7 = arith.maximumf %5, %6 : vector<8x256xf32>
    %c0_5 = arith.constant 0 : index
    %c0_6 = arith.constant 0 : index
    %8 = vector.load %arg2[%c0_5, %c0_6] : memref<16x8xf32, #tpu.memory_space<vmem>>, vector<16x8xf32>
    %9 = arith.truncf %8 : vector<16x8xf32> to vector<16x8xbf16>
    %10 = arith.truncf %7 : vector<8x256xf32> to vector<8x256xbf16>
    %cst_7 = arith.constant dense<0.000000e+00> : vector<16x256xf32>
    %11 = tpu.matmul %9, %10, %cst_7 {dimension_numbers = #tpu.dot_dimension_numbers<[1], [0], [0], [1], [0, 0, 1, 1], [], []>} : vector<16x8xbf16>, vector<8x256xbf16>, vector<16x256xf32> -> vector<16x256xf32>
    %cst_8 = arith.constant 0.000000e+00 : f32
    %12 = vector.broadcast %cst_8 : f32 to vector<16x256xf32>
    %13 = arith.maximumf %11, %12 : vector<16x256xf32>
    %c0_9 = arith.constant 0 : index
    %c0_10 = arith.constant 0 : index
    %c0_11 = arith.constant 0 : index
    %14 = vector.load %arg5[%c0_9, %c0_10, %c0_11] : memref<1x16x256xf32, #tpu.memory_space<vmem>>, vector<1x16x256xf32>
    %15 = vector.shape_cast %14 : vector<1x16x256xf32> to vector<16x256xf32>
    %16 = vector.shape_cast %13 : vector<16x256xf32> to vector<1x16x256xf32>
    tpu.vector_store %arg5[%c0_9, %c0_10, %c0_11], %16 {strides = array<i32>} : memref<1x16x256xf32, #tpu.memory_space<vmem>>, vector<1x16x256xf32>,
    %c0_12 = arith.constant 0 : index
    %c0_13 = arith.constant 0 : index
    %17 = vector.load %arg3[%c0_12, %c0_13] : memref<32x16xf32, #tpu.memory_space<vmem>>, vector<32x16xf32>
    %18 = arith.truncf %17 : vector<32x16xf32> to vector<32x16xbf16>
    %19 = arith.truncf %13 : vector<16x256xf32> to vector<16x256xbf16>
    %cst_14 = arith.constant dense<0.000000e+00> : vector<32x256xf32>
    %20 = tpu.matmul %18, %19, %cst_14 {dimension_numbers = #tpu.dot_dimension_numbers<[1], [0], [0], [1], [0, 0, 1, 1], [], []>} : vector<32x16xbf16>, vector<16x256xbf16>, vector<32x256xf32> -> vector<32x256xf32>
    %21 = arith.mulf %20, %20 : vector<32x256xf32>
    %cst_15 = arith.constant dense<0.000000e+00> : vector<256xf32>
    %22 = vector.multi_reduction <add>, %21, %cst_15 [0] : vector<32x256xf32> to vector<256xf32>
    %23 = vector.shape_cast %22 : vector<256xf32> to vector<1x256xf32>
    %24 = math.sqrt %23 : vector<1x256xf32>
    %cst_16 = arith.constant 9.99999974E-6 : f32
    %25 = vector.broadcast %cst_16 : f32 to vector<1x256xf32>
    %26 = arith.addf %24, %25 : vector<1x256xf32>
    %27 = tpu.reciprocal %26 {approx = true} : vector<1x256xf32> -> vector<1x256xf32>
    %28 = vector.broadcast %27 : vector<1x256xf32> to vector<32x256xf32>
    %29 = arith.mulf %20, %28 : vector<32x256xf32>
    %c0_17 = arith.constant 0 : index
    %c0_18 = arith.constant 0 : index
    %c0_19 = arith.constant 0 : index
    %30 = vector.load %arg6[%c0_17, %c0_18, %c0_19] : memref<1x32x256xf32, #tpu.memory_space<vmem>>, vector<1x32x256xf32>
    %31 = vector.shape_cast %30 : vector<1x32x256xf32> to vector<32x256xf32>
    %32 = vector.shape_cast %29 : vector<32x256xf32> to vector<1x32x256xf32>
    tpu.vector_store %arg6[%c0_17, %c0_18, %c0_19], %32 {strides = array<i32>} : memref<1x32x256xf32, #tpu.memory_space<vmem>>, vector<1x32x256xf32>,
    return
  }
  func.func @transform_0(%arg0: i32) -> (i32, i32) {
    %c0_i32 = arith.constant 0 : i32
    %c0_i32_0 = arith.constant 0 : i32
    %c0_i32_1 = arith.constant 0 : i32
    return %c0_i32, %c0_i32_0 : i32, i32
  }
  func.func @transform_1(%arg0: i32) -> (i32, i32) {
    %c0_i32 = arith.constant 0 : i32
    %c0_i32_0 = arith.constant 0 : i32
    %c0_i32_1 = arith.constant 0 : i32
    return %c0_i32, %c0_i32_0 : i32, i32
  }
  func.func @transform_2(%arg0: i32) -> (i32, i32) {
    %c0_i32 = arith.constant 0 : i32
    %c0_i32_0 = arith.constant 0 : i32
    %c0_i32_1 = arith.constant 0 : i32
    return %c0_i32, %c0_i32_0 : i32, i32
  }
  func.func @transform_3(%arg0: i32) -> (i32, i32, i32) {
    %c0_i32 = arith.constant 0 : i32
    %c0_i32_0 = arith.constant 0 : i32
    %c0_i32_1 = arith.constant 0 : i32
    return %arg0, %c0_i32, %c0_i32_0 : i32, i32, i32
  }
  func.func @transform_4(%arg0: i32) -> (i32, i32, i32) {
    %c0_i32 = arith.constant 0 : i32
    %c0_i32_0 = arith.constant 0 : i32
    %c0_i32_1 = arith.constant 0 : i32
    return %arg0, %c0_i32, %c0_i32_0 : i32, i32, i32
  }
  func.func @transform_5(%arg0: i32) -> (i32, i32, i32) {
    %c0_i32 = arith.constant 0 : i32
    %c0_i32_0 = arith.constant 0 : i32
    %c0_i32_1 = arith.constant 0 : i32
    return %arg0, %c0_i32, %c0_i32_0 : i32, i32, i32
  }
}

module attributes {stable_mosaic.version = 11 : i64} {
  func.func @_stage2_kernel(%arg0: i32, %arg1: memref<32x16xf32, #tpu.memory_space<vmem>>, %arg2: memref<32x32xf32, #tpu.memory_space<vmem>>, %arg3: memref<1x16x64xf32, #tpu.memory_space<vmem>>, %arg4: memref<1x32x64xf32, #tpu.memory_space<vmem>>, %arg5: memref<1x32x64xf32, #tpu.memory_space<vmem>>) attributes {dimension_semantics = [#tpu.dimension_semantics<parallel>], iteration_bounds = array<i64: 2>, scalar_prefetch = 0 : i64, scratch_operands = 0 : i64, tpu.core_type = #tpu.core_type<tc>, window_params = [{pipeline_mode = #tpu.pipeline_mode<synchronous>, transform_indices = @transform_0, window_bounds = array<i64: 32, 16>}, {pipeline_mode = #tpu.pipeline_mode<synchronous>, transform_indices = @transform_1, window_bounds = array<i64: 32, 32>}, {transform_indices = @transform_2, window_bounds = array<i64: 1, 16, 64>}, {transform_indices = @transform_3, window_bounds = array<i64: 1, 32, 64>}, {transform_indices = @transform_4, window_bounds = array<i64: 1, 32, 64>}]} {
    %c0 = arith.constant 0 : index
    %c0_0 = arith.constant 0 : index
    %0 = vector.load %arg1[%c0, %c0_0] : memref<32x16xf32, #tpu.memory_space<vmem>>, vector<32x16xf32>
    %c0_1 = arith.constant 0 : index
    %c0_2 = arith.constant 0 : index
    %c0_3 = arith.constant 0 : index
    %1 = vector.load %arg3[%c0_1, %c0_2, %c0_3] : memref<1x16x64xf32, #tpu.memory_space<vmem>>, vector<1x16x64xf32>
    %2 = vector.shape_cast %1 : vector<1x16x64xf32> to vector<16x64xf32>
    %3 = arith.truncf %0 : vector<32x16xf32> to vector<32x16xbf16>
    %4 = arith.truncf %2 : vector<16x64xf32> to vector<16x64xbf16>
    %cst = arith.constant dense<0.000000e+00> : vector<32x64xf32>
    %5 = tpu.matmul %3, %4, %cst {dimension_numbers = #tpu.dot_dimension_numbers<[1], [0], [0], [1], [0, 0, 1, 1], [], []>} : vector<32x16xbf16>, vector<16x64xbf16>, vector<32x64xf32> -> vector<32x64xf32>
    %cst_4 = arith.constant 0.000000e+00 : f32
    %6 = vector.broadcast %cst_4 : f32 to vector<32x64xf32>
    %7 = arith.maximumf %5, %6 : vector<32x64xf32>
    %c0_5 = arith.constant 0 : index
    %c0_6 = arith.constant 0 : index
    %c0_7 = arith.constant 0 : index
    %8 = vector.load %arg4[%c0_5, %c0_6, %c0_7] : memref<1x32x64xf32, #tpu.memory_space<vmem>>, vector<1x32x64xf32>
    %9 = vector.shape_cast %8 : vector<1x32x64xf32> to vector<32x64xf32>
    %10 = vector.shape_cast %7 : vector<32x64xf32> to vector<1x32x64xf32>
    tpu.vector_store %arg4[%c0_5, %c0_6, %c0_7], %10 {strides = array<i32>} : memref<1x32x64xf32, #tpu.memory_space<vmem>>, vector<1x32x64xf32>,
    %c0_8 = arith.constant 0 : index
    %c0_9 = arith.constant 0 : index
    %11 = vector.load %arg2[%c0_8, %c0_9] : memref<32x32xf32, #tpu.memory_space<vmem>>, vector<32x32xf32>
    %12 = arith.truncf %11 : vector<32x32xf32> to vector<32x32xbf16>
    %13 = arith.truncf %7 : vector<32x64xf32> to vector<32x64xbf16>
    %cst_10 = arith.constant dense<0.000000e+00> : vector<32x64xf32>
    %14 = tpu.matmul %12, %13, %cst_10 {dimension_numbers = #tpu.dot_dimension_numbers<[1], [0], [0], [1], [0, 0, 1, 1], [], []>} : vector<32x32xbf16>, vector<32x64xbf16>, vector<32x64xf32> -> vector<32x64xf32>
    %15 = arith.mulf %14, %14 : vector<32x64xf32>
    %cst_11 = arith.constant dense<0.000000e+00> : vector<64xf32>
    %16 = vector.multi_reduction <add>, %15, %cst_11 [0] : vector<32x64xf32> to vector<64xf32>
    %17 = vector.shape_cast %16 : vector<64xf32> to vector<1x64xf32>
    %18 = math.sqrt %17 : vector<1x64xf32>
    %cst_12 = arith.constant 9.99999974E-6 : f32
    %19 = vector.broadcast %cst_12 : f32 to vector<1x64xf32>
    %20 = arith.addf %18, %19 : vector<1x64xf32>
    %21 = tpu.reciprocal %20 {approx = true} : vector<1x64xf32> -> vector<1x64xf32>
    %22 = vector.broadcast %21 : vector<1x64xf32> to vector<32x64xf32>
    %23 = arith.mulf %14, %22 : vector<32x64xf32>
    %c0_13 = arith.constant 0 : index
    %c0_14 = arith.constant 0 : index
    %c0_15 = arith.constant 0 : index
    %24 = vector.load %arg5[%c0_13, %c0_14, %c0_15] : memref<1x32x64xf32, #tpu.memory_space<vmem>>, vector<1x32x64xf32>
    %25 = vector.shape_cast %24 : vector<1x32x64xf32> to vector<32x64xf32>
    %26 = vector.shape_cast %23 : vector<32x64xf32> to vector<1x32x64xf32>
    tpu.vector_store %arg5[%c0_13, %c0_14, %c0_15], %26 {strides = array<i32>} : memref<1x32x64xf32, #tpu.memory_space<vmem>>, vector<1x32x64xf32>,
    return
  }
  func.func @transform_0(%arg0: i32) -> (i32, i32) {
    %c0_i32 = arith.constant 0 : i32
    %c0_i32_0 = arith.constant 0 : i32
    %c0_i32_1 = arith.constant 0 : i32
    return %c0_i32, %c0_i32_0 : i32, i32
  }
  func.func @transform_1(%arg0: i32) -> (i32, i32) {
    %c0_i32 = arith.constant 0 : i32
    %c0_i32_0 = arith.constant 0 : i32
    %c0_i32_1 = arith.constant 0 : i32
    return %c0_i32, %c0_i32_0 : i32, i32
  }
  func.func @transform_2(%arg0: i32) -> (i32, i32, i32) {
    %c0_i32 = arith.constant 0 : i32
    %c0_i32_0 = arith.constant 0 : i32
    %c0_i32_1 = arith.constant 0 : i32
    return %arg0, %c0_i32, %c0_i32_0 : i32, i32, i32
  }
  func.func @transform_3(%arg0: i32) -> (i32, i32, i32) {
    %c0_i32 = arith.constant 0 : i32
    %c0_i32_0 = arith.constant 0 : i32
    %c0_i32_1 = arith.constant 0 : i32
    return %arg0, %c0_i32, %c0_i32_0 : i32, i32, i32
  }
  func.func @transform_4(%arg0: i32) -> (i32, i32, i32) {
    %c0_i32 = arith.constant 0 : i32
    %c0_i32_0 = arith.constant 0 : i32
    %c0_i32_1 = arith.constant 0 : i32
    return %arg0, %c0_i32, %c0_i32_0 : i32, i32, i32
  }
}

module attributes {stable_mosaic.version = 11 : i64} {
  func.func @_stage34_kernel(%arg0: i32, %arg1: memref<64x32xf32, #tpu.memory_space<vmem>>, %arg2: memref<128x64xf32, #tpu.memory_space<vmem>>, %arg3: memref<64x64xf32, #tpu.memory_space<vmem>>, %arg4: memref<64x128xf32, #tpu.memory_space<vmem>>, %arg5: memref<8x128xf32, #tpu.memory_space<vmem>>, %arg6: memref<1x32x16xf32, #tpu.memory_space<vmem>>, %arg7: memref<1x128x16xf32, #tpu.memory_space<vmem>>, %arg8: memref<1x64x16xf32, #tpu.memory_space<vmem>>, %arg9: memref<1x64x16xf32, #tpu.memory_space<vmem>>, %arg10: memref<1x8x16xf32, #tpu.memory_space<vmem>>) attributes {dimension_semantics = [#tpu.dimension_semantics<parallel>], iteration_bounds = array<i64: 2>, scalar_prefetch = 0 : i64, scratch_operands = 0 : i64, tpu.core_type = #tpu.core_type<tc>, window_params = [{pipeline_mode = #tpu.pipeline_mode<synchronous>, transform_indices = @transform_0, window_bounds = array<i64: 64, 32>}, {pipeline_mode = #tpu.pipeline_mode<synchronous>, transform_indices = @transform_1, window_bounds = array<i64: 128, 64>}, {pipeline_mode = #tpu.pipeline_mode<synchronous>, transform_indices = @transform_2, window_bounds = array<i64: 64, 64>}, {pipeline_mode = #tpu.pipeline_mode<synchronous>, transform_indices = @transform_3, window_bounds = array<i64: 64, 128>}, {pipeline_mode = #tpu.pipeline_mode<synchronous>, transform_indices = @transform_4, window_bounds = array<i64: 8, 128>}, {transform_indices = @transform_5, window_bounds = array<i64: 1, 32, 16>}, {transform_indices = @transform_6, window_bounds = array<i64: 1, 128, 16>}, {transform_indices = @transform_7, window_bounds = array<i64: 1, 64, 16>}, {transform_indices = @transform_8, window_bounds = array<i64: 1, 64, 16>}, {transform_indices = @transform_9, window_bounds = array<i64: 1, 8, 16>}]} {
    %c0 = arith.constant 0 : index
    %c0_0 = arith.constant 0 : index
    %0 = vector.load %arg1[%c0, %c0_0] : memref<64x32xf32, #tpu.memory_space<vmem>>, vector<64x32xf32>
    %c0_1 = arith.constant 0 : index
    %c0_2 = arith.constant 0 : index
    %c0_3 = arith.constant 0 : index
    %1 = vector.load %arg6[%c0_1, %c0_2, %c0_3] : memref<1x32x16xf32, #tpu.memory_space<vmem>>, vector<1x32x16xf32>
    %2 = vector.shape_cast %1 : vector<1x32x16xf32> to vector<32x16xf32>
    %3 = arith.truncf %0 : vector<64x32xf32> to vector<64x32xbf16>
    %4 = arith.truncf %2 : vector<32x16xf32> to vector<32x16xbf16>
    %cst = arith.constant dense<0.000000e+00> : vector<64x16xf32>
    %5 = tpu.matmul %3, %4, %cst {dimension_numbers = #tpu.dot_dimension_numbers<[1], [0], [0], [1], [0, 0, 1, 1], [], []>} : vector<64x32xbf16>, vector<32x16xbf16>, vector<64x16xf32> -> vector<64x16xf32>
    %cst_4 = arith.constant 0.000000e+00 : f32
    %6 = vector.broadcast %cst_4 : f32 to vector<64x16xf32>
    %7 = arith.maximumf %5, %6 : vector<64x16xf32>
    %c0_5 = arith.constant 0 : index
    %c0_6 = arith.constant 0 : index
    %8 = vector.load %arg2[%c0_5, %c0_6] : memref<128x64xf32, #tpu.memory_space<vmem>>, vector<128x64xf32>
    %9 = arith.truncf %8 : vector<128x64xf32> to vector<128x64xbf16>
    %10 = arith.truncf %7 : vector<64x16xf32> to vector<64x16xbf16>
    %cst_7 = arith.constant dense<0.000000e+00> : vector<128x16xf32>
    %11 = tpu.matmul %9, %10, %cst_7 {dimension_numbers = #tpu.dot_dimension_numbers<[1], [0], [0], [1], [0, 0, 1, 1], [], []>} : vector<128x64xbf16>, vector<64x16xbf16>, vector<128x16xf32> -> vector<128x16xf32>
    %cst_8 = arith.constant 0.000000e+00 : f32
    %12 = vector.broadcast %cst_8 : f32 to vector<128x16xf32>
    %13 = arith.maximumf %11, %12 : vector<128x16xf32>
    %c0_9 = arith.constant 0 : index
    %c0_10 = arith.constant 0 : index
    %c0_11 = arith.constant 0 : index
    %14 = vector.load %arg7[%c0_9, %c0_10, %c0_11] : memref<1x128x16xf32, #tpu.memory_space<vmem>>, vector<1x128x16xf32>
    %15 = vector.shape_cast %14 : vector<1x128x16xf32> to vector<128x16xf32>
    %16 = vector.shape_cast %13 : vector<128x16xf32> to vector<1x128x16xf32>
    tpu.vector_store %arg7[%c0_9, %c0_10, %c0_11], %16 {strides = array<i32>} : memref<1x128x16xf32, #tpu.memory_space<vmem>>, vector<1x128x16xf32>,
    %c0_12 = arith.constant 0 : index
    %c0_13 = arith.constant 0 : index
    %17 = vector.load %arg3[%c0_12, %c0_13] : memref<64x64xf32, #tpu.memory_space<vmem>>, vector<64x64xf32>
    %18 = arith.truncf %17 : vector<64x64xf32> to vector<64x64xbf16>
    %19 = arith.truncf %7 : vector<64x16xf32> to vector<64x16xbf16>
    %cst_14 = arith.constant dense<0.000000e+00> : vector<64x16xf32>
    %20 = tpu.matmul %18, %19, %cst_14 {dimension_numbers = #tpu.dot_dimension_numbers<[1], [0], [0], [1], [0, 0, 1, 1], [], []>} : vector<64x64xbf16>, vector<64x16xbf16>, vector<64x16xf32> -> vector<64x16xf32>
    %21 = arith.mulf %20, %20 : vector<64x16xf32>
    %cst_15 = arith.constant dense<0.000000e+00> : vector<16xf32>
    %22 = vector.multi_reduction <add>, %21, %cst_15 [0] : vector<64x16xf32> to vector<16xf32>
    %23 = vector.shape_cast %22 : vector<16xf32> to vector<1x16xf32>
    %24 = math.sqrt %23 : vector<1x16xf32>
    %cst_16 = arith.constant 9.99999974E-6 : f32
    %25 = vector.broadcast %cst_16 : f32 to vector<1x16xf32>
    %26 = arith.addf %24, %25 : vector<1x16xf32>
    %27 = tpu.reciprocal %26 {approx = true} : vector<1x16xf32> -> vector<1x16xf32>
    %28 = vector.broadcast %27 : vector<1x16xf32> to vector<64x16xf32>
    %29 = arith.mulf %20, %28 : vector<64x16xf32>
    %c0_17 = arith.constant 0 : index
    %c0_18 = arith.constant 0 : index
    %c0_19 = arith.constant 0 : index
    %30 = vector.load %arg8[%c0_17, %c0_18, %c0_19] : memref<1x64x16xf32, #tpu.memory_space<vmem>>, vector<1x64x16xf32>
    %31 = vector.shape_cast %30 : vector<1x64x16xf32> to vector<64x16xf32>
    %32 = vector.shape_cast %29 : vector<64x16xf32> to vector<1x64x16xf32>
    tpu.vector_store %arg8[%c0_17, %c0_18, %c0_19], %32 {strides = array<i32>} : memref<1x64x16xf32, #tpu.memory_space<vmem>>, vector<1x64x16xf32>,
    %c0_20 = arith.constant 0 : index
    %c0_21 = arith.constant 0 : index
    %33 = vector.load %arg4[%c0_20, %c0_21] : memref<64x128xf32, #tpu.memory_space<vmem>>, vector<64x128xf32>
    %34 = arith.truncf %33 : vector<64x128xf32> to vector<64x128xbf16>
    %35 = arith.truncf %13 : vector<128x16xf32> to vector<128x16xbf16>
    %cst_22 = arith.constant dense<0.000000e+00> : vector<64x16xf32>
    %36 = tpu.matmul %34, %35, %cst_22 {dimension_numbers = #tpu.dot_dimension_numbers<[1], [0], [0], [1], [0, 0, 1, 1], [], []>} : vector<64x128xbf16>, vector<128x16xbf16>, vector<64x16xf32> -> vector<64x16xf32>
    %37 = arith.mulf %36, %36 : vector<64x16xf32>
    %cst_23 = arith.constant dense<0.000000e+00> : vector<16xf32>
    %38 = vector.multi_reduction <add>, %37, %cst_23 [0] : vector<64x16xf32> to vector<16xf32>
    %39 = vector.shape_cast %38 : vector<16xf32> to vector<1x16xf32>
    %40 = math.sqrt %39 : vector<1x16xf32>
    %cst_24 = arith.constant 9.99999974E-6 : f32
    %41 = vector.broadcast %cst_24 : f32 to vector<1x16xf32>
    %42 = arith.addf %40, %41 : vector<1x16xf32>
    %43 = tpu.reciprocal %42 {approx = true} : vector<1x16xf32> -> vector<1x16xf32>
    %44 = vector.broadcast %43 : vector<1x16xf32> to vector<64x16xf32>
    %45 = arith.mulf %36, %44 : vector<64x16xf32>
    %c0_25 = arith.constant 0 : index
    %c0_26 = arith.constant 0 : index
    %c0_27 = arith.constant 0 : index
    %46 = vector.load %arg9[%c0_25, %c0_26, %c0_27] : memref<1x64x16xf32, #tpu.memory_space<vmem>>, vector<1x64x16xf32>
    %47 = vector.shape_cast %46 : vector<1x64x16xf32> to vector<64x16xf32>
    %48 = vector.shape_cast %45 : vector<64x16xf32> to vector<1x64x16xf32>
    tpu.vector_store %arg9[%c0_25, %c0_26, %c0_27], %48 {strides = array<i32>} : memref<1x64x16xf32, #tpu.memory_space<vmem>>, vector<1x64x16xf32>,
    %c0_28 = arith.constant 0 : index
    %c0_29 = arith.constant 0 : index
    %49 = vector.load %arg5[%c0_28, %c0_29] : memref<8x128xf32, #tpu.memory_space<vmem>>, vector<8x128xf32>
    %50 = arith.truncf %49 : vector<8x128xf32> to vector<8x128xbf16>
    %51 = arith.truncf %13 : vector<128x16xf32> to vector<128x16xbf16>
    %cst_30 = arith.constant dense<0.000000e+00> : vector<8x16xf32>
    %52 = tpu.matmul %50, %51, %cst_30 {dimension_numbers = #tpu.dot_dimension_numbers<[1], [0], [0], [1], [0, 0, 1, 1], [], []>} : vector<8x128xbf16>, vector<128x16xbf16>, vector<8x16xf32> -> vector<8x16xf32>
    %c0_31 = arith.constant 0 : index
    %c0_32 = arith.constant 0 : index
    %c0_33 = arith.constant 0 : index
    %53 = vector.load %arg10[%c0_31, %c0_32, %c0_33] : memref<1x8x16xf32, #tpu.memory_space<vmem>>, vector<1x8x16xf32>
    %54 = vector.shape_cast %53 : vector<1x8x16xf32> to vector<8x16xf32>
    %55 = vector.shape_cast %52 : vector<8x16xf32> to vector<1x8x16xf32>
    tpu.vector_store %arg10[%c0_31, %c0_32, %c0_33], %55 {strides = array<i32>} : memref<1x8x16xf32, #tpu.memory_space<vmem>>, vector<1x8x16xf32>,
    return
  }
  func.func @transform_0(%arg0: i32) -> (i32, i32) {
    %c0_i32 = arith.constant 0 : i32
    %c0_i32_0 = arith.constant 0 : i32
    %c0_i32_1 = arith.constant 0 : i32
    return %c0_i32, %c0_i32_0 : i32, i32
  }
  func.func @transform_1(%arg0: i32) -> (i32, i32) {
    %c0_i32 = arith.constant 0 : i32
    %c0_i32_0 = arith.constant 0 : i32
    %c0_i32_1 = arith.constant 0 : i32
    return %c0_i32, %c0_i32_0 : i32, i32
  }
  func.func @transform_2(%arg0: i32) -> (i32, i32) {
    %c0_i32 = arith.constant 0 : i32
    %c0_i32_0 = arith.constant 0 : i32
    %c0_i32_1 = arith.constant 0 : i32
    return %c0_i32, %c0_i32_0 : i32, i32
  }
  func.func @transform_3(%arg0: i32) -> (i32, i32) {
    %c0_i32 = arith.constant 0 : i32
    %c0_i32_0 = arith.constant 0 : i32
    %c0_i32_1 = arith.constant 0 : i32
    return %c0_i32, %c0_i32_0 : i32, i32
  }
  func.func @transform_4(%arg0: i32) -> (i32, i32) {
    %c0_i32 = arith.constant 0 : i32
    %c0_i32_0 = arith.constant 0 : i32
    %c0_i32_1 = arith.constant 0 : i32
    return %c0_i32, %c0_i32_0 : i32, i32
  }
  func.func @transform_5(%arg0: i32) -> (i32, i32, i32) {
    %c0_i32 = arith.constant 0 : i32
    %c0_i32_0 = arith.constant 0 : i32
    %c0_i32_1 = arith.constant 0 : i32
    return %arg0, %c0_i32, %c0_i32_0 : i32, i32, i32
  }
  func.func @transform_6(%arg0: i32) -> (i32, i32, i32) {
    %c0_i32 = arith.constant 0 : i32
    %c0_i32_0 = arith.constant 0 : i32
    %c0_i32_1 = arith.constant 0 : i32
    return %arg0, %c0_i32, %c0_i32_0 : i32, i32, i32
  }
  func.func @transform_7(%arg0: i32) -> (i32, i32, i32) {
    %c0_i32 = arith.constant 0 : i32
    %c0_i32_0 = arith.constant 0 : i32
    %c0_i32_1 = arith.constant 0 : i32
    return %arg0, %c0_i32, %c0_i32_0 : i32, i32, i32
  }
  func.func @transform_8(%arg0: i32) -> (i32, i32, i32) {
    %c0_i32 = arith.constant 0 : i32
    %c0_i32_0 = arith.constant 0 : i32
    %c0_i32_1 = arith.constant 0 : i32
    return %arg0, %c0_i32, %c0_i32_0 : i32, i32, i32
  }
  func.func @transform_9(%arg0: i32) -> (i32, i32, i32) {
    %c0_i32 = arith.constant 0 : i32
    %c0_i32_0 = arith.constant 0 : i32
    %c0_i32_1 = arith.constant 0 : i32
    return %arg0, %c0_i32, %c0_i32_0 : i32, i32, i32
  }
}

module attributes {stable_mosaic.version = 11 : i64} {
  func.func @_cam_norm_kernel(%arg0: i32, %arg1: memref<1x8x16xf32, #tpu.memory_space<vmem>>, %arg2: memref<1x8x16xf32, #tpu.memory_space<vmem>>) attributes {dimension_semantics = [#tpu.dimension_semantics<parallel>], iteration_bounds = array<i64: 1>, scalar_prefetch = 0 : i64, scratch_operands = 0 : i64, tpu.core_type = #tpu.core_type<tc>, window_params = [{transform_indices = @transform_0, window_bounds = array<i64: 1, 8, 16>}, {transform_indices = @transform_1, window_bounds = array<i64: 1, 8, 16>}]} {
    %c0 = arith.constant 0 : index
    %c0_0 = arith.constant 0 : index
    %c0_1 = arith.constant 0 : index
    %0 = vector.load %arg1[%c0, %c0_0, %c0_1] : memref<1x8x16xf32, #tpu.memory_space<vmem>>, vector<1x8x16xf32>
    %1 = vector.shape_cast %0 : vector<1x8x16xf32> to vector<8x16xf32>
    %cst = arith.constant 0.000000e+00 : f32
    %2 = vector.broadcast %cst : f32 to vector<8x16xf32>
    %3 = arith.maximumf %1, %2 : vector<8x16xf32>
    %cst_2 = arith.constant dense<0xFF800000> : vector<8xf32>
    %4 = vector.multi_reduction <maximumf>, %3, %cst_2 [1] : vector<8x16xf32> to vector<8xf32>
    %5 = vector.shape_cast %4 : vector<8xf32> to vector<8x1xf32>
    %cst_3 = arith.constant 9.99999974E-6 : f32
    %6 = vector.broadcast %cst_3 : f32 to vector<8x1xf32>
    %7 = arith.addf %5, %6 : vector<8x1xf32>
    %8 = tpu.reciprocal %7 {approx = true} : vector<8x1xf32> -> vector<8x1xf32>
    %9 = vector.broadcast %8 : vector<8x1xf32> to vector<8x16xf32>
    %10 = arith.mulf %3, %9 : vector<8x16xf32>
    %cst_4 = arith.constant dense<0xFF800000> : vector<16xf32>
    %11 = vector.multi_reduction <maximumf>, %10, %cst_4 [0] : vector<8x16xf32> to vector<16xf32>
    %12 = vector.shape_cast %11 : vector<16xf32> to vector<1x16xf32>
    %cst_5 = arith.constant 1.000000e+00 : f32
    %13 = vector.broadcast %cst_5 : f32 to vector<1x16xf32>
    %14 = arith.subf %13, %12 : vector<1x16xf32>
    %15 = tpu.iota {dimensions = array<i32: 0>} : vector<8x16xi32>
    %c0_i32 = arith.constant 0 : i32
    %16 = vector.broadcast %c0_i32 : i32 to vector<8x16xi32>
    %17 = arith.cmpi eq, %15, %16 : vector<8x16xi32>
    %18 = vector.shape_cast %14 : vector<1x16xf32> to vector<1x16xf32>
    %19 = vector.broadcast %18 : vector<1x16xf32> to vector<8x16xf32>
    %20 = arith.select %17, %19, %10 : vector<8x16xi1>, vector<8x16xf32>
    %c0_6 = arith.constant 0 : index
    %c0_7 = arith.constant 0 : index
    %c0_8 = arith.constant 0 : index
    %21 = vector.load %arg2[%c0_6, %c0_7, %c0_8] : memref<1x8x16xf32, #tpu.memory_space<vmem>>, vector<1x8x16xf32>
    %22 = vector.shape_cast %21 : vector<1x8x16xf32> to vector<8x16xf32>
    %23 = vector.shape_cast %20 : vector<8x16xf32> to vector<1x8x16xf32>
    tpu.vector_store %arg2[%c0_6, %c0_7, %c0_8], %23 {strides = array<i32>} : memref<1x8x16xf32, #tpu.memory_space<vmem>>, vector<1x8x16xf32>,
    return
  }
  func.func @transform_0(%arg0: i32) -> (i32, i32, i32) {
    %c0_i32 = arith.constant 0 : i32
    %c0_i32_0 = arith.constant 0 : i32
    %c0_i32_1 = arith.constant 0 : i32
    return %arg0, %c0_i32, %c0_i32_0 : i32, i32, i32
  }
  func.func @transform_1(%arg0: i32) -> (i32, i32, i32) {
    %c0_i32 = arith.constant 0 : i32
    %c0_i32_0 = arith.constant 0 : i32
    %c0_i32_1 = arith.constant 0 : i32
    return %arg0, %c0_i32, %c0_i32_0 : i32, i32, i32
  }
}

module attributes {stable_mosaic.version = 11 : i64} {
  func.func @_pcm_kernel(%arg0: i32, %arg1: memref<128x131xf32, #tpu.memory_space<vmem>>, %arg2: memref<1x8x16xf32, #tpu.memory_space<vmem>>, %arg3: memref<1x131x16xf32, #tpu.memory_space<vmem>>, %arg4: memref<1x8x16xf32, #tpu.memory_space<vmem>>) attributes {dimension_semantics = [#tpu.dimension_semantics<parallel>], iteration_bounds = array<i64: 1>, scalar_prefetch = 0 : i64, scratch_operands = 0 : i64, tpu.core_type = #tpu.core_type<tc>, window_params = [{pipeline_mode = #tpu.pipeline_mode<synchronous>, transform_indices = @transform_0, window_bounds = array<i64: 128, 131>}, {transform_indices = @transform_1, window_bounds = array<i64: 1, 8, 16>}, {transform_indices = @transform_2, window_bounds = array<i64: 1, 131, 16>}, {transform_indices = @transform_3, window_bounds = array<i64: 1, 8, 16>}]} {
    %c0 = arith.constant 0 : index
    %c0_0 = arith.constant 0 : index
    %0 = vector.load %arg1[%c0, %c0_0] : memref<128x131xf32, #tpu.memory_space<vmem>>, vector<128x131xf32>
    %c0_1 = arith.constant 0 : index
    %c0_2 = arith.constant 0 : index
    %c0_3 = arith.constant 0 : index
    %1 = vector.load %arg3[%c0_1, %c0_2, %c0_3] : memref<1x131x16xf32, #tpu.memory_space<vmem>>, vector<1x131x16xf32>
    %2 = vector.shape_cast %1 : vector<1x131x16xf32> to vector<131x16xf32>
    %3 = arith.truncf %0 : vector<128x131xf32> to vector<128x131xbf16>
    %4 = arith.truncf %2 : vector<131x16xf32> to vector<131x16xbf16>
    %cst = arith.constant dense<0.000000e+00> : vector<128x16xf32>
    %5 = tpu.matmul %3, %4, %cst {dimension_numbers = #tpu.dot_dimension_numbers<[1], [0], [0], [1], [0, 0, 1, 1], [], []>} : vector<128x131xbf16>, vector<131x16xbf16>, vector<128x16xf32> -> vector<128x16xf32>
    %6 = arith.mulf %5, %5 : vector<128x16xf32>
    %cst_4 = arith.constant dense<0.000000e+00> : vector<16xf32>
    %7 = vector.multi_reduction <add>, %6, %cst_4 [0] : vector<128x16xf32> to vector<16xf32>
    %8 = vector.shape_cast %7 : vector<16xf32> to vector<1x16xf32>
    %9 = math.sqrt %8 : vector<1x16xf32>
    %cst_5 = arith.constant 9.99999974E-6 : f32
    %10 = vector.broadcast %cst_5 : f32 to vector<1x16xf32>
    %11 = arith.addf %9, %10 : vector<1x16xf32>
    %12 = tpu.reciprocal %11 {approx = true} : vector<1x16xf32> -> vector<1x16xf32>
    %13 = vector.broadcast %12 : vector<1x16xf32> to vector<128x16xf32>
    %14 = arith.mulf %5, %13 : vector<128x16xf32>
    %15 = arith.truncf %14 : vector<128x16xf32> to vector<128x16xbf16>
    %cst_6 = arith.constant dense<0.000000e+00> : vector<16x16xf32>
    %16 = tpu.matmul %15, %15, %cst_6 {dimension_numbers = #tpu.dot_dimension_numbers<[0], [0], [1], [1], [0, 1, 1, 1], [], []>} : vector<128x16xbf16>, vector<128x16xbf16>, vector<16x16xf32> -> vector<16x16xf32>
    %cst_7 = arith.constant 0.000000e+00 : f32
    %17 = vector.broadcast %cst_7 : f32 to vector<16x16xf32>
    %18 = arith.maximumf %16, %17 : vector<16x16xf32>
    %cst_8 = arith.constant 1.000000e+00 : f32
    %19 = vector.broadcast %cst_8 : f32 to vector<1x16xf32>
    %cst_9 = arith.constant dense<0.000000e+00> : vector<1x16xf32>
    %20 = tpu.matmul %19, %18, %cst_9 {dimension_numbers = #tpu.dot_dimension_numbers<[1], [0], [0], [1], [0, 0, 1, 1], [], []>} : vector<1x16xf32>, vector<16x16xf32>, vector<1x16xf32> -> vector<1x16xf32>
    %cst_10 = arith.constant 9.99999974E-6 : f32
    %21 = vector.broadcast %cst_10 : f32 to vector<1x16xf32>
    %22 = arith.addf %20, %21 : vector<1x16xf32>
    %23 = tpu.reciprocal %22 {approx = true} : vector<1x16xf32> -> vector<1x16xf32>
    %24 = vector.broadcast %23 : vector<1x16xf32> to vector<16x16xf32>
    %25 = arith.mulf %18, %24 : vector<16x16xf32>
    %26 = arith.truncf %25 : vector<16x16xf32> to vector<16x16xbf16>
    %c0_11 = arith.constant 0 : index
    %c0_12 = arith.constant 0 : index
    %c0_13 = arith.constant 0 : index
    %27 = vector.load %arg2[%c0_11, %c0_12, %c0_13] : memref<1x8x16xf32, #tpu.memory_space<vmem>>, vector<1x8x16xf32>
    %28 = vector.shape_cast %27 : vector<1x8x16xf32> to vector<8x16xf32>
    %29 = arith.truncf %28 : vector<8x16xf32> to vector<8x16xbf16>
    %cst_14 = arith.constant dense<0.000000e+00> : vector<8x16xf32>
    %30 = tpu.matmul %29, %26, %cst_14 {dimension_numbers = #tpu.dot_dimension_numbers<[1], [0], [0], [1], [0, 0, 1, 1], [], []>} : vector<8x16xbf16>, vector<16x16xbf16>, vector<8x16xf32> -> vector<8x16xf32>
    %31 = arith.truncf %30 : vector<8x16xf32> to vector<8x16xbf16>
    %cst_15 = arith.constant dense<0.000000e+00> : vector<8x16xf32>
    %32 = tpu.matmul %31, %26, %cst_15 {dimension_numbers = #tpu.dot_dimension_numbers<[1], [0], [0], [1], [0, 0, 1, 1], [], []>} : vector<8x16xbf16>, vector<16x16xbf16>, vector<8x16xf32> -> vector<8x16xf32>
    %c0_16 = arith.constant 0 : index
    %c0_17 = arith.constant 0 : index
    %c0_18 = arith.constant 0 : index
    %33 = vector.load %arg4[%c0_16, %c0_17, %c0_18] : memref<1x8x16xf32, #tpu.memory_space<vmem>>, vector<1x8x16xf32>
    %34 = vector.shape_cast %33 : vector<1x8x16xf32> to vector<8x16xf32>
    %35 = vector.shape_cast %32 : vector<8x16xf32> to vector<1x8x16xf32>
    tpu.vector_store %arg4[%c0_16, %c0_17, %c0_18], %35 {strides = array<i32>} : memref<1x8x16xf32, #tpu.memory_space<vmem>>, vector<1x8x16xf32>,
    return
  }
  func.func @transform_0(%arg0: i32) -> (i32, i32) {
    %c0_i32 = arith.constant 0 : i32
    %c0_i32_0 = arith.constant 0 : i32
    %c0_i32_1 = arith.constant 0 : i32
    return %c0_i32, %c0_i32_0 : i32, i32
  }
  func.func @transform_1(%arg0: i32) -> (i32, i32, i32) {
    %c0_i32 = arith.constant 0 : i32
    %c0_i32_0 = arith.constant 0 : i32
    %c0_i32_1 = arith.constant 0 : i32
    return %arg0, %c0_i32, %c0_i32_0 : i32, i32, i32
  }
  func.func @transform_2(%arg0: i32) -> (i32, i32, i32) {
    %c0_i32 = arith.constant 0 : i32
    %c0_i32_0 = arith.constant 0 : i32
    %c0_i32_1 = arith.constant 0 : i32
    return %arg0, %c0_i32, %c0_i32_0 : i32, i32, i32
  }
  func.func @transform_3(%arg0: i32) -> (i32, i32, i32) {
    %c0_i32 = arith.constant 0 : i32
    %c0_i32_0 = arith.constant 0 : i32
    %c0_i32_1 = arith.constant 0 : i32
    return %arg0, %c0_i32, %c0_i32_0 : i32, i32, i32
  }
}

module attributes {stable_mosaic.version = 11 : i64} {
  func.func @_proto_kernel(%arg0: i32, %arg1: memref<8xf32, #tpu.memory_space<smem>>, %arg2: memref<1x8x16xf32, #tpu.memory_space<vmem>>, %arg3: memref<1x192x16xf32, #tpu.memory_space<vmem>>, %arg4: memref<1x8x16xf32, #tpu.memory_space<vmem>>) attributes {dimension_semantics = [#tpu.dimension_semantics<parallel>], iteration_bounds = array<i64: 1>, scalar_prefetch = 0 : i64, scratch_operands = 0 : i64, tpu.core_type = #tpu.core_type<tc>, window_params = [{transform_indices = @transform_0, window_bounds = array<i64: 8>}, {transform_indices = @transform_1, window_bounds = array<i64: 1, 8, 16>}, {transform_indices = @transform_2, window_bounds = array<i64: 1, 192, 16>}, {transform_indices = @transform_3, window_bounds = array<i64: 1, 8, 16>}]} {
    %c0 = arith.constant 0 : index
    %c0_0 = arith.constant 0 : index
    %c0_1 = arith.constant 0 : index
    %0 = vector.load %arg2[%c0, %c0_0, %c0_1] : memref<1x8x16xf32, #tpu.memory_space<vmem>>, vector<1x8x16xf32>
    %1 = vector.shape_cast %0 : vector<1x8x16xf32> to vector<8x16xf32>
    %2 = tpu.iota {dimensions = array<i32: 0>} : vector<8x16xi32>
    %c0_i32 = arith.constant 0 : i32
    %3 = vector.broadcast %c0_i32 : i32 to vector<8x16xi32>
    %4 = arith.cmpi eq, %2, %3 : vector<8x16xi32>
    %cst = arith.constant 3.000000e-01 : f32
    %cst_2 = arith.constant 1.000000e+00 : f32
    %5 = vector.broadcast %cst : f32 to vector<8x16xf32>
    %6 = vector.broadcast %cst_2 : f32 to vector<8x16xf32>
    %7 = arith.select %4, %5, %6 : vector<8x16xi1>, vector<8x16xf32>
    %8 = arith.mulf %1, %7 : vector<8x16xf32>
    %cst_3 = arith.constant dense<0xFF800000> : vector<16xf32>
    %9 = vector.multi_reduction <maximumf>, %8, %cst_3 [0] : vector<8x16xf32> to vector<16xf32>
    %10 = vector.shape_cast %9 : vector<16xf32> to vector<1x16xf32>
    %11 = vector.broadcast %10 : vector<1x16xf32> to vector<8x16xf32>
    %12 = arith.cmpf oeq, %8, %11 : vector<8x16xf32>
    %c8_i32 = arith.constant 8 : i32
    %13 = vector.broadcast %c8_i32 : i32 to vector<8x16xi32>
    %14 = arith.select %12, %2, %13 : vector<8x16xi1>, vector<8x16xi32>
    %cst_4 = arith.constant dense<2147483647> : vector<16xi32>
    %15 = vector.multi_reduction <minsi>, %14, %cst_4 [0] : vector<8x16xi32> to vector<16xi32>
    %16 = vector.shape_cast %15 : vector<16xi32> to vector<1x16xi32>
    %17 = vector.broadcast %16 : vector<1x16xi32> to vector<8x16xi32>
    %18 = arith.cmpi eq, %2, %17 : vector<8x16xi32>
    %19 = arith.extui %18 : vector<8x16xi1> to vector<8x16xi32>
    %20 = arith.sitofp %19 : vector<8x16xi32> to vector<8x16xf32>
    %21 = tpu.iota {dimensions = array<i32: 0>} : vector<8x1xi32>
    %cst_5 = arith.constant 0.000000e+00 : f32
    %22 = vector.broadcast %cst_5 : f32 to vector<8x1xf32>
    %c0_i32_6 = arith.constant 0 : i32
    %23 = vector.broadcast %c0_i32_6 : i32 to vector<8x1xi32>
    %24 = arith.cmpi eq, %21, %23 : vector<8x1xi32>
    %c0_7 = arith.constant 0 : index
    %25 = memref.load %arg1[%c0_7] : memref<8xf32, #tpu.memory_space<smem>>
    %26 = vector.broadcast %25 : f32 to vector<8x1xf32>
    %27 = arith.select %24, %26, %22 : vector<8x1xi1>, vector<8x1xf32>
    %c1_i32 = arith.constant 1 : i32
    %28 = vector.broadcast %c1_i32 : i32 to vector<8x1xi32>
    %29 = arith.cmpi eq, %21, %28 : vector<8x1xi32>
    %c1 = arith.constant 1 : index
    %30 = memref.load %arg1[%c1] : memref<8xf32, #tpu.memory_space<smem>>
    %31 = vector.broadcast %30 : f32 to vector<8x1xf32>
    %32 = arith.select %29, %31, %27 : vector<8x1xi1>, vector<8x1xf32>
    %c2_i32 = arith.constant 2 : i32
    %33 = vector.broadcast %c2_i32 : i32 to vector<8x1xi32>
    %34 = arith.cmpi eq, %21, %33 : vector<8x1xi32>
    %c2 = arith.constant 2 : index
    %35 = memref.load %arg1[%c2] : memref<8xf32, #tpu.memory_space<smem>>
    %36 = vector.broadcast %35 : f32 to vector<8x1xf32>
    %37 = arith.select %34, %36, %32 : vector<8x1xi1>, vector<8x1xf32>
    %c3_i32 = arith.constant 3 : i32
    %38 = vector.broadcast %c3_i32 : i32 to vector<8x1xi32>
    %39 = arith.cmpi eq, %21, %38 : vector<8x1xi32>
    %c3 = arith.constant 3 : index
    %40 = memref.load %arg1[%c3] : memref<8xf32, #tpu.memory_space<smem>>
    %41 = vector.broadcast %40 : f32 to vector<8x1xf32>
    %42 = arith.select %39, %41, %37 : vector<8x1xi1>, vector<8x1xf32>
    %c4_i32 = arith.constant 4 : i32
    %43 = vector.broadcast %c4_i32 : i32 to vector<8x1xi32>
    %44 = arith.cmpi eq, %21, %43 : vector<8x1xi32>
    %c4 = arith.constant 4 : index
    %45 = memref.load %arg1[%c4] : memref<8xf32, #tpu.memory_space<smem>>
    %46 = vector.broadcast %45 : f32 to vector<8x1xf32>
    %47 = arith.select %44, %46, %42 : vector<8x1xi1>, vector<8x1xf32>
    %c5_i32 = arith.constant 5 : i32
    %48 = vector.broadcast %c5_i32 : i32 to vector<8x1xi32>
    %49 = arith.cmpi eq, %21, %48 : vector<8x1xi32>
    %c5 = arith.constant 5 : index
    %50 = memref.load %arg1[%c5] : memref<8xf32, #tpu.memory_space<smem>>
    %51 = vector.broadcast %50 : f32 to vector<8x1xf32>
    %52 = arith.select %49, %51, %47 : vector<8x1xi1>, vector<8x1xf32>
    %c6_i32 = arith.constant 6 : i32
    %53 = vector.broadcast %c6_i32 : i32 to vector<8x1xi32>
    %54 = arith.cmpi eq, %21, %53 : vector<8x1xi32>
    %c6 = arith.constant 6 : index
    %55 = memref.load %arg1[%c6] : memref<8xf32, #tpu.memory_space<smem>>
    %56 = vector.broadcast %55 : f32 to vector<8x1xf32>
    %57 = arith.select %54, %56, %52 : vector<8x1xi1>, vector<8x1xf32>
    %c7_i32 = arith.constant 7 : i32
    %58 = vector.broadcast %c7_i32 : i32 to vector<8x1xi32>
    %59 = arith.cmpi eq, %21, %58 : vector<8x1xi32>
    %c7 = arith.constant 7 : index
    %60 = memref.load %arg1[%c7] : memref<8xf32, #tpu.memory_space<smem>>
    %61 = vector.broadcast %60 : f32 to vector<8x1xf32>
    %62 = arith.select %59, %61, %57 : vector<8x1xi1>, vector<8x1xf32>
    %63 = vector.broadcast %62 : vector<8x1xf32> to vector<8x16xf32>
    %64 = arith.mulf %20, %63 : vector<8x16xf32>
    %c0_8 = arith.constant 0 : index
    %c0_9 = arith.constant 0 : index
    %c0_10 = arith.constant 0 : index
    %65 = vector.load %arg3[%c0_8, %c0_9, %c0_10] : memref<1x192x16xf32, #tpu.memory_space<vmem>>, vector<1x192x16xf32>
    %66 = vector.shape_cast %65 : vector<1x192x16xf32> to vector<192x16xf32>
    %67 = arith.truncf %64 : vector<8x16xf32> to vector<8x16xbf16>
    %68 = arith.truncf %66 : vector<192x16xf32> to vector<192x16xbf16>
    %cst_11 = arith.constant dense<0.000000e+00> : vector<8x192xf32>
    %69 = tpu.matmul %67, %68, %cst_11 {dimension_numbers = #tpu.dot_dimension_numbers<[1], [1], [0], [0], [0, 0, 1, 0], [], []>} : vector<8x16xbf16>, vector<192x16xbf16>, vector<8x192xf32> -> vector<8x192xf32>
    %cst_12 = arith.constant 6.250000e-02 : f32
    %70 = vector.broadcast %cst_12 : f32 to vector<8x192xf32>
    %71 = arith.mulf %69, %70 : vector<8x192xf32>
    %72 = arith.truncf %71 : vector<8x192xf32> to vector<8x192xbf16>
    %cst_13 = arith.constant dense<0.000000e+00> : vector<8x16xf32>
    %73 = tpu.matmul %72, %68, %cst_13 {dimension_numbers = #tpu.dot_dimension_numbers<[1], [0], [0], [1], [0, 0, 1, 1], [], []>} : vector<8x192xbf16>, vector<192x16xbf16>, vector<8x16xf32> -> vector<8x16xf32>
    %74 = arith.mulf %71, %71 : vector<8x192xf32>
    %cst_14 = arith.constant dense<0.000000e+00> : vector<8xf32>
    %75 = vector.multi_reduction <add>, %74, %cst_14 [1] : vector<8x192xf32> to vector<8xf32>
    %76 = vector.shape_cast %75 : vector<8xf32> to vector<8x1xf32>
    %77 = math.sqrt %76 : vector<8x1xf32>
    %78 = arith.mulf %66, %66 : vector<192x16xf32>
    %cst_15 = arith.constant dense<0.000000e+00> : vector<16xf32>
    %79 = vector.multi_reduction <add>, %78, %cst_15 [0] : vector<192x16xf32> to vector<16xf32>
    %80 = vector.shape_cast %79 : vector<16xf32> to vector<1x16xf32>
    %81 = math.sqrt %80 : vector<1x16xf32>
    %cst_16 = arith.constant 9.99999993E-9 : f32
    %82 = vector.broadcast %cst_16 : f32 to vector<8x1xf32>
    %83 = arith.maximumf %77, %82 : vector<8x1xf32>
    %cst_17 = arith.constant 9.99999993E-9 : f32
    %84 = vector.broadcast %cst_17 : f32 to vector<1x16xf32>
    %85 = arith.maximumf %81, %84 : vector<1x16xf32>
    %86 = vector.broadcast %83 : vector<8x1xf32> to vector<8x16xf32>
    %87 = vector.broadcast %85 : vector<1x16xf32> to vector<8x16xf32>
    %88 = arith.mulf %86, %87 : vector<8x16xf32>
    %89 = tpu.reciprocal %88 {approx = true} : vector<8x16xf32> -> vector<8x16xf32>
    %90 = arith.mulf %73, %89 : vector<8x16xf32>
    %cst_18 = arith.constant 0.000000e+00 : f32
    %91 = vector.broadcast %cst_18 : f32 to vector<8x16xf32>
    %92 = arith.maximumf %90, %91 : vector<8x16xf32>
    %c0_19 = arith.constant 0 : index
    %c0_20 = arith.constant 0 : index
    %c0_21 = arith.constant 0 : index
    %93 = vector.load %arg4[%c0_19, %c0_20, %c0_21] : memref<1x8x16xf32, #tpu.memory_space<vmem>>, vector<1x8x16xf32>
    %94 = vector.shape_cast %93 : vector<1x8x16xf32> to vector<8x16xf32>
    %95 = vector.shape_cast %92 : vector<8x16xf32> to vector<1x8x16xf32>
    tpu.vector_store %arg4[%c0_19, %c0_20, %c0_21], %95 {strides = array<i32>} : memref<1x8x16xf32, #tpu.memory_space<vmem>>, vector<1x8x16xf32>,
    return
  }
  func.func @transform_0(%arg0: i32) -> i32 {
    %c0_i32 = arith.constant 0 : i32
    %c0_i32_0 = arith.constant 0 : i32
    return %c0_i32 : i32
  }
  func.func @transform_1(%arg0: i32) -> (i32, i32, i32) {
    %c0_i32 = arith.constant 0 : i32
    %c0_i32_0 = arith.constant 0 : i32
    %c0_i32_1 = arith.constant 0 : i32
    return %arg0, %c0_i32, %c0_i32_0 : i32, i32, i32
  }
  func.func @transform_2(%arg0: i32) -> (i32, i32, i32) {
    %c0_i32 = arith.constant 0 : i32
    %c0_i32_0 = arith.constant 0 : i32
    %c0_i32_1 = arith.constant 0 : i32
    return %arg0, %c0_i32, %c0_i32_0 : i32, i32, i32
  }
  func.func @transform_3(%arg0: i32) -> (i32, i32, i32) {
    %c0_i32 = arith.constant 0 : i32
    %c0_i32_0 = arith.constant 0 : i32
    %c0_i32_1 = arith.constant 0 : i32
    return %arg0, %c0_i32, %c0_i32_0 : i32, i32, i32
  }
}

</mosaic_0001>

<llo_original>
// kernel: cam_forward.6
$region0: #{cam_forward.6}
  #allocation0 [shape = 'u32[]', space=smem, size = 0x4, offset = 0x4, fixed_abs, tag = 'smem constant byte address 0x4 - core index']
  #allocation1 [shape = 'u32[144,128]{1,0:T(1,128)}', space=vmem, size = 0x12000, scoped, tag = 'internal scratch']
  %s0 = inlined_call_operand.vmem [shape: f32[8,3], index: 0, kind: input, shape index: {}]
  %s1 = inlined_call_operand.vmem [shape: f32[16,8], index: 1, kind: input, shape index: {}]
  %s2 = inlined_call_operand.vmem [shape: f32[32,16], index: 2, kind: input, shape index: {}]
  %s3 = inlined_call_operand.vmem [shape: f32[2,3,256], index: 3, kind: input, shape index: {}]
  %s4 = inlined_call_operand.vmem [shape: f32[2,16,256], index: 4, kind: output, shape index: {0}]
  %s5 = inlined_call_operand.vmem [shape: f32[2,32,256], index: 5, kind: output, shape index: {1}]
  %6 = xla_tuple %s4, %s5
  %s7 = sld [smem:[#allocation0]]
  $region57: #{cam_forward.6} parent=0
    _
  %s9 = ssub.s32 1, %s7
  %s10 = scalar_select 0, %s9, %s7
  loop: start=0, step=1, limit=4
  $region2: #{cam_forward.6} parent=0 // loop_pre_header
    _
  $region3: #{cam_forward.6} parent=0 // loop_header
    %s12 = sphi 0, %s16
    %p13 = scmp.ge.s32.totalorder %s12, 4
    %s20 = sphi 0, %s20
    %s22 = sphi 0, %s20
    %s23 = sphi 0, %s22
    %s37 = sphi 0, %s23
    %s41 = sphi 0, %s41
    %s43 = sphi 0, %s41
    %s44 = sphi 0, %s43
    %s58 = sphi 0, %s44
    %s62 = sphi 0, %s62
    %s64 = sphi 0, %s62
    %s65 = sphi 0, %s64
    %s79 = sphi 0, %s65
    %s85 = sphi 0, %s87
    %s88 = sphi 0, %s85
    %s89 = sphi 0, %s88
    %s105 = sphi 0, %s89
    %s111 = sphi 0, %s113
    %s114 = sphi 0, %s111
    %s115 = sphi 0, %s114
    %s131 = sphi 0, %s115
    %s137 = sphi 0, %s139
    %s140 = sphi 0, %s137
    %s141 = sphi 0, %s140
    %s157 = sphi 0, %s141
  $region4: #{cam_forward.6} parent=0 // loop_header_branch
    %15 = sbr.rel (%p13) target = $region8
  $region5: #{cam_forward.6} parent=0 // loop_body
    %s17 = ssub.s32 %s12, 1
    %s18 = ssub.s32 %s12, 2
    %s19 = sadd.s32 %s12, 1
    %s21 = sadd.s32 %s20, 1
    %p24 = scmp.eq.s32.totalorder %s12, 1
    %p25 = scmp.ne.s32.totalorder %s20, %s22
    %p26 = scmp.eq.s32.totalorder %s12, 0
    %p27 = por %p25, %p26
    %p28 = scmp.ne.s32.totalorder %s20, %s22
    %p29 = scmp.eq.s32.totalorder %s17, 1
    %p30 = por %p28, %p29
    %p31 = scmp.ne.s32.totalorder %s22, %s23
    %p32 = scmp.eq.s32.totalorder %s17, 0
    %p33 = por %p31, %p32
    %p34 = scmp.ne.s32.totalorder %s22, %s23
    %p35 = scmp.eq.s32.totalorder %s18, 1
    %p36 = por %p34, %p35
    %p38 = scmp.ne.s32.totalorder %s23, %s37
    %p39 = scmp.eq.s32.totalorder %s18, 0
    %p40 = por %p38, %p39
    %s42 = sadd.s32 %s41, 1
    %p45 = scmp.eq.s32.totalorder %s12, 1
    %p46 = scmp.ne.s32.totalorder %s41, %s43
    %p47 = scmp.eq.s32.totalorder %s12, 0
    %p48 = por %p46, %p47
    %p49 = scmp.ne.s32.totalorder %s41, %s43
    %p50 = scmp.eq.s32.totalorder %s17, 1
    %p51 = por %p49, %p50
    %p52 = scmp.ne.s32.totalorder %s43, %s44
    %p53 = scmp.eq.s32.totalorder %s17, 0
    %p54 = por %p52, %p53
    %p55 = scmp.ne.s32.totalorder %s43, %s44
    %p56 = scmp.eq.s32.totalorder %s18, 1
    %p57 = por %p55, %p56
    %p59 = scmp.ne.s32.totalorder %s44, %s58
    %p60 = scmp.eq.s32.totalorder %s18, 0
    %p61 = por %p59, %p60
    %s63 = sadd.s32 %s62, 1
    %p66 = scmp.eq.s32.totalorder %s12, 1
    %p67 = scmp.ne.s32.totalorder %s62, %s64
    %p68 = scmp.eq.s32.totalorder %s12, 0
    %p69 = por %p67, %p68
    %p70 = scmp.ne.s32.totalorder %s62, %s64
    %p71 = scmp.eq.s32.totalorder %s17, 1
    %p72 = por %p70, %p71
    %p73 = scmp.ne.s32.totalorder %s64, %s65
    %p74 = scmp.eq.s32.totalorder %s17, 0
    %p75 = por %p73, %p74
    %p76 = scmp.ne.s32.totalorder %s64, %s65
    %p77 = scmp.eq.s32.totalorder %s18, 1
    %p78 = por %p76, %p77
    %p80 = scmp.ne.s32.totalorder %s65, %s79
    %p81 = scmp.eq.s32.totalorder %s18, 0
    %p82 = por %p80, %p81
    %s83 = ssub.s32 %s12, %s19
    %p84 = scmp.eq.s32.totalorder %s83, 0
    %s86 = sadd.s32 %s85, 1
    %s87 = scalar_select %p84, %s85, %s86
    %p90 = pneg %p84
    %p91 = scmp.eq.s32.totalorder %s12, 1
    %p92 = por %p90, %p91
    %p93 = scmp.ne.s32.totalorder %s85, %s88
    %p94 = scmp.eq.s32.totalorder %s12, 0
    %p95 = por %p93, %p94
    %p96 = scmp.ne.s32.totalorder %s85, %s88
    %p97 = scmp.eq.s32.totalorder %s17, 1
    %p98 = por %p96, %p97
    %p99 = scmp.ne.s32.totalorder %s88, %s89
    %p100 = scmp.eq.s32.totalorder %s17, 0
    %p101 = por %p99, %p100
    %p102 = scmp.ne.s32.totalorder %s88, %s89
    %p103 = scmp.eq.s32.totalorder %s18, 1
    %p104 = por %p102, %p103
    %p106 = scmp.ne.s32.totalorder %s89, %s105
    %p107 = scmp.eq.s32.totalorder %s18, 0
    %p108 = por %p106, %p107
    %s109 = ssub.s32 %s12, %s19
    %p110 = scmp.eq.s32.totalorder %s109, 0
    %s112 = sadd.s32 %s111, 1
    %s113 = scalar_select %p110, %s111, %s112
    %p116 = pneg %p110
    %p117 = scmp.eq.s32.totalorder %s12, 1
    %p118 = por %p116, %p117
    %p119 = scmp.ne.s32.totalorder %s111, %s114
    %p120 = scmp.eq.s32.totalorder %s12, 0
    %p121 = por %p119, %p120
    %p122 = scmp.ne.s32.totalorder %s111, %s114
    %p123 = scmp.eq.s32.totalorder %s17, 1
    %p124 = por %p122, %p123
    %p125 = scmp.ne.s32.totalorder %s114, %s115
    %p126 = scmp.eq.s32.totalorder %s17, 0
    %p127 = por %p125, %p126
    %p128 = scmp.ne.s32.totalorder %s114, %s115
    %p129 = scmp.eq.s32.totalorder %s18, 1
    %p130 = por %p128, %p129
    %p132 = scmp.ne.s32.totalorder %s115, %s131
    %p133 = scmp.eq.s32.totalorder %s18, 0
    %p134 = por %p132, %p133
    %s135 = ssub.s32 %s12, %s19
    %p136 = scmp.eq.s32.totalorder %s135, 0
    %s138 = sadd.s32 %s137, 1
    %s139 = scalar_select %p136, %s137, %s138
    %p142 = pneg %p136
    %p143 = scmp.eq.s32.totalorder %s12, 1
    %p144 = por %p142, %p143
    %p145 = scmp.ne.s32.totalorder %s137, %s140
    %p146 = scmp.eq.s32.totalorder %s12, 0
    %p147 = por %p145, %p146
    %p148 = scmp.ne.s32.totalorder %s137, %s140
    %p149 = scmp.eq.s32.totalorder %s17, 1
    %p150 = por %p148, %p149
    %p151 = scmp.ne.s32.totalorder %s140, %s141
    %p152 = scmp.eq.s32.totalorder %s17, 0
    %p153 = por %p151, %p152
    %p154 = scmp.ne.s32.totalorder %s140, %s141
    %p155 = scmp.eq.s32.totalorder %s18, 1
    %p156 = por %p154, %p155
    %p158 = scmp.ne.s32.totalorder %s141, %s157
    %p159 = scmp.eq.s32.totalorder %s18, 0
    %p160 = por %p158, %p159
    %p161 = scmp.le.s32.totalorder 1, %s12
    %p162 = scmp.lt.s32.totalorder %s12, 3
    %p163 = pnand %p161, %p162
    %p164 = pneg %p163
    // Predicated region
    $region9: #{cam_forward.6} parent=5 // pred_check
      _
    $region10: #{cam_forward.6} parent=5 // pred_check_branch
      %166 = sbr.rel (%p163) target = $region12
    $region11: #{cam_forward.6} parent=5 // pred_region
      %s167 = ssub.s32 %s12, 1
      // Predicated region
      $region13: #{cam_forward.6} parent=11 // pred_check
        %p168 = pneg %p33
      $region14: #{cam_forward.6} parent=11 // pred_check_branch
        %170 = sbr.rel (%p168) target = $region16
      $region15: #{cam_forward.6} parent=11 // pred_region
        _
      $region16: #{cam_forward.6} parent=11 // pred_fallthru
        _
      // Predicated region
      $region17: #{cam_forward.6} parent=11 // pred_check
        %p171 = pneg %p54
      $region18: #{cam_forward.6} parent=11 // pred_check_branch
        %173 = sbr.rel (%p171) target = $region20
      $region19: #{cam_forward.6} parent=11 // pred_region
        _
      $region20: #{cam_forward.6} parent=11 // pred_fallthru
        _
      // Predicated region
      $region21: #{cam_forward.6} parent=11 // pred_check
        %p174 = pneg %p75
      $region22: #{cam_forward.6} parent=11 // pred_check_branch
        %176 = sbr.rel (%p174) target = $region24
      $region23: #{cam_forward.6} parent=11 // pred_region
        _
      $region24: #{cam_forward.6} parent=11 // pred_fallthru
        _
    $region12: #{cam_forward.6} parent=5 // pred_fallthru
      _
    %p177 = scmp.lt.s32.totalorder %s12, 2
    // Predicated region
    $region25: #{cam_forward.6} parent=5 // pred_check
      %p178 = pneg %p177
    $region26: #{cam_forward.6} parent=5 // pred_check_branch
      %180 = sbr.rel (%p178) target = $region28
    $region27: #{cam_forward.6} parent=5 // pred_region
      // Predicated region
      $region29: #{cam_forward.6} parent=27 // pred_check
        %p181 = pneg %p95
      $region30: #{cam_forward.6} parent=27 // pred_check_branch
        %183 = sbr.rel (%p181) target = $region32
      $region31: #{cam_forward.6} parent=27 // pred_region
        %p184 = scmp.lt.s32.totalorder %s12, 1
        %s185 = scalar_select %p184, %s12, 1
        %s186 = smul.addr %s185, 2
        %s187 = smul.addr %s186, 4
        %s188 = scalar_lea.vmem %s3, %s187
      $region32: #{cam_forward.6} parent=27 // pred_fallthru
        _
    $region28: #{cam_forward.6} parent=5 // pred_fallthru
      _
    %p189 = scmp.le.s32.totalorder 1, %s12
    %p190 = scmp.lt.s32.totalorder %s12, 3
    %p191 = pnand %p189, %p190
    %p192 = pneg %p191
    // Predicated region
    $region33: #{cam_forward.6} parent=5 // pred_check
      _
    $region34: #{cam_forward.6} parent=5 // pred_check_branch
      %194 = sbr.rel (%p191) target = $region36
    $region35: #{cam_forward.6} parent=5 // pred_region
      %s195 = ssub.s32 %s12, 1
      %p196 = pneg %p33
      %p197 = pneg %p30
      %p198 = pneg %p54
      %p199 = pneg %p51
      %p200 = pneg %p75
      %p201 = pneg %p72
      %p202 = scmp.lt.s32.totalorder %s17, 1
      %s203 = scalar_select %p202, %s17, 1
      %s204 = smul.addr %s203, 2
      %s205 = smul.addr %s204, 4
      %s206 = scalar_lea.vmem %s3, %s205
      %p207 = pneg %p101
      %p208 = pneg %p98
      %p209 = pneg %p127
      %p210 = pneg %p124
      %p211 = scmp.lt.s32.totalorder %s17, 1
      %s212 = scalar_select %p211, %s17, 1
      %s213 = smul.addr %s212, 4
      %s214 = smul.addr %s213, 8
      %s215 = scalar_lea.vmem %s4, %s214
      %p216 = pneg %p153
      %p217 = pneg %p150
      %p218 = scmp.lt.s32.totalorder %s17, 1
      %s219 = scalar_select %p218, %s17, 1
      %s220 = smul.addr %s219, 8
      %s221 = smul.addr %s220, 8
      %s222 = scalar_lea.vmem %s5, %s221
      %p223 = scmp.lt.s32.totalorder %s17, 1
      %s224 = scalar_select %p223, %s17, 1
      %s225 = smul.addr %s224, 2
      %s226 = smul.addr %s225, 4
      %s227 = scalar_lea.vmem %s3, %s226
      %p228 = scmp.lt.s32.totalorder %s17, 1
      %s229 = scalar_select %p228, %s17, 1
      %s230 = smul.addr %s229, 4
      %s231 = smul.addr %s230, 8
      %s232 = scalar_lea.vmem %s4, %s231
      %p233 = scmp.lt.s32.totalorder %s17, 1
      %s234 = scalar_select %p233, %s17, 1
      %s235 = smul.addr %s234, 8
      %s236 = smul.addr %s235, 8
      %s237 = scalar_lea.vmem %s5, %s236
      %v239 = vld [vmem:[%s227] sm:$0x77]
      %v240 = vld [vmem:[%s0] sm:$0xff]
      %v241 = vpack.c.bf16 %v240, %v240
      %v243 = vcombine.high %v239, %v239
      %v245 = vpack.c.bf16 %v239, %v239
      %v246 = vpack.c.bf16 %v243, %v243
      %vm247 = vcmask 23552
      %v249 = vsel %vm247, %v241, 0
      %vm251 = vcmask 1040384
      %vm252 = vcmask 1041408
      %v253 = vsel %vm251, 4294967295, 65535
      %v254 = vsel %vm252, %v253, 0
      %v256 = vand.u32 %v245, %v254
      %v259 = vand.u32 %v246, %v254
      %261 = vmatprep.subr.bf16.mxu0 0
      %262 = vmatpush1.bf16.msra.mxu0 0
      %263 = vmatprep.subr.bf16.mxu0 0
      %264 = vmatpush1.bf16.msra.mxu0 0
      %265 = vmatprep.subr.bf16.mxu0 0
      %266 = vmatpush1.bf16.msra.mxu0 0
      %267 = vmatprep.subr.bf16.mxu0 0
      %268 = vmatpush1.bf16.msra.mxu0 0
      %269 = vmatprep.subr.bf16.mxu0 0
      %270 = vmatpush1.bf16.msra.mxu0 0
      %271 = vmatprep.subr.bf16.mxu0 0
      %272 = vmatpush1.bf16.msra.mxu0 0
      %273 = vmatprep.subr.bf16.mxu0 0
      %274 = vmatpush1.bf16.msra.mxu0 0
      %275 = vmatprep.subr.bf16.mxu0 %v259
      %276 = vmatpush1.bf16.msra.mxu0 %v256
      %277 = vmatprep.subr.bf16.mxu0 0
      %278 = vmatpush2.bf16.msra.mxu0 0
      %279 = vmatprep.subr.bf16.mxu0 0
      %280 = vmatpush2.bf16.msra.mxu0 0
      %281 = vmatprep.subr.bf16.mxu0 0
      %282 = vmatpush2.bf16.msra.mxu0 0
      %283 = vmatprep.subr.bf16.mxu0 0
      %284 = vmatpush2.bf16.msra.mxu0 0
      %285 = vmatprep.subr.bf16.mxu0 0
      %286 = vmatpush2.bf16.msra.mxu0 0
      %287 = vmatprep.subr.bf16.mxu0 0
      %288 = vmatpush2.bf16.msra.mxu0 0
      %289 = vmatprep.subr.bf16.mxu0 0
      %290 = vmatpush2.bf16.msra.mxu0 0
      %291 = vmatprep.subr.bf16.mxu0 0
      %292 = vmatpush2.bf16.msra.mxu0 0
      %293 = vmatprep.mubr.bf16.mxu0 0
      %294 = vmatmul.mubr.bf16.gmra.mxu0 %v249
      %v295 = vpop.f32.mrf.mxu0
      %v296 = vadd.f32 0.0, %v295
      %v297 = vpop.f32.mrf.mxu0
      %v298 = vadd.f32 0.0, %v297
      %v299 = vpop.f32.mrf.mxu0
      %v300 = vpop.f32.mrf.mxu0
      %301 = vdwg.mxu0
      %v302 = vmax.f32 %v296, 0.0
      %v303 = vmax.f32 %v298, 0.0
      %v304 = vld [vmem:[%s1] sm:$0xff]
      %v305 = vld [vmem:[%s1 + $0x8] sm:$0xff]
      %v306 = vpack.c.bf16 %v305, %v304
      %v307 = vpack.c.bf16 %v302, %v302
      %v308 = vpack.c.bf16 %v303, %v303
      %vm309 = vcmask 64512
      %v311 = vsel %vm309, %v306, 0
      %vm313 = vcmask 1043456
      %v315 = vsel %vm313, %v307, 0
      %v318 = vsel %vm313, %v308, 0
      %320 = vmatprep.subr.bf16.mxu0 0
      %321 = vmatpush1.bf16.msra.mxu0 0
      %322 = vmatprep.subr.bf16.mxu0 0
      %323 = vmatpush1.bf16.msra.mxu0 0
      %324 = vmatprep.subr.bf16.mxu0 0
      %325 = vmatpush1.bf16.msra.mxu0 0
      %326 = vmatprep.subr.bf16.mxu0 0
      %327 = vmatpush1.bf16.msra.mxu0 0
      %328 = vmatprep.subr.bf16.mxu0 0
      %329 = vmatpush1.bf16.msra.mxu0 0
      %330 = vmatprep.subr.bf16.mxu0 0
      %331 = vmatpush1.bf16.msra.mxu0 0
      %332 = vmatprep.subr.bf16.mxu0 0
      %333 = vmatpush1.bf16.msra.mxu0 0
      %334 = vmatprep.subr.bf16.mxu0 %v318
      %335 = vmatpush1.bf16.msra.mxu0 %v315
      %336 = vmatprep.subr.bf16.mxu0 0
      %337 = vmatpush2.bf16.msra.mxu0 0
      %338 = vmatprep.subr.bf16.mxu0 0
      %339 = vmatpush2.bf16.msra.mxu0 0
      %340 = vmatprep.subr.bf16.mxu0 0
      %341 = vmatpush2.bf16.msra.mxu0 0
      %342 = vmatprep.subr.bf16.mxu0 0
      %343 = vmatpush2.bf16.msra.mxu0 0
      %344 = vmatprep.subr.bf16.mxu0 0
      %345 = vmatpush2.bf16.msra.mxu0 0
      %346 = vmatprep.subr.bf16.mxu0 0
      %347 = vmatpush2.bf16.msra.mxu0 0
      %348 = vmatprep.subr.bf16.mxu0 0
      %349 = vmatpush2.bf16.msra.mxu0 0
      %350 = vmatprep.subr.bf16.mxu0 0
      %351 = vmatpush2.bf16.msra.mxu0 0
      %352 = vmatprep.mubr.bf16.mxu0 0
      %353 = vmatmul.mubr.bf16.gmra.mxu0 %v311
      %v354 = vpop.f32.mrf.mxu0
      %v355 = vadd.f32 0.0, %v354
      %v356 = vpop.f32.mrf.mxu0
      %v357 = vadd.f32 0.0, %v356
      %v358 = vpop.f32.mrf.mxu0
      %v359 = vadd.f32 0.0, %v358
      %v360 = vpop.f32.mrf.mxu0
      %v361 = vadd.f32 0.0, %v360
      %362 = vdwg.mxu0
      %v363 = vmax.f32 %v355, 0.0
      %v364 = vmax.f32 %v357, 0.0
      %v365 = vmax.f32 %v359, 0.0
      %v366 = vmax.f32 %v361, 0.0
      %367 = vst [vmem:[%s232] sm:$0xff] %v363
      %368 = vst [vmem:[%s232 + $0x8] sm:$0xff] %v364
      %369 = vst [vmem:[%s232 + $0x10] sm:$0xff] %v365
      %370 = vst [vmem:[%s232 + $0x18] sm:$0xff] %v366
      %v371 = vld [vmem:[%s2] sm:$0xff]
      %v372 = vld [vmem:[%s2 + $0x8] sm:$0xff]
      %v373 = vld [vmem:[%s2 + $0x10] sm:$0xff]
      %v374 = vld [vmem:[%s2 + $0x18] sm:$0xff]
      %v375 = vpack.c.bf16 %v372, %v371
      %v376 = vpack.c.bf16 %v374, %v373
      %v377 = vpack.c.bf16 %v365, %v363
      %v378 = vpack.c.bf16 %v366, %v364
      %vm379 = vcmask 130048
      %v381 = vsel %vm379, %v375, 0
      %v384 = vsel %vm379, %v376, 0
      %386 = vmatprep.subr.bf16.mxu0 0
      %387 = vmatpush1.bf16.msra.mxu0 0
      %388 = vmatprep.subr.bf16.mxu0 0
      %389 = vmatpush1.bf16.msra.mxu0 0
      %390 = vmatprep.subr.bf16.mxu0 0
      %391 = vmatpush1.bf16.msra.mxu0 0
      %392 = vmatprep.subr.bf16.mxu0 0
      %393 = vmatpush1.bf16.msra.mxu0 0
      %394 = vmatprep.subr.bf16.mxu0 0
      %395 = vmatpush1.bf16.msra.mxu0 0
      %396 = vmatprep.subr.bf16.mxu0 0
      %397 = vmatpush1.bf16.msra.mxu0 0
      %398 = vmatprep.subr.bf16.mxu0 0
      %399 = vmatpush1.bf16.msra.mxu0 0
      %400 = vmatprep.subr.bf16.mxu0 %v378
      %401 = vmatpush1.bf16.msra.mxu0 %v377
      %402 = vmatprep.subr.bf16.mxu0 0
      %403 = vmatpush2.bf16.msra.mxu0 0
      %404 = vmatprep.subr.bf16.mxu0 0
      %405 = vmatpush2.bf16.msra.mxu0 0
      %406 = vmatprep.subr.bf16.mxu0 0
      %407 = vmatpush2.bf16.msra.mxu0 0
      %408 = vmatprep.subr.bf16.mxu0 0
      %409 = vmatpush2.bf16.msra.mxu0 0
      %410 = vmatprep.subr.bf16.mxu0 0
      %411 = vmatpush2.bf16.msra.mxu0 0
      %412 = vmatprep.subr.bf16.mxu0 0
      %413 = vmatpush2.bf16.msra.mxu0 0
      %414 = vmatprep.subr.bf16.mxu0 0
      %415 = vmatpush2.bf16.msra.mxu0 0
      %416 = vmatprep.subr.bf16.mxu0 0
      %417 = vmatpush2.bf16.msra.mxu0 0
      %418 = vmatprep.mubr.bf16.mxu0 0
      %419 = vmatmul.mubr.bf16.gmra.mxu0 %v381
      %v420 = vpop.f32.mrf.mxu0
      %v421 = vadd.f32 0.0, %v420
      %v422 = vpop.f32.mrf.mxu0
      %v423 = vadd.f32 0.0, %v422
      %v424 = vpop.f32.mrf.mxu0
      %v425 = vadd.f32 0.0, %v424
      %v426 = vpop.f32.mrf.mxu0
      %v427 = vadd.f32 0.0, %v426
      %428 = vmatprep.mubr.bf16.mxu0 0
      %429 = vmatmul.mubr.bf16.gmra.mxu0 %v384
      %v430 = vpop.f32.mrf.mxu0
      %v431 = vadd.f32 0.0, %v430
      %v432 = vpop.f32.mrf.mxu0
      %v433 = vadd.f32 0.0, %v432
      %v434 = vpop.f32.mrf.mxu0
      %v435 = vadd.f32 0.0, %v434
      %v436 = vpop.f32.mrf.mxu0
      %v437 = vadd.f32 0.0, %v436
      %438 = vdwg.mxu0
      %v439 = vmul.f32 %v421, %v421
      %v440 = vmul.f32 %v423, %v423
      %v441 = vmul.f32 %v425, %v425
      %v442 = vmul.f32 %v427, %v427
      %v443 = vmul.f32 %v431, %v431
      %v444 = vmul.f32 %v433, %v433
      %v445 = vmul.f32 %v435, %v435
      %v446 = vmul.f32 %v437, %v437
      %v447 = vadd.f32 %v439, %v441
      %v448 = vadd.f32 %v447, %v443
      %v449 = vadd.f32 %v448, %v445
      %v450 = vrot.slane %v449, 4
      %v451 = vadd.f32 %v449, %v450
      %v452 = vrot.slane %v451, 2
      %v453 = vadd.f32 %v451, %v452
      %v454 = vrot.slane %v453, 1
      %v455 = vadd.f32 %v453, %v454
      %v456 = vadd.f32 %v440, %v442
      %v457 = vadd.f32 %v456, %v444
      %v458 = vadd.f32 %v457, %v446
      %v459 = vrot.slane %v458, 4
      %v460 = vadd.f32 %v458, %v459
      %v461 = vrot.slane %v460, 2
      %v462 = vadd.f32 %v460, %v461
      %v463 = vrot.slane %v462, 1
      %v464 = vadd.f32 %v462, %v463
      %v465 = vrsqrt.pop %v455
      %v466 = vmul.f32 %v455, %v465
      %vm467 = vcmp.eq.f32.partialorder %v455, inf
      %v468 = vsel %vm467, %v455, %v466
      %vm469 = vcmp.eq.f32.partialorder %v455, 0.0
      %v470 = vand.u32 %v455, 2147483648
      %v471 = vsel %vm469, %v470, %v468
      %v472 = vrsqrt.pop %v464
      %v473 = vmul.f32 %v464, %v472
      %vm474 = vcmp.eq.f32.partialorder %v464, inf
      %v475 = vsel %vm474, %v464, %v473
      %vm476 = vcmp.eq.f32.partialorder %v464, 0.0
      %v477 = vand.u32 %v464, 2147483648
      %v478 = vsel %vm476, %v477, %v475
      %v479 = vadd.f32 %v471, 1e-05
      %v480 = vadd.f32 %v478, 1e-05
      %v481 = vrcp.pop %v479
      %v482 = vrcp.pop %v480
      %v483 = vmul.f32 %v421, %v481
      %v484 = vmul.f32 %v423, %v482
      %v485 = vmul.f32 %v425, %v481
      %v486 = vmul.f32 %v427, %v482
      %v487 = vmul.f32 %v431, %v481
      %v488 = vmul.f32 %v433, %v482
      %v489 = vmul.f32 %v435, %v481
      %v490 = vmul.f32 %v437, %v482
      %491 = vst [vmem:[%s237] sm:$0xff] %v483
      %492 = vst [vmem:[%s237 + $0x8] sm:$0xff] %v484
      %493 = vst [vmem:[%s237 + $0x10] sm:$0xff] %v485
      %494 = vst [vmem:[%s237 + $0x18] sm:$0xff] %v486
      %495 = vst [vmem:[%s237 + $0x20] sm:$0xff] %v487
      %496 = vst [vmem:[%s237 + $0x28] sm:$0xff] %v488
      %497 = vst [vmem:[%s237 + $0x30] sm:$0xff] %v489
      %498 = vst [vmem:[%s237 + $0x38] sm:$0xff] %v490
      %p499 = scmp.lt.s32.totalorder %s17, 1
      %s500 = scalar_select %p499, %s17, 1
      %s501 = smul.addr %s500, 4
      %s502 = smul.addr %s501, 8
      %s503 = scalar_lea.vmem %s4, %s502
      %p504 = scmp.lt.s32.totalorder %s17, 1
      %s505 = scalar_select %p504, %s17, 1
      %s506 = smul.addr %s505, 8
      %s507 = smul.addr %s506, 8
      %s508 = scalar_lea.vmem %s5, %s507
      // Predicated region
      $region37: #{cam_forward.6} parent=35 // pred_check
        %p509 = pneg %p124
      $region38: #{cam_forward.6} parent=35 // pred_check_branch
        %511 = sbr.rel (%p509) target = $region40
      $region39: #{cam_forward.6} parent=35 // pred_region
        _
      $region40: #{cam_forward.6} parent=35 // pred_fallthru
        _
      // Predicated region
      $region41: #{cam_forward.6} parent=35 // pred_check
        %p512 = pneg %p150
      $region42: #{cam_forward.6} parent=35 // pred_check_branch
        %514 = sbr.rel (%p512) target = $region44
      $region43: #{cam_forward.6} parent=35 // pred_region
        _
      $region44: #{cam_forward.6} parent=35 // pred_fallthru
        _
    $region36: #{cam_forward.6} parent=5 // pred_fallthru
      _
    %p515 = scmp.le.s32.totalorder 2, %s12
    // Predicated region
    $region45: #{cam_forward.6} parent=5 // pred_check
      %p516 = pneg %p515
    $region46: #{cam_forward.6} parent=5 // pred_check_branch
      %518 = sbr.rel (%p516) target = $region48
    $region47: #{cam_forward.6} parent=5 // pred_region
      %s519 = ssub.s32 %s12, 2
      // Predicated region
      $region49: #{cam_forward.6} parent=47 // pred_check
        %p520 = pneg %p130
      $region50: #{cam_forward.6} parent=47 // pred_check_branch
        %522 = sbr.rel (%p520) target = $region52
      $region51: #{cam_forward.6} parent=47 // pred_region
        %p523 = scmp.lt.s32.totalorder %s18, 1
        %s524 = scalar_select %p523, %s18, 1
        %s525 = smul.addr %s524, 4
        %s526 = smul.addr %s525, 8
        %s527 = scalar_lea.vmem %s4, %s526
      $region52: #{cam_forward.6} parent=47 // pred_fallthru
        _
      // Predicated region
      $region53: #{cam_forward.6} parent=47 // pred_check
        %p528 = pneg %p156
      $region54: #{cam_forward.6} parent=47 // pred_check_branch
        %530 = sbr.rel (%p528) target = $region56
      $region55: #{cam_forward.6} parent=47 // pred_region
        %p531 = scmp.lt.s32.totalorder %s18, 1
        %s532 = scalar_select %p531, %s18, 1
        %s533 = smul.addr %s532, 8
        %s534 = smul.addr %s533, 8
        %s535 = scalar_lea.vmem %s5, %s534
      $region56: #{cam_forward.6} parent=47 // pred_fallthru
        _
    $region48: #{cam_forward.6} parent=5 // pred_fallthru
      _
  $region6: #{cam_forward.6} parent=0 // loop_footer
    %s16 = sadd.s32 1, %s12
  $region7: #{cam_forward.6} parent=0 // loop_footer_branch
    %11 = sbr.rel target = $region3
  $region8: #{cam_forward.6} parent=0 // loop_exit
    _

// kernel: cam_forward.7
$region0: #{cam_forward.7}
  #allocation0 [shape = 'u32[]', space=smem, size = 0x4, offset = 0x4, fixed_abs, tag = 'smem constant byte address 0x4 - core index']
  #allocation1 [shape = 'u32[144,128]{1,0:T(1,128)}', space=vmem, size = 0x12000, scoped, tag = 'internal scratch']
  %s0 = inlined_call_operand.vmem [shape: f32[32,16], index: 0, kind: input, shape index: {}]
  %s1 = inlined_call_operand.vmem [shape: f32[32,32], index: 1, kind: input, shape index: {}]
  %s2 = inlined_call_operand.vmem [shape: f32[2,16,64], index: 2, kind: input, shape index: {}]
  %s3 = inlined_call_operand.vmem [shape: f32[2,32,64], index: 3, kind: output, shape index: {0}]
  %s4 = inlined_call_operand.vmem [shape: f32[2,32,64], index: 4, kind: output, shape index: {1}]
  %5 = xla_tuple %s3, %s4
  %s6 = sld [smem:[#allocation0]]
  $region53: #{cam_forward.7} parent=0
    _
  %s8 = ssub.s32 1, %s6
  %s9 = scalar_select 0, %s8, %s6
  loop: start=0, step=1, limit=4
  $region2: #{cam_forward.7} parent=0 // loop_pre_header
    _
  $region3: #{cam_forward.7} parent=0 // loop_header
    %s11 = sphi 0, %s15
    %p12 = scmp.ge.s32.totalorder %s11, 4
    %s19 = sphi 0, %s19
    %s21 = sphi 0, %s19
    %s22 = sphi 0, %s21
    %s36 = sphi 0, %s22
    %s40 = sphi 0, %s40
    %s42 = sphi 0, %s40
    %s43 = sphi 0, %s42
    %s57 = sphi 0, %s43
    %s63 = sphi 0, %s65
    %s66 = sphi 0, %s63
    %s67 = sphi 0, %s66
    %s83 = sphi 0, %s67
    %s89 = sphi 0, %s91
    %s92 = sphi 0, %s89
    %s93 = sphi 0, %s92
    %s109 = sphi 0, %s93
    %s115 = sphi 0, %s117
    %s118 = sphi 0, %s115
    %s119 = sphi 0, %s118
    %s135 = sphi 0, %s119
  $region4: #{cam_forward.7} parent=0 // loop_header_branch
    %14 = sbr.rel (%p12) target = $region8
  $region5: #{cam_forward.7} parent=0 // loop_body
    %s16 = ssub.s32 %s11, 1
    %s17 = ssub.s32 %s11, 2
    %s18 = sadd.s32 %s11, 1
    %s20 = sadd.s32 %s19, 1
    %p23 = scmp.eq.s32.totalorder %s11, 1
    %p24 = scmp.ne.s32.totalorder %s19, %s21
    %p25 = scmp.eq.s32.totalorder %s11, 0
    %p26 = por %p24, %p25
    %p27 = scmp.ne.s32.totalorder %s19, %s21
    %p28 = scmp.eq.s32.totalorder %s16, 1
    %p29 = por %p27, %p28
    %p30 = scmp.ne.s32.totalorder %s21, %s22
    %p31 = scmp.eq.s32.totalorder %s16, 0
    %p32 = por %p30, %p31
    %p33 = scmp.ne.s32.totalorder %s21, %s22
    %p34 = scmp.eq.s32.totalorder %s17, 1
    %p35 = por %p33, %p34
    %p37 = scmp.ne.s32.totalorder %s22, %s36
    %p38 = scmp.eq.s32.totalorder %s17, 0
    %p39 = por %p37, %p38
    %s41 = sadd.s32 %s40, 1
    %p44 = scmp.eq.s32.totalorder %s11, 1
    %p45 = scmp.ne.s32.totalorder %s40, %s42
    %p46 = scmp.eq.s32.totalorder %s11, 0
    %p47 = por %p45, %p46
    %p48 = scmp.ne.s32.totalorder %s40, %s42
    %p49 = scmp.eq.s32.totalorder %s16, 1
    %p50 = por %p48, %p49
    %p51 = scmp.ne.s32.totalorder %s42, %s43
    %p52 = scmp.eq.s32.totalorder %s16, 0
    %p53 = por %p51, %p52
    %p54 = scmp.ne.s32.totalorder %s42, %s43
    %p55 = scmp.eq.s32.totalorder %s17, 1
    %p56 = por %p54, %p55
    %p58 = scmp.ne.s32.totalorder %s43, %s57
    %p59 = scmp.eq.s32.totalorder %s17, 0
    %p60 = por %p58, %p59
    %s61 = ssub.s32 %s11, %s18
    %p62 = scmp.eq.s32.totalorder %s61, 0
    %s64 = sadd.s32 %s63, 1
    %s65 = scalar_select %p62, %s63, %s64
    %p68 = pneg %p62
    %p69 = scmp.eq.s32.totalorder %s11, 1
    %p70 = por %p68, %p69
    %p71 = scmp.ne.s32.totalorder %s63, %s66
    %p72 = scmp.eq.s32.totalorder %s11, 0
    %p73 = por %p71, %p72
    %p74 = scmp.ne.s32.totalorder %s63, %s66
    %p75 = scmp.eq.s32.totalorder %s16, 1
    %p76 = por %p74, %p75
    %p77 = scmp.ne.s32.totalorder %s66, %s67
    %p78 = scmp.eq.s32.totalorder %s16, 0
    %p79 = por %p77, %p78
    %p80 = scmp.ne.s32.totalorder %s66, %s67
    %p81 = scmp.eq.s32.totalorder %s17, 1
    %p82 = por %p80, %p81
    %p84 = scmp.ne.s32.totalorder %s67, %s83
    %p85 = scmp.eq.s32.totalorder %s17, 0
    %p86 = por %p84, %p85
    %s87 = ssub.s32 %s11, %s18
    %p88 = scmp.eq.s32.totalorder %s87, 0
    %s90 = sadd.s32 %s89, 1
    %s91 = scalar_select %p88, %s89, %s90
    %p94 = pneg %p88
    %p95 = scmp.eq.s32.totalorder %s11, 1
    %p96 = por %p94, %p95
    %p97 = scmp.ne.s32.totalorder %s89, %s92
    %p98 = scmp.eq.s32.totalorder %s11, 0
    %p99 = por %p97, %p98
    %p100 = scmp.ne.s32.totalorder %s89, %s92
    %p101 = scmp.eq.s32.totalorder %s16, 1
    %p102 = por %p100, %p101
    %p103 = scmp.ne.s32.totalorder %s92, %s93
    %p104 = scmp.eq.s32.totalorder %s16, 0
    %p105 = por %p103, %p104
    %p106 = scmp.ne.s32.totalorder %s92, %s93
    %p107 = scmp.eq.s32.totalorder %s17, 1
    %p108 = por %p106, %p107
    %p110 = scmp.ne.s32.totalorder %s93, %s109
    %p111 = scmp.eq.s32.totalorder %s17, 0
    %p112 = por %p110, %p111
    %s113 = ssub.s32 %s11, %s18
    %p114 = scmp.eq.s32.totalorder %s113, 0
    %s116 = sadd.s32 %s115, 1
    %s117 = scalar_select %p114, %s115, %s116
    %p120 = pneg %p114
    %p121 = scmp.eq.s32.totalorder %s11, 1
    %p122 = por %p120, %p121
    %p123 = scmp.ne.s32.totalorder %s115, %s118
    %p124 = scmp.eq.s32.totalorder %s11, 0
    %p125 = por %p123, %p124
    %p126 = scmp.ne.s32.totalorder %s115, %s118
    %p127 = scmp.eq.s32.totalorder %s16, 1
    %p128 = por %p126, %p127
    %p129 = scmp.ne.s32.totalorder %s118, %s119
    %p130 = scmp.eq.s32.totalorder %s16, 0
    %p131 = por %p129, %p130
    %p132 = scmp.ne.s32.totalorder %s118, %s119
    %p133 = scmp.eq.s32.totalorder %s17, 1
    %p134 = por %p132, %p133
    %p136 = scmp.ne.s32.totalorder %s119, %s135
    %p137 = scmp.eq.s32.totalorder %s17, 0
    %p138 = por %p136, %p137
    %p139 = scmp.le.s32.totalorder 1, %s11
    %p140 = scmp.lt.s32.totalorder %s11, 3
    %p141 = pnand %p139, %p140
    %p142 = pneg %p141
    // Predicated region
    $region9: #{cam_forward.7} parent=5 // pred_check
      _
    $region10: #{cam_forward.7} parent=5 // pred_check_branch
      %144 = sbr.rel (%p141) target = $region12
    $region11: #{cam_forward.7} parent=5 // pred_region
      %s145 = ssub.s32 %s11, 1
      // Predicated region
      $region13: #{cam_forward.7} parent=11 // pred_check
        %p146 = pneg %p32
      $region14: #{cam_forward.7} parent=11 // pred_check_branch
        %148 = sbr.rel (%p146) target = $region16
      $region15: #{cam_forward.7} parent=11 // pred_region
        _
      $region16: #{cam_forward.7} parent=11 // pred_fallthru
        _
      // Predicated region
      $region17: #{cam_forward.7} parent=11 // pred_check
        %p149 = pneg %p53
      $region18: #{cam_forward.7} parent=11 // pred_check_branch
        %151 = sbr.rel (%p149) target = $region20
      $region19: #{cam_forward.7} parent=11 // pred_region
        _
      $region20: #{cam_forward.7} parent=11 // pred_fallthru
        _
    $region12: #{cam_forward.7} parent=5 // pred_fallthru
      _
    %p152 = scmp.lt.s32.totalorder %s11, 2
    // Predicated region
    $region21: #{cam_forward.7} parent=5 // pred_check
      %p153 = pneg %p152
    $region22: #{cam_forward.7} parent=5 // pred_check_branch
      %155 = sbr.rel (%p153) target = $region24
    $region23: #{cam_forward.7} parent=5 // pred_region
      // Predicated region
      $region25: #{cam_forward.7} parent=23 // pred_check
        %p156 = pneg %p73
      $region26: #{cam_forward.7} parent=23 // pred_check_branch
        %158 = sbr.rel (%p156) target = $region28
      $region27: #{cam_forward.7} parent=23 // pred_region
        %p159 = scmp.lt.s32.totalorder %s11, 1
        %s160 = scalar_select %p159, %s11, 1
        %s161 = smul.addr %s160, 2
        %s162 = smul.addr %s161, 8
        %s163 = scalar_lea.vmem %s2, %s162
      $region28: #{cam_forward.7} parent=23 // pred_fallthru
        _
    $region24: #{cam_forward.7} parent=5 // pred_fallthru
      _
    %p164 = scmp.le.s32.totalorder 1, %s11
    %p165 = scmp.lt.s32.totalorder %s11, 3
    %p166 = pnand %p164, %p165
    %p167 = pneg %p166
    // Predicated region
    $region29: #{cam_forward.7} parent=5 // pred_check
      _
    $region30: #{cam_forward.7} parent=5 // pred_check_branch
      %169 = sbr.rel (%p166) target = $region32
    $region31: #{cam_forward.7} parent=5 // pred_region
      %s170 = ssub.s32 %s11, 1
      %p171 = pneg %p32
      %p172 = pneg %p29
      %p173 = pneg %p53
      %p174 = pneg %p50
      %p175 = scmp.lt.s32.totalorder %s16, 1
      %s176 = scalar_select %p175, %s16, 1
      %s177 = smul.addr %s176, 2
      %s178 = smul.addr %s177, 8
      %s179 = scalar_lea.vmem %s2, %s178
      %p180 = pneg %p79
      %p181 = pneg %p76
      %p182 = pneg %p105
      %p183 = pneg %p102
      %p184 = scmp.lt.s32.totalorder %s16, 1
      %s185 = scalar_select %p184, %s16, 1
      %s186 = smul.addr %s185, 4
      %s187 = smul.addr %s186, 8
      %s188 = scalar_lea.vmem %s3, %s187
      %p189 = pneg %p131
      %p190 = pneg %p128
      %p191 = scmp.lt.s32.totalorder %s16, 1
      %s192 = scalar_select %p191, %s16, 1
      %s193 = smul.addr %s192, 4
      %s194 = smul.addr %s193, 8
      %s195 = scalar_lea.vmem %s4, %s194
      %p196 = scmp.lt.s32.totalorder %s16, 1
      %s197 = scalar_select %p196, %s16, 1
      %s198 = smul.addr %s197, 2
      %s199 = smul.addr %s198, 8
      %s200 = scalar_lea.vmem %s2, %s199
      %p201 = scmp.lt.s32.totalorder %s16, 1
      %s202 = scalar_select %p201, %s16, 1
      %s203 = smul.addr %s202, 4
      %s204 = smul.addr %s203, 8
      %s205 = scalar_lea.vmem %s3, %s204
      %p206 = scmp.lt.s32.totalorder %s16, 1
      %s207 = scalar_select %p206, %s16, 1
      %s208 = smul.addr %s207, 4
      %s209 = smul.addr %s208, 8
      %s210 = scalar_lea.vmem %s4, %s209
      %v212 = vld [vmem:[%s0] sm:$0xff]
      %v213 = vld [vmem:[%s0 + $0x8] sm:$0xff]
      %v214 = vld [vmem:[%s0 + $0x10] sm:$0xff]
      %v215 = vld [vmem:[%s0 + $0x18] sm:$0xff]
      %v216 = vld [vmem:[%s200] sm:$0xff]
      %v217 = vld [vmem:[%s200 + $0x8] sm:$0xff]
      %v218 = vpack.c.bf16 %v213, %v212
      %v219 = vpack.c.bf16 %v215, %v214
      %v220 = vpack.c.bf16 %v217, %v216
      %vm221 = vcmask 130048
      %v223 = vsel %vm221, %v218, 0
      %v226 = vsel %vm221, %v219, 0
      %228 = vmatprep.subr.bf16.mxu0 0
      %229 = vmatpush1.bf16.msra.mxu0 0
      %230 = vmatprep.subr.bf16.mxu0 0
      %231 = vmatpush1.bf16.msra.mxu0 0
      %232 = vmatprep.subr.bf16.mxu0 0
      %233 = vmatpush1.bf16.msra.mxu0 0
      %234 = vmatprep.subr.bf16.mxu0 0
      %235 = vmatpush1.bf16.msra.mxu0 0
      %236 = vmatprep.subr.bf16.mxu0 0
      %237 = vmatpush1.bf16.msra.mxu0 0
      %238 = vmatprep.subr.bf16.mxu0 0
      %239 = vmatpush1.bf16.msra.mxu0 0
      %240 = vmatprep.subr.bf16.mxu0 0
      %241 = vmatpush1.bf16.msra.mxu0 0
      %242 = vmatprep.subr.bf16.mxu0 0
      %243 = vmatpush1.bf16.msra.mxu0 %v220
      %244 = vmatprep.subr.bf16.mxu0 0
      %245 = vmatpush2.bf16.msra.mxu0 0
      %246 = vmatprep.subr.bf16.mxu0 0
      %247 = vmatpush2.bf16.msra.mxu0 0
      %248 = vmatprep.subr.bf16.mxu0 0
      %249 = vmatpush2.bf16.msra.mxu0 0
      %250 = vmatprep.subr.bf16.mxu0 0
      %251 = vmatpush2.bf16.msra.mxu0 0
      %252 = vmatprep.subr.bf16.mxu0 0
      %253 = vmatpush2.bf16.msra.mxu0 0
      %254 = vmatprep.subr.bf16.mxu0 0
      %255 = vmatpush2.bf16.msra.mxu0 0
      %256 = vmatprep.subr.bf16.mxu0 0
      %257 = vmatpush2.bf16.msra.mxu0 0
      %258 = vmatprep.subr.bf16.mxu0 0
      %259 = vmatpush2.bf16.msra.mxu0 0
      %260 = vmatprep.mubr.bf16.mxu0 0
      %261 = vmatmul.mubr.bf16.gmra.mxu0 %v223
      %v262 = vpop.f32.mrf.mxu0
      %v263 = vadd.f32 0.0, %v262
      %v264 = vpop.f32.mrf.mxu0
      %v265 = vpop.f32.mrf.mxu0
      %v266 = vadd.f32 0.0, %v265
      %v267 = vpop.f32.mrf.mxu0
      %268 = vmatprep.mubr.bf16.mxu0 0
      %269 = vmatmul.mubr.bf16.gmra.mxu0 %v226
      %v270 = vpop.f32.mrf.mxu0
      %v271 = vadd.f32 0.0, %v270
      %v272 = vpop.f32.mrf.mxu0
      %v273 = vpop.f32.mrf.mxu0
      %v274 = vadd.f32 0.0, %v273
      %v275 = vpop.f32.mrf.mxu0
      %276 = vdwg.mxu0
      %v277 = vmax.f32 %v263, 0.0
      %v278 = vmax.f32 %v266, 0.0
      %v279 = vmax.f32 %v271, 0.0
      %v280 = vmax.f32 %v274, 0.0
      %vm281 = vcmask 523264
      %282 = vst.msk [vmem:[%s205] sm:$0xff] %vm281, %v277
      %283 = vst.msk [vmem:[%s205 + $0x8] sm:$0xff] %vm281, %v278
      %284 = vst.msk [vmem:[%s205 + $0x10] sm:$0xff] %vm281, %v279
      %285 = vst.msk [vmem:[%s205 + $0x18] sm:$0xff] %vm281, %v280
      %v286 = vld [vmem:[%s1] sm:$0xff]
      %v287 = vld [vmem:[%s1 + $0x8] sm:$0xff]
      %v288 = vld [vmem:[%s1 + $0x10] sm:$0xff]
      %v289 = vld [vmem:[%s1 + $0x18] sm:$0xff]
      %v290 = vpack.c.bf16 %v287, %v286
      %v291 = vpack.c.bf16 %v289, %v288
      %v292 = vpack.c.bf16 %v278, %v277
      %v293 = vpack.c.bf16 %v280, %v279
      %vm294 = vcmask 261120
      %v296 = vsel %vm294, %v290, 0
      %v299 = vsel %vm294, %v291, 0
      %301 = vmatprep.subr.bf16.mxu0 0
      %302 = vmatpush1.bf16.msra.mxu0 0
      %303 = vmatprep.subr.bf16.mxu0 0
      %304 = vmatpush1.bf16.msra.mxu0 0
      %305 = vmatprep.subr.bf16.mxu0 0
      %306 = vmatpush1.bf16.msra.mxu0 0
      %307 = vmatprep.subr.bf16.mxu0 0
      %308 = vmatpush1.bf16.msra.mxu0 0
      %309 = vmatprep.subr.bf16.mxu0 0
      %310 = vmatpush1.bf16.msra.mxu0 0
      %311 = vmatprep.subr.bf16.mxu0 0
      %312 = vmatpush1.bf16.msra.mxu0 0
      %313 = vmatprep.subr.bf16.mxu0 0
      %314 = vmatpush1.bf16.msra.mxu0 %v293
      %315 = vmatprep.subr.bf16.mxu0 0
      %316 = vmatpush1.bf16.msra.mxu0 %v292
      %317 = vmatprep.subr.bf16.mxu0 0
      %318 = vmatpush2.bf16.msra.mxu0 0
      %319 = vmatprep.subr.bf16.mxu0 0
      %320 = vmatpush2.bf16.msra.mxu0 0
      %321 = vmatprep.subr.bf16.mxu0 0
      %322 = vmatpush2.bf16.msra.mxu0 0
      %323 = vmatprep.subr.bf16.mxu0 0
      %324 = vmatpush2.bf16.msra.mxu0 0
      %325 = vmatprep.subr.bf16.mxu0 0
      %326 = vmatpush2.bf16.msra.mxu0 0
      %327 = vmatprep.subr.bf16.mxu0 0
      %328 = vmatpush2.bf16.msra.mxu0 0
      %329 = vmatprep.subr.bf16.mxu0 0
      %330 = vmatpush2.bf16.msra.mxu0 0
      %331 = vmatprep.subr.bf16.mxu0 0
      %332 = vmatpush2.bf16.msra.mxu0 0
      %333 = vmatprep.mubr.bf16.mxu0 0
      %334 = vmatmul.mubr.bf16.gmra.mxu0 %v296
      %v335 = vpop.f32.mrf.mxu0
      %v336 = vadd.f32 0.0, %v335
      %v337 = vpop.f32.mrf.mxu0
      %v338 = vpop.f32.mrf.mxu0
      %v339 = vadd.f32 0.0, %v338
      %v340 = vpop.f32.mrf.mxu0
      %341 = vmatprep.mubr.bf16.mxu0 0
      %342 = vmatmul.mubr.bf16.gmra.mxu0 %v299
      %v343 = vpop.f32.mrf.mxu0
      %v344 = vadd.f32 0.0, %v343
      %v345 = vpop.f32.mrf.mxu0
      %v346 = vpop.f32.mrf.mxu0
      %v347 = vadd.f32 0.0, %v346
      %v348 = vpop.f32.mrf.mxu0
      %349 = vdwg.mxu0
      %v350 = vmul.f32 %v336, %v336
      %v351 = vmul.f32 %v339, %v339
      %v352 = vmul.f32 %v344, %v344
      %v353 = vmul.f32 %v347, %v347
      %v354 = vsel %vm281, %v350, 0.0
      %v355 = vsel %vm281, %v351, 0.0
      %v356 = vadd.f32 %v354, %v355
      %v357 = vsel %vm281, %v352, 0.0
      %v358 = vadd.f32 %v356, %v357
      %v359 = vsel %vm281, %v353, 0.0
      %v360 = vadd.f32 %v358, %v359
      %v361 = vrot.slane %v360, 4
      %v362 = vadd.f32 %v360, %v361
      %v363 = vrot.slane %v362, 2
      %v364 = vadd.f32 %v362, %v363
      %v365 = vrot.slane %v364, 1
      %v366 = vadd.f32 %v364, %v365
      %v367 = vrsqrt.pop %v366
      %v368 = vmul.f32 %v366, %v367
      %vm369 = vcmp.eq.f32.partialorder %v366, inf
      %v370 = vsel %vm369, %v366, %v368
      %vm371 = vcmp.eq.f32.partialorder %v366, 0.0
      %v372 = vand.u32 %v366, 2147483648
      %v373 = vsel %vm371, %v372, %v370
      %v374 = vadd.f32 %v373, 1e-05
      %v375 = vrcp.pop %v374
      %v376 = vmul.f32 %v336, %v375
      %v377 = vmul.f32 %v339, %v375
      %v378 = vmul.f32 %v344, %v375
      %v379 = vmul.f32 %v347, %v375
      %380 = vst.msk [vmem:[%s210] sm:$0xff] %vm281, %v376
      %381 = vst.msk [vmem:[%s210 + $0x8] sm:$0xff] %vm281, %v377
      %382 = vst.msk [vmem:[%s210 + $0x10] sm:$0xff] %vm281, %v378
      %383 = vst.msk [vmem:[%s210 + $0x18] sm:$0xff] %vm281, %v379
      %p384 = scmp.lt.s32.totalorder %s16, 1
      %s385 = scalar_select %p384, %s16, 1
      %s386 = smul.addr %s385, 4
      %s387 = smul.addr %s386, 8
      %s388 = scalar_lea.vmem %s3, %s387
      %p389 = scmp.lt.s32.totalorder %s16, 1
      %s390 = scalar_select %p389, %s16, 1
      %s391 = smul.addr %s390, 4
      %s392 = smul.addr %s391, 8
      %s393 = scalar_lea.vmem %s4, %s392
      // Predicated region
      $region33: #{cam_forward.7} parent=31 // pred_check
        %p394 = pneg %p102
      $region34: #{cam_forward.7} parent=31 // pred_check_branch
        %396 = sbr.rel (%p394) target = $region36
      $region35: #{cam_forward.7} parent=31 // pred_region
        _
      $region36: #{cam_forward.7} parent=31 // pred_fallthru
        _
      // Predicated region
      $region37: #{cam_forward.7} parent=31 // pred_check
        %p397 = pneg %p128
      $region38: #{cam_forward.7} parent=31 // pred_check_branch
        %399 = sbr.rel (%p397) target = $region40
      $region39: #{cam_forward.7} parent=31 // pred_region
        _
      $region40: #{cam_forward.7} parent=31 // pred_fallthru
        _
    $region32: #{cam_forward.7} parent=5 // pred_fallthru
      _
    %p400 = scmp.le.s32.totalorder 2, %s11
    // Predicated region
    $region41: #{cam_forward.7} parent=5 // pred_check
      %p401 = pneg %p400
    $region42: #{cam_forward.7} parent=5 // pred_check_branch
      %403 = sbr.rel (%p401) target = $region44
    $region43: #{cam_forward.7} parent=5 // pred_region
      %s404 = ssub.s32 %s11, 2
      // Predicated region
      $region45: #{cam_forward.7} parent=43 // pred_check
        %p405 = pneg %p108
      $region46: #{cam_forward.7} parent=43 // pred_check_branch
        %407 = sbr.rel (%p405) target = $region48
      $region47: #{cam_forward.7} parent=43 // pred_region
        %p408 = scmp.lt.s32.totalorder %s17, 1
        %s409 = scalar_select %p408, %s17, 1
        %s410 = smul.addr %s409, 4
        %s411 = smul.addr %s410, 8
        %s412 = scalar_lea.vmem %s3, %s411
      $region48: #{cam_forward.7} parent=43 // pred_fallthru
        _
      // Predicated region
      $region49: #{cam_forward.7} parent=43 // pred_check
        %p413 = pneg %p134
      $region50: #{cam_forward.7} parent=43 // pred_check_branch
        %415 = sbr.rel (%p413) target = $region52
      $region51: #{cam_forward.7} parent=43 // pred_region
        %p416 = scmp.lt.s32.totalorder %s17, 1
        %s417 = scalar_select %p416, %s17, 1
        %s418 = smul.addr %s417, 4
        %s419 = smul.addr %s418, 8
        %s420 = scalar_lea.vmem %s4, %s419
      $region52: #{cam_forward.7} parent=43 // pred_fallthru
        _
    $region44: #{cam_forward.7} parent=5 // pred_fallthru
      _
  $region6: #{cam_forward.7} parent=0 // loop_footer
    %s15 = sadd.s32 1, %s11
  $region7: #{cam_forward.7} parent=0 // loop_footer_branch
    %10 = sbr.rel target = $region3
  $region8: #{cam_forward.7} parent=0 // loop_exit
    _

// kernel: cam_forward.9
$region0: #{cam_forward.9}
  #allocation0 [shape = 'u32[]', space=smem, size = 0x4, offset = 0x4, fixed_abs, tag = 'smem constant byte address 0x4 - core index']
  #allocation1 [shape = 'u32[144,128]{1,0:T(1,128)}', space=vmem, size = 0x12000, scoped, tag = 'internal scratch']
  %s0 = inlined_call_operand.vmem [shape: f32[1,8,16], index: 0, kind: input, shape index: {}]
  %s1 = inlined_call_operand.vmem [shape: f32[1,8,16], index: 1, kind: output, shape index: {}]
  %s2 = sld [smem:[#allocation0]]
  $region14: #{cam_forward.9} parent=0
    _
  %s4 = ssub.s32 1, %s2
  %s5 = scalar_select 0, %s4, %s2
  // Predicated region
  $region2: #{cam_forward.9} parent=0 // pred_check
    _
  $region3: #{cam_forward.9} parent=0 // pred_check_branch
    %7 = sbr.rel (0) target = $region5
  $region4: #{cam_forward.9} parent=0 // pred_region
    _
  $region5: #{cam_forward.9} parent=0 // pred_fallthru
    _
  %v8 = vld [vmem:[%s0] sm:$0xff]
  %v9 = vmax.f32 %v8, 0.0
  %vm10 = vcmask 130048
  %v11 = vsel %vm10, %v9, -inf
  %12 = vmax.xlane.f32.xlu0 %v11
  %v13 = vpop.xlane.xlu0 %12
  %v14 = vadd.f32 %v13, 1e-05
  %v15 = vrcp.pop %v14
  %v16 = vmul.f32 %v9, %v15
  %v17 = vsel %vm10, %v16, -inf
  %v18 = vrot.slane %v17, 4
  %v19 = vmax.f32 %v17, %v18
  %v20 = vrot.slane %v19, 2
  %v21 = vmax.f32 %v19, %v20
  %v22 = vrot.slane %v21, 1
  %v23 = vmax.f32 %v21, %v22
  %v24 = vsub.f32 1.0, %v23
  %v25 = vlaneseq
  %v26 = vshrl.u32 %v25, 7
  %vm27 = vcmp.eq.s32.totalorder %v26, 0
  %v28 = vsel %vm27, %v24, %v16
  %29 = vst.msk [vmem:[%s1] sm:$0xff] %vm10, %v28
  // Predicated region
  $region6: #{cam_forward.9} parent=0 // pred_check
    _
  $region7: #{cam_forward.9} parent=0 // pred_check_branch
    %31 = sbr.rel (0) target = $region9
  $region8: #{cam_forward.9} parent=0 // pred_region
    _
  $region9: #{cam_forward.9} parent=0 // pred_fallthru
    _
  // Predicated region
  $region10: #{cam_forward.9} parent=0 // pred_check
    _
  $region11: #{cam_forward.9} parent=0 // pred_check_branch
    %33 = sbr.rel (0) target = $region13
  $region12: #{cam_forward.9} parent=0 // pred_region
    _
  $region13: #{cam_forward.9} parent=0 // pred_fallthru
    _

// kernel: cam_forward.8
$region0: #{cam_forward.8}
  #allocation0 [shape = 'u32[]', space=smem, size = 0x4, offset = 0x4, fixed_abs, tag = 'smem constant byte address 0x4 - core index']
  #allocation1 [shape = 'u32[144,128]{1,0:T(1,128)}', space=vmem, size = 0x12000, scoped, tag = 'internal scratch']
  %s0 = inlined_call_operand.vmem [shape: f32[64,32], index: 0, kind: input, shape index: {}]
  %s1 = inlined_call_operand.vmem [shape: f32[128,64], index: 1, kind: input, shape index: {}]
  %s2 = inlined_call_operand.vmem [shape: f32[64,64], index: 2, kind: input, shape index: {}]
  %s3 = inlined_call_operand.vmem [shape: f32[64,128], index: 3, kind: input, shape index: {}]
  %s4 = inlined_call_operand.vmem [shape: f32[8,128], index: 4, kind: input, shape index: {}]
  %s5 = inlined_call_operand.vmem [shape: f32[2,32,16], index: 5, kind: input, shape index: {}]
  %s6 = inlined_call_operand.vmem [shape: f32[2,128,16], index: 6, kind: output, shape index: {0}]
  %s7 = inlined_call_operand.vmem [shape: f32[2,64,16], index: 7, kind: output, shape index: {1}]
  %s8 = inlined_call_operand.vmem [shape: f32[2,64,16], index: 8, kind: output, shape index: {2}]
  %s9 = inlined_call_operand.vmem [shape: f32[2,8,16], index: 9, kind: output, shape index: {3}]
  %10 = xla_tuple %s6, %s7, %s8, %s9
  %s11 = sld [smem:[#allocation0]]
  $region81: #{cam_forward.8} parent=0
    _
  %s13 = ssub.s32 1, %s11
  %s14 = scalar_select 0, %s13, %s11
  loop: start=0, step=1, limit=4
  $region2: #{cam_forward.8} parent=0 // loop_pre_header
    _
  $region3: #{cam_forward.8} parent=0 // loop_header
    %s16 = sphi 0, %s20
    %p17 = scmp.ge.s32.totalorder %s16, 4
    %s24 = sphi 0, %s24
    %s26 = sphi 0, %s24
    %s27 = sphi 0, %s26
    %s41 = sphi 0, %s27
    %s45 = sphi 0, %s45
    %s47 = sphi 0, %s45
    %s48 = sphi 0, %s47
    %s62 = sphi 0, %s48
    %s66 = sphi 0, %s66
    %s68 = sphi 0, %s66
    %s69 = sphi 0, %s68
    %s83 = sphi 0, %s69
    %s87 = sphi 0, %s87
    %s89 = sphi 0, %s87
    %s90 = sphi 0, %s89
    %s104 = sphi 0, %s90
    %s108 = sphi 0, %s108
    %s110 = sphi 0, %s108
    %s111 = sphi 0, %s110
    %s125 = sphi 0, %s111
    %s131 = sphi 0, %s133
    %s134 = sphi 0, %s131
    %s135 = sphi 0, %s134
    %s151 = sphi 0, %s135
    %s157 = sphi 0, %s159
    %s160 = sphi 0, %s157
    %s161 = sphi 0, %s160
    %s177 = sphi 0, %s161
    %s183 = sphi 0, %s185
    %s186 = sphi 0, %s183
    %s187 = sphi 0, %s186
    %s203 = sphi 0, %s187
    %s209 = sphi 0, %s211
    %s212 = sphi 0, %s209
    %s213 = sphi 0, %s212
    %s229 = sphi 0, %s213
    %s235 = sphi 0, %s237
    %s238 = sphi 0, %s235
    %s239 = sphi 0, %s238
    %s255 = sphi 0, %s239
  $region4: #{cam_forward.8} parent=0 // loop_header_branch
    %19 = sbr.rel (%p17) target = $region8
  $region5: #{cam_forward.8} parent=0 // loop_body
    %s21 = ssub.s32 %s16, 1
    %s22 = ssub.s32 %s16, 2
    %s23 = sadd.s32 %s16, 1
    %s25 = sadd.s32 %s24, 1
    %p28 = scmp.eq.s32.totalorder %s16, 1
    %p29 = scmp.ne.s32.totalorder %s24, %s26
    %p30 = scmp.eq.s32.totalorder %s16, 0
    %p31 = por %p29, %p30
    %p32 = scmp.ne.s32.totalorder %s24, %s26
    %p33 = scmp.eq.s32.totalorder %s21, 1
    %p34 = por %p32, %p33
    %p35 = scmp.ne.s32.totalorder %s26, %s27
    %p36 = scmp.eq.s32.totalorder %s21, 0
    %p37 = por %p35, %p36
    %p38 = scmp.ne.s32.totalorder %s26, %s27
    %p39 = scmp.eq.s32.totalorder %s22, 1
    %p40 = por %p38, %p39
    %p42 = scmp.ne.s32.totalorder %s27, %s41
    %p43 = scmp.eq.s32.totalorder %s22, 0
    %p44 = por %p42, %p43
    %s46 = sadd.s32 %s45, 1
    %p49 = scmp.eq.s32.totalorder %s16, 1
    %p50 = scmp.ne.s32.totalorder %s45, %s47
    %p51 = scmp.eq.s32.totalorder %s16, 0
    %p52 = por %p50, %p51
    %p53 = scmp.ne.s32.totalorder %s45, %s47
    %p54 = scmp.eq.s32.totalorder %s21, 1
    %p55 = por %p53, %p54
    %p56 = scmp.ne.s32.totalorder %s47, %s48
    %p57 = scmp.eq.s32.totalorder %s21, 0
    %p58 = por %p56, %p57
    %p59 = scmp.ne.s32.totalorder %s47, %s48
    %p60 = scmp.eq.s32.totalorder %s22, 1
    %p61 = por %p59, %p60
    %p63 = scmp.ne.s32.totalorder %s48, %s62
    %p64 = scmp.eq.s32.totalorder %s22, 0
    %p65 = por %p63, %p64
    %s67 = sadd.s32 %s66, 1
    %p70 = scmp.eq.s32.totalorder %s16, 1
    %p71 = scmp.ne.s32.totalorder %s66, %s68
    %p72 = scmp.eq.s32.totalorder %s16, 0
    %p73 = por %p71, %p72
    %p74 = scmp.ne.s32.totalorder %s66, %s68
    %p75 = scmp.eq.s32.totalorder %s21, 1
    %p76 = por %p74, %p75
    %p77 = scmp.ne.s32.totalorder %s68, %s69
    %p78 = scmp.eq.s32.totalorder %s21, 0
    %p79 = por %p77, %p78
    %p80 = scmp.ne.s32.totalorder %s68, %s69
    %p81 = scmp.eq.s32.totalorder %s22, 1
    %p82 = por %p80, %p81
    %p84 = scmp.ne.s32.totalorder %s69, %s83
    %p85 = scmp.eq.s32.totalorder %s22, 0
    %p86 = por %p84, %p85
    %s88 = sadd.s32 %s87, 1
    %p91 = scmp.eq.s32.totalorder %s16, 1
    %p92 = scmp.ne.s32.totalorder %s87, %s89
    %p93 = scmp.eq.s32.totalorder %s16, 0
    %p94 = por %p92, %p93
    %p95 = scmp.ne.s32.totalorder %s87, %s89
    %p96 = scmp.eq.s32.totalorder %s21, 1
    %p97 = por %p95, %p96
    %p98 = scmp.ne.s32.totalorder %s89, %s90
    %p99 = scmp.eq.s32.totalorder %s21, 0
    %p100 = por %p98, %p99
    %p101 = scmp.ne.s32.totalorder %s89, %s90
    %p102 = scmp.eq.s32.totalorder %s22, 1
    %p103 = por %p101, %p102
    %p105 = scmp.ne.s32.totalorder %s90, %s104
    %p106 = scmp.eq.s32.totalorder %s22, 0
    %p107 = por %p105, %p106
    %s109 = sadd.s32 %s108, 1
    %p112 = scmp.eq.s32.totalorder %s16, 1
    %p113 = scmp.ne.s32.totalorder %s108, %s110
    %p114 = scmp.eq.s32.totalorder %s16, 0
    %p115 = por %p113, %p114
    %p116 = scmp.ne.s32.totalorder %s108, %s110
    %p117 = scmp.eq.s32.totalorder %s21, 1
    %p118 = por %p116, %p117
    %p119 = scmp.ne.s32.totalorder %s110, %s111
    %p120 = scmp.eq.s32.totalorder %s21, 0
    %p121 = por %p119, %p120
    %p122 = scmp.ne.s32.totalorder %s110, %s111
    %p123 = scmp.eq.s32.totalorder %s22, 1
    %p124 = por %p122, %p123
    %p126 = scmp.ne.s32.totalorder %s111, %s125
    %p127 = scmp.eq.s32.totalorder %s22, 0
    %p128 = por %p126, %p127
    %s129 = ssub.s32 %s16, %s23
    %p130 = scmp.eq.s32.totalorder %s129, 0
    %s132 = sadd.s32 %s131, 1
    %s133 = scalar_select %p130, %s131, %s132
    %p136 = pneg %p130
    %p137 = scmp.eq.s32.totalorder %s16, 1
    %p138 = por %p136, %p137
    %p139 = scmp.ne.s32.totalorder %s131, %s134
    %p140 = scmp.eq.s32.totalorder %s16, 0
    %p141 = por %p139, %p140
    %p142 = scmp.ne.s32.totalorder %s131, %s134
    %p143 = scmp.eq.s32.totalorder %s21, 1
    %p144 = por %p142, %p143
    %p145 = scmp.ne.s32.totalorder %s134, %s135
    %p146 = scmp.eq.s32.totalorder %s21, 0
    %p147 = por %p145, %p146
    %p148 = scmp.ne.s32.totalorder %s134, %s135
    %p149 = scmp.eq.s32.totalorder %s22, 1
    %p150 = por %p148, %p149
    %p152 = scmp.ne.s32.totalorder %s135, %s151
    %p153 = scmp.eq.s32.totalorder %s22, 0
    %p154 = por %p152, %p153
    %s155 = ssub.s32 %s16, %s23
    %p156 = scmp.eq.s32.totalorder %s155, 0
    %s158 = sadd.s32 %s157, 1
    %s159 = scalar_select %p156, %s157, %s158
    %p162 = pneg %p156
    %p163 = scmp.eq.s32.totalorder %s16, 1
    %p164 = por %p162, %p163
    %p165 = scmp.ne.s32.totalorder %s157, %s160
    %p166 = scmp.eq.s32.totalorder %s16, 0
    %p167 = por %p165, %p166
    %p168 = scmp.ne.s32.totalorder %s157, %s160
    %p169 = scmp.eq.s32.totalorder %s21, 1
    %p170 = por %p168, %p169
    %p171 = scmp.ne.s32.totalorder %s160, %s161
    %p172 = scmp.eq.s32.totalorder %s21, 0
    %p173 = por %p171, %p172
    %p174 = scmp.ne.s32.totalorder %s160, %s161
    %p175 = scmp.eq.s32.totalorder %s22, 1
    %p176 = por %p174, %p175
    %p178 = scmp.ne.s32.totalorder %s161, %s177
    %p179 = scmp.eq.s32.totalorder %s22, 0
    %p180 = por %p178, %p179
    %s181 = ssub.s32 %s16, %s23
    %p182 = scmp.eq.s32.totalorder %s181, 0
    %s184 = sadd.s32 %s183, 1
    %s185 = scalar_select %p182, %s183, %s184
    %p188 = pneg %p182
    %p189 = scmp.eq.s32.totalorder %s16, 1
    %p190 = por %p188, %p189
    %p191 = scmp.ne.s32.totalorder %s183, %s186
    %p192 = scmp.eq.s32.totalorder %s16, 0
    %p193 = por %p191, %p192
    %p194 = scmp.ne.s32.totalorder %s183, %s186
    %p195 = scmp.eq.s32.totalorder %s21, 1
    %p196 = por %p194, %p195
    %p197 = scmp.ne.s32.totalorder %s186, %s187
    %p198 = scmp.eq.s32.totalorder %s21, 0
    %p199 = por %p197, %p198
    %p200 = scmp.ne.s32.totalorder %s186, %s187
    %p201 = scmp.eq.s32.totalorder %s22, 1
    %p202 = por %p200, %p201
    %p204 = scmp.ne.s32.totalorder %s187, %s203
    %p205 = scmp.eq.s32.totalorder %s22, 0
    %p206 = por %p204, %p205
    %s207 = ssub.s32 %s16, %s23
    %p208 = scmp.eq.s32.totalorder %s207, 0
    %s210 = sadd.s32 %s209, 1
    %s211 = scalar_select %p208, %s209, %s210
    %p214 = pneg %p208
    %p215 = scmp.eq.s32.totalorder %s16, 1
    %p216 = por %p214, %p215
    %p217 = scmp.ne.s32.totalorder %s209, %s212
    %p218 = scmp.eq.s32.totalorder %s16, 0
    %p219 = por %p217, %p218
    %p220 = scmp.ne.s32.totalorder %s209, %s212
    %p221 = scmp.eq.s32.totalorder %s21, 1
    %p222 = por %p220, %p221
    %p223 = scmp.ne.s32.totalorder %s212, %s213
    %p224 = scmp.eq.s32.totalorder %s21, 0
    %p225 = por %p223, %p224
    %p226 = scmp.ne.s32.totalorder %s212, %s213
    %p227 = scmp.eq.s32.totalorder %s22, 1
    %p228 = por %p226, %p227
    %p230 = scmp.ne.s32.totalorder %s213, %s229
    %p231 = scmp.eq.s32.totalorder %s22, 0
    %p232 = por %p230, %p231
    %s233 = ssub.s32 %s16, %s23
    %p234 = scmp.eq.s32.totalorder %s233, 0
    %s236 = sadd.s32 %s235, 1
    %s237 = scalar_select %p234, %s235, %s236
    %p240 = pneg %p234
    %p241 = scmp.eq.s32.totalorder %s16, 1
    %p242 = por %p240, %p241
    %p243 = scmp.ne.s32.totalorder %s235, %s238
    %p244 = scmp.eq.s32.totalorder %s16, 0
    %p245 = por %p243, %p244
    %p246 = scmp.ne.s32.totalorder %s235, %s238
    %p247 = scmp.eq.s32.totalorder %s21, 1
    %p248 = por %p246, %p247
    %p249 = scmp.ne.s32.totalorder %s238, %s239
    %p250 = scmp.eq.s32.totalorder %s21, 0
    %p251 = por %p249, %p250
    %p252 = scmp.ne.s32.totalorder %s238, %s239
    %p253 = scmp.eq.s32.totalorder %s22, 1
    %p254 = por %p252, %p253
    %p256 = scmp.ne.s32.totalorder %s239, %s255
    %p257 = scmp.eq.s32.totalorder %s22, 0
    %p258 = por %p256, %p257
    %p259 = scmp.le.s32.totalorder 1, %s16
    %p260 = scmp.lt.s32.totalorder %s16, 3
    %p261 = pnand %p259, %p260
    %p262 = pneg %p261
    // Predicated region
    $region9: #{cam_forward.8} parent=5 // pred_check
      _
    $region10: #{cam_forward.8} parent=5 // pred_check_branch
      %264 = sbr.rel (%p261) target = $region12
    $region11: #{cam_forward.8} parent=5 // pred_region
      %s265 = ssub.s32 %s16, 1
      // Predicated region
      $region13: #{cam_forward.8} parent=11 // pred_check
        %p266 = pneg %p37
      $region14: #{cam_forward.8} parent=11 // pred_check_branch
        %268 = sbr.rel (%p266) target = $region16
      $region15: #{cam_forward.8} parent=11 // pred_region
        _
      $region16: #{cam_forward.8} parent=11 // pred_fallthru
        _
      // Predicated region
      $region17: #{cam_forward.8} parent=11 // pred_check
        %p269 = pneg %p58
      $region18: #{cam_forward.8} parent=11 // pred_check_branch
        %271 = sbr.rel (%p269) target = $region20
      $region19: #{cam_forward.8} parent=11 // pred_region
        _
      $region20: #{cam_forward.8} parent=11 // pred_fallthru
        _
      // Predicated region
      $region21: #{cam_forward.8} parent=11 // pred_check
        %p272 = pneg %p79
      $region22: #{cam_forward.8} parent=11 // pred_check_branch
        %274 = sbr.rel (%p272) target = $region24
      $region23: #{cam_forward.8} parent=11 // pred_region
        _
      $region24: #{cam_forward.8} parent=11 // pred_fallthru
        _
      // Predicated region
      $region25: #{cam_forward.8} parent=11 // pred_check
        %p275 = pneg %p100
      $region26: #{cam_forward.8} parent=11 // pred_check_branch
        %277 = sbr.rel (%p275) target = $region28
      $region27: #{cam_forward.8} parent=11 // pred_region
        _
      $region28: #{cam_forward.8} parent=11 // pred_fallthru
        _
      // Predicated region
      $region29: #{cam_forward.8} parent=11 // pred_check
        %p278 = pneg %p121
      $region30: #{cam_forward.8} parent=11 // pred_check_branch
        %280 = sbr.rel (%p278) target = $region32
      $region31: #{cam_forward.8} parent=11 // pred_region
        _
      $region32: #{cam_forward.8} parent=11 // pred_fallthru
        _
    $region12: #{cam_forward.8} parent=5 // pred_fallthru
      _
    %p281 = scmp.lt.s32.totalorder %s16, 2
    // Predicated region
    $region33: #{cam_forward.8} parent=5 // pred_check
      %p282 = pneg %p281
    $region34: #{cam_forward.8} parent=5 // pred_check_branch
      %284 = sbr.rel (%p282) target = $region36
    $region35: #{cam_forward.8} parent=5 // pred_region
      // Predicated region
      $region37: #{cam_forward.8} parent=35 // pred_check
        %p285 = pneg %p141
      $region38: #{cam_forward.8} parent=35 // pred_check_branch
        %287 = sbr.rel (%p285) target = $region40
      $region39: #{cam_forward.8} parent=35 // pred_region
        %p288 = scmp.lt.s32.totalorder %s16, 1
        %s289 = scalar_select %p288, %s16, 1
        %s290 = smul.addr %s289, 4
        %s291 = smul.addr %s290, 8
        %s292 = scalar_lea.vmem %s5, %s291
      $region40: #{cam_forward.8} parent=35 // pred_fallthru
        _
    $region36: #{cam_forward.8} parent=5 // pred_fallthru
      _
    %p293 = scmp.le.s32.totalorder 1, %s16
    %p294 = scmp.lt.s32.totalorder %s16, 3
    %p295 = pnand %p293, %p294
    %p296 = pneg %p295
    // Predicated region
    $region41: #{cam_forward.8} parent=5 // pred_check
      _
    $region42: #{cam_forward.8} parent=5 // pred_check_branch
      %298 = sbr.rel (%p295) target = $region44
    $region43: #{cam_forward.8} parent=5 // pred_region
      %s299 = ssub.s32 %s16, 1
      %p300 = pneg %p37
      %p301 = pneg %p34
      %p302 = pneg %p58
      %p303 = pneg %p55
      %p304 = pneg %p79
      %p305 = pneg %p76
      %p306 = pneg %p100
      %p307 = pneg %p97
      %p308 = pneg %p121
      %p309 = pneg %p118
      %p310 = scmp.lt.s32.totalorder %s21, 1
      %s311 = scalar_select %p310, %s21, 1
      %s312 = smul.addr %s311, 4
      %s313 = smul.addr %s312, 8
      %s314 = scalar_lea.vmem %s5, %s313
      %p315 = pneg %p147
      %p316 = pneg %p144
      %p317 = pneg %p173
      %p318 = pneg %p170
      %p319 = scmp.lt.s32.totalorder %s21, 1
      %s320 = scalar_select %p319, %s21, 1
      %s321 = smul.addr %s320, 16
      %s322 = smul.addr %s321, 8
      %s323 = scalar_lea.vmem %s6, %s322
      %p324 = pneg %p199
      %p325 = pneg %p196
      %p326 = scmp.lt.s32.totalorder %s21, 1
      %s327 = scalar_select %p326, %s21, 1
      %s328 = smul.addr %s327, 8
      %s329 = smul.addr %s328, 8
      %s330 = scalar_lea.vmem %s7, %s329
      %p331 = pneg %p225
      %p332 = pneg %p222
      %p333 = scmp.lt.s32.totalorder %s21, 1
      %s334 = scalar_select %p333, %s21, 1
      %s335 = smul.addr %s334, 8
      %s336 = smul.addr %s335, 8
      %s337 = scalar_lea.vmem %s8, %s336
      %p338 = pneg %p251
      %p339 = pneg %p248
      %p340 = scmp.lt.s32.totalorder %s21, 1
      %s341 = scalar_select %p340, %s21, 1
      %s342 = smul.addr %s341, 8
      %s343 = scalar_lea.vmem %s9, %s342
      %p344 = scmp.lt.s32.totalorder %s21, 1
      %s345 = scalar_select %p344, %s21, 1
      %s346 = smul.addr %s345, 4
      %s347 = smul.addr %s346, 8
      %s348 = scalar_lea.vmem %s5, %s347
      %p349 = scmp.lt.s32.totalorder %s21, 1
      %s350 = scalar_select %p349, %s21, 1
      %s351 = smul.addr %s350, 16
      %s352 = smul.addr %s351, 8
      %s353 = scalar_lea.vmem %s6, %s352
      %p354 = scmp.lt.s32.totalorder %s21, 1
      %s355 = scalar_select %p354, %s21, 1
      %s356 = smul.addr %s355, 8
      %s357 = smul.addr %s356, 8
      %s358 = scalar_lea.vmem %s7, %s357
      %p359 = scmp.lt.s32.totalorder %s21, 1
      %s360 = scalar_select %p359, %s21, 1
      %s361 = smul.addr %s360, 8
      %s362 = smul.addr %s361, 8
      %s363 = scalar_lea.vmem %s8, %s362
      %p364 = scmp.lt.s32.totalorder %s21, 1
      %s365 = scalar_select %p364, %s21, 1
      %s366 = smul.addr %s365, 8
      %s367 = scalar_lea.vmem %s9, %s366
      %v369 = vld [vmem:[%s0] sm:$0xff]
      %v370 = vld [vmem:[%s0 + $0x8] sm:$0xff]
      %v371 = vld [vmem:[%s0 + $0x10] sm:$0xff]
      %v372 = vld [vmem:[%s0 + $0x18] sm:$0xff]
      %v373 = vld [vmem:[%s0 + $0x20] sm:$0xff]
      %v374 = vld [vmem:[%s0 + $0x28] sm:$0xff]
      %v375 = vld [vmem:[%s0 + $0x30] sm:$0xff]
      %v376 = vld [vmem:[%s0 + $0x38] sm:$0xff]
      %v377 = vld [vmem:[%s348] sm:$0xff]
      %v378 = vld [vmem:[%s348 + $0x8] sm:$0xff]
      %v379 = vld [vmem:[%s348 + $0x10] sm:$0xff]
      %v380 = vld [vmem:[%s348 + $0x18] sm:$0xff]
      %v381 = vpack.c.bf16 %v370, %v369
      %v382 = vpack.c.bf16 %v372, %v371
      %v383 = vpack.c.bf16 %v374, %v373
      %v384 = vpack.c.bf16 %v376, %v375
      %v385 = vpack.c.bf16 %v378, %v377
      %v386 = vpack.c.bf16 %v380, %v379
      %vm387 = vcmask 261120
      %v389 = vsel %vm387, %v381, 0
      %v392 = vsel %vm387, %v382, 0
      %v395 = vsel %vm387, %v383, 0
      %v398 = vsel %vm387, %v384, 0
      %400 = vmatprep.subr.bf16.mxu0 0
      %401 = vmatpush1.bf16.msra.mxu0 0
      %402 = vmatprep.subr.bf16.mxu0 0
      %403 = vmatpush1.bf16.msra.mxu0 0
      %404 = vmatprep.subr.bf16.mxu0 0
      %405 = vmatpush1.bf16.msra.mxu0 0
      %406 = vmatprep.subr.bf16.mxu0 0
      %407 = vmatpush1.bf16.msra.mxu0 0
      %408 = vmatprep.subr.bf16.mxu0 0
      %409 = vmatpush1.bf16.msra.mxu0 0
      %410 = vmatprep.subr.bf16.mxu0 0
      %411 = vmatpush1.bf16.msra.mxu0 0
      %412 = vmatprep.subr.bf16.mxu0 0
      %413 = vmatpush1.bf16.msra.mxu0 %v386
      %414 = vmatprep.subr.bf16.mxu0 0
      %415 = vmatpush1.bf16.msra.mxu0 %v385
      %416 = vmatprep.subr.bf16.mxu0 0
      %417 = vmatpush2.bf16.msra.mxu0 0
      %418 = vmatprep.subr.bf16.mxu0 0
      %419 = vmatpush2.bf16.msra.mxu0 0
      %420 = vmatprep.subr.bf16.mxu0 0
      %421 = vmatpush2.bf16.msra.mxu0 0
      %422 = vmatprep.subr.bf16.mxu0 0
      %423 = vmatpush2.bf16.msra.mxu0 0
      %424 = vmatprep.subr.bf16.mxu0 0
      %425 = vmatpush2.bf16.msra.mxu0 0
      %426 = vmatprep.subr.bf16.mxu0 0
      %427 = vmatpush2.bf16.msra.mxu0 0
      %428 = vmatprep.subr.bf16.mxu0 0
      %429 = vmatpush2.bf16.msra.mxu0 0
      %430 = vmatprep.subr.bf16.mxu0 0
      %431 = vmatpush2.bf16.msra.mxu0 0
      %432 = vmatprep.mubr.bf16.mxu0 0
      %433 = vmatmul.mubr.bf16.gmra.mxu0 %v389
      %v434 = vpop.f32.mrf.mxu0
      %v435 = vadd.f32 0.0, %v434
      %v436 = vpop.f32.mrf.mxu0
      %v437 = vpop.f32.mrf.mxu0
      %v438 = vadd.f32 0.0, %v437
      %v439 = vpop.f32.mrf.mxu0
      %440 = vmatprep.mubr.bf16.mxu0 0
      %441 = vmatmul.mubr.bf16.gmra.mxu0 %v392
      %v442 = vpop.f32.mrf.mxu0
      %v443 = vadd.f32 0.0, %v442
      %v444 = vpop.f32.mrf.mxu0
      %v445 = vpop.f32.mrf.mxu0
      %v446 = vadd.f32 0.0, %v445
      %v447 = vpop.f32.mrf.mxu0
      %448 = vmatprep.mubr.bf16.mxu0 0
      %449 = vmatmul.mubr.bf16.gmra.mxu0 %v395
      %v450 = vpop.f32.mrf.mxu0
      %v451 = vadd.f32 0.0, %v450
      %v452 = vpop.f32.mrf.mxu0
      %v453 = vpop.f32.mrf.mxu0
      %v454 = vadd.f32 0.0, %v453
      %v455 = vpop.f32.mrf.mxu0
      %456 = vmatprep.mubr.bf16.mxu0 0
      %457 = vmatmul.mubr.bf16.gmra.mxu0 %v398
      %v458 = vpop.f32.mrf.mxu0
      %v459 = vadd.f32 0.0, %v458
      %v460 = vpop.f32.mrf.mxu0
      %v461 = vpop.f32.mrf.mxu0
      %v462 = vadd.f32 0.0, %v461
      %v463 = vpop.f32.mrf.mxu0
      %464 = vdwg.mxu0
      %v465 = vmax.f32 %v435, 0.0
      %v466 = vmax.f32 %v438, 0.0
      %v467 = vmax.f32 %v443, 0.0
      %v468 = vmax.f32 %v446, 0.0
      %v469 = vmax.f32 %v451, 0.0
      %v470 = vmax.f32 %v454, 0.0
      %v471 = vmax.f32 %v459, 0.0
      %v472 = vmax.f32 %v462, 0.0
      %v473 = vld [vmem:[%s1] sm:$0xff]
      %v474 = vld [vmem:[%s1 + $0x8] sm:$0xff]
      %v475 = vld [vmem:[%s1 + $0x10] sm:$0xff]
      %v476 = vld [vmem:[%s1 + $0x18] sm:$0xff]
      %v477 = vld [vmem:[%s1 + $0x20] sm:$0xff]
      %v478 = vld [vmem:[%s1 + $0x28] sm:$0xff]
      %v479 = vld [vmem:[%s1 + $0x30] sm:$0xff]
      %v480 = vld [vmem:[%s1 + $0x38] sm:$0xff]
      %v481 = vld [vmem:[%s1 + $0x40] sm:$0xff]
      %v482 = vld [vmem:[%s1 + $0x48] sm:$0xff]
      %v483 = vld [vmem:[%s1 + $0x50] sm:$0xff]
      %v484 = vld [vmem:[%s1 + $0x58] sm:$0xff]
      %v485 = vld [vmem:[%s1 + $0x60] sm:$0xff]
      %v486 = vld [vmem:[%s1 + $0x68] sm:$0xff]
      %v487 = vld [vmem:[%s1 + $0x70] sm:$0xff]
      %v488 = vld [vmem:[%s1 + $0x78] sm:$0xff]
      %v489 = vpack.c.bf16 %v474, %v473
      %v490 = vpack.c.bf16 %v476, %v475
      %v491 = vpack.c.bf16 %v478, %v477
      %v492 = vpack.c.bf16 %v480, %v479
      %v493 = vpack.c.bf16 %v482, %v481
      %v494 = vpack.c.bf16 %v484, %v483
      %v495 = vpack.c.bf16 %v486, %v485
      %v496 = vpack.c.bf16 %v488, %v487
      %v497 = vpack.c.bf16 %v466, %v465
      %v498 = vpack.c.bf16 %v468, %v467
      %v499 = vpack.c.bf16 %v470, %v469
      %v500 = vpack.c.bf16 %v472, %v471
      %vm501 = vcmask 523264
      %v503 = vsel %vm501, %v489, 0
      %v506 = vsel %vm501, %v490, 0
      %v509 = vsel %vm501, %v491, 0
      %v512 = vsel %vm501, %v492, 0
      %v515 = vsel %vm501, %v493, 0
      %v518 = vsel %vm501, %v494, 0
      %v521 = vsel %vm501, %v495, 0
      %v524 = vsel %vm501, %v496, 0
      %526 = vmatprep.subr.bf16.mxu0 0
      %527 = vmatpush1.bf16.msra.mxu0 0
      %528 = vmatprep.subr.bf16.mxu0 0
      %529 = vmatpush1.bf16.msra.mxu0 0
      %530 = vmatprep.subr.bf16.mxu0 0
      %531 = vmatpush1.bf16.msra.mxu0 0
      %532 = vmatprep.subr.bf16.mxu0 0
      %533 = vmatpush1.bf16.msra.mxu0 0
      %534 = vmatprep.subr.bf16.mxu0 0
      %535 = vmatpush1.bf16.msra.mxu0 %v500
      %536 = vmatprep.subr.bf16.mxu0 0
      %537 = vmatpush1.bf16.msra.mxu0 %v499
      %538 = vmatprep.subr.bf16.mxu0 0
      %539 = vmatpush1.bf16.msra.mxu0 %v498
      %540 = vmatprep.subr.bf16.mxu0 0
      %541 = vmatpush1.bf16.msra.mxu0 %v497
      %542 = vmatprep.subr.bf16.mxu0 0
      %543 = vmatpush2.bf16.msra.mxu0 0
      %544 = vmatprep.subr.bf16.mxu0 0
      %545 = vmatpush2.bf16.msra.mxu0 0
      %546 = vmatprep.subr.bf16.mxu0 0
      %547 = vmatpush2.bf16.msra.mxu0 0
      %548 = vmatprep.subr.bf16.mxu0 0
      %549 = vmatpush2.bf16.msra.mxu0 0
      %550 = vmatprep.subr.bf16.mxu0 0
      %551 = vmatpush2.bf16.msra.mxu0 0
      %552 = vmatprep.subr.bf16.mxu0 0
      %553 = vmatpush2.bf16.msra.mxu0 0
      %554 = vmatprep.subr.bf16.mxu0 0
      %555 = vmatpush2.bf16.msra.mxu0 0
      %556 = vmatprep.subr.bf16.mxu0 0
      %557 = vmatpush2.bf16.msra.mxu0 0
      %558 = vmatprep.mubr.bf16.mxu0 0
      %559 = vmatmul.mubr.bf16.gmra.mxu0 %v503
      %v560 = vpop.f32.mrf.mxu0
      %v561 = vadd.f32 0.0, %v560
      %v562 = vpop.f32.mrf.mxu0
      %v563 = vpop.f32.mrf.mxu0
      %v564 = vadd.f32 0.0, %v563
      %v565 = vpop.f32.mrf.mxu0
      %566 = vmatprep.mubr.bf16.mxu0 0
      %567 = vmatmul.mubr.bf16.gmra.mxu0 %v506
      %v568 = vpop.f32.mrf.mxu0
      %v569 = vadd.f32 0.0, %v568
      %v570 = vpop.f32.mrf.mxu0
      %v571 = vpop.f32.mrf.mxu0
      %v572 = vadd.f32 0.0, %v571
      %v573 = vpop.f32.mrf.mxu0
      %574 = vmatprep.mubr.bf16.mxu0 0
      %575 = vmatmul.mubr.bf16.gmra.mxu0 %v509
      %v576 = vpop.f32.mrf.mxu0
      %v577 = vadd.f32 0.0, %v576
      %v578 = vpop.f32.mrf.mxu0
      %v579 = vpop.f32.mrf.mxu0
      %v580 = vadd.f32 0.0, %v579
      %v581 = vpop.f32.mrf.mxu0
      %582 = vmatprep.mubr.bf16.mxu0 0
      %583 = vmatmul.mubr.bf16.gmra.mxu0 %v512
      %v584 = vpop.f32.mrf.mxu0
      %v585 = vadd.f32 0.0, %v584
      %v586 = vpop.f32.mrf.mxu0
      %v587 = vpop.f32.mrf.mxu0
      %v588 = vadd.f32 0.0, %v587
      %v589 = vpop.f32.mrf.mxu0
      %590 = vmatprep.mubr.bf16.mxu0 0
      %591 = vmatmul.mubr.bf16.gmra.mxu0 %v515
      %v592 = vpop.f32.mrf.mxu0
      %v593 = vadd.f32 0.0, %v592
      %v594 = vpop.f32.mrf.mxu0
      %v595 = vpop.f32.mrf.mxu0
      %v596 = vadd.f32 0.0, %v595
      %v597 = vpop.f32.mrf.mxu0
      %598 = vmatprep.mubr.bf16.mxu0 0
      %599 = vmatmul.mubr.bf16.gmra.mxu0 %v518
      %v600 = vpop.f32.mrf.mxu0
      %v601 = vadd.f32 0.0, %v600
      %v602 = vpop.f32.mrf.mxu0
      %v603 = vpop.f32.mrf.mxu0
      %v604 = vadd.f32 0.0, %v603
      %v605 = vpop.f32.mrf.mxu0
      %606 = vmatprep.mubr.bf16.mxu0 0
      %607 = vmatmul.mubr.bf16.gmra.mxu0 %v521
      %v608 = vpop.f32.mrf.mxu0
      %v609 = vadd.f32 0.0, %v608
      %v610 = vpop.f32.mrf.mxu0
      %v611 = vpop.f32.mrf.mxu0
      %v612 = vadd.f32 0.0, %v611
      %v613 = vpop.f32.mrf.mxu0
      %614 = vmatprep.mubr.bf16.mxu0 0
      %615 = vmatmul.mubr.bf16.gmra.mxu0 %v524
      %v616 = vpop.f32.mrf.mxu0
      %v617 = vadd.f32 0.0, %v616
      %v618 = vpop.f32.mrf.mxu0
      %v619 = vpop.f32.mrf.mxu0
      %v620 = vadd.f32 0.0, %v619
      %v621 = vpop.f32.mrf.mxu0
      %622 = vdwg.mxu0
      %v623 = vmax.f32 %v561, 0.0
      %v624 = vmax.f32 %v564, 0.0
      %v625 = vmax.f32 %v569, 0.0
      %v626 = vmax.f32 %v572, 0.0
      %v627 = vmax.f32 %v577, 0.0
      %v628 = vmax.f32 %v580, 0.0
      %v629 = vmax.f32 %v585, 0.0
      %v630 = vmax.f32 %v588, 0.0
      %v631 = vmax.f32 %v593, 0.0
      %v632 = vmax.f32 %v596, 0.0
      %v633 = vmax.f32 %v601, 0.0
      %v634 = vmax.f32 %v604, 0.0
      %v635 = vmax.f32 %v609, 0.0
      %v636 = vmax.f32 %v612, 0.0
      %v637 = vmax.f32 %v617, 0.0
      %v638 = vmax.f32 %v620, 0.0
      %vm639 = vcmask 130048
      %640 = vst.msk [vmem:[%s353] sm:$0xff] %vm639, %v623
      %641 = vst.msk [vmem:[%s353 + $0x8] sm:$0xff] %vm639, %v624
      %642 = vst.msk [vmem:[%s353 + $0x10] sm:$0xff] %vm639, %v625
      %643 = vst.msk [vmem:[%s353 + $0x18] sm:$0xff] %vm639, %v626
      %644 = vst.msk [vmem:[%s353 + $0x20] sm:$0xff] %vm639, %v627
      %645 = vst.msk [vmem:[%s353 + $0x28] sm:$0xff] %vm639, %v628
      %646 = vst.msk [vmem:[%s353 + $0x30] sm:$0xff] %vm639, %v629
      %647 = vst.msk [vmem:[%s353 + $0x38] sm:$0xff] %vm639, %v630
      %648 = vst.msk [vmem:[%s353 + $0x40] sm:$0xff] %vm639, %v631
      %649 = vst.msk [vmem:[%s353 + $0x48] sm:$0xff] %vm639, %v632
      %650 = vst.msk [vmem:[%s353 + $0x50] sm:$0xff] %vm639, %v633
      %651 = vst.msk [vmem:[%s353 + $0x58] sm:$0xff] %vm639, %v634
      %652 = vst.msk [vmem:[%s353 + $0x60] sm:$0xff] %vm639, %v635
      %653 = vst.msk [vmem:[%s353 + $0x68] sm:$0xff] %vm639, %v636
      %654 = vst.msk [vmem:[%s353 + $0x70] sm:$0xff] %vm639, %v637
      %655 = vst.msk [vmem:[%s353 + $0x78] sm:$0xff] %vm639, %v638
      %v656 = vld [vmem:[%s2] sm:$0xff]
      %v657 = vld [vmem:[%s2 + $0x8] sm:$0xff]
      %v658 = vld [vmem:[%s2 + $0x10] sm:$0xff]
      %v659 = vld [vmem:[%s2 + $0x18] sm:$0xff]
      %v660 = vld [vmem:[%s2 + $0x20] sm:$0xff]
      %v661 = vld [vmem:[%s2 + $0x28] sm:$0xff]
      %v662 = vld [vmem:[%s2 + $0x30] sm:$0xff]
      %v663 = vld [vmem:[%s2 + $0x38] sm:$0xff]
      %v664 = vpack.c.bf16 %v657, %v656
      %v665 = vpack.c.bf16 %v659, %v658
      %v666 = vpack.c.bf16 %v661, %v660
      %v667 = vpack.c.bf16 %v663, %v662
      %v669 = vsel %vm501, %v664, 0
      %v672 = vsel %vm501, %v665, 0
      %v675 = vsel %vm501, %v666, 0
      %v678 = vsel %vm501, %v667, 0
      %680 = vmatprep.subr.bf16.mxu0 0
      %681 = vmatpush1.bf16.msra.mxu0 0
      %682 = vmatprep.subr.bf16.mxu0 0
      %683 = vmatpush1.bf16.msra.mxu0 0
      %684 = vmatprep.subr.bf16.mxu0 0
      %685 = vmatpush1.bf16.msra.mxu0 0
      %686 = vmatprep.subr.bf16.mxu0 0
      %687 = vmatpush1.bf16.msra.mxu0 0
      %688 = vmatprep.subr.bf16.mxu0 0
      %689 = vmatpush1.bf16.msra.mxu0 %v500
      %690 = vmatprep.subr.bf16.mxu0 0
      %691 = vmatpush1.bf16.msra.mxu0 %v499
      %692 = vmatprep.subr.bf16.mxu0 0
      %693 = vmatpush1.bf16.msra.mxu0 %v498
      %694 = vmatprep.subr.bf16.mxu0 0
      %695 = vmatpush1.bf16.msra.mxu0 %v497
      %696 = vmatprep.subr.bf16.mxu0 0
      %697 = vmatpush2.bf16.msra.mxu0 0
      %698 = vmatprep.subr.bf16.mxu0 0
      %699 = vmatpush2.bf16.msra.mxu0 0
      %700 = vmatprep.subr.bf16.mxu0 0
      %701 = vmatpush2.bf16.msra.mxu0 0
      %702 = vmatprep.subr.bf16.mxu0 0
      %703 = vmatpush2.bf16.msra.mxu0 0
      %704 = vmatprep.subr.bf16.mxu0 0
      %705 = vmatpush2.bf16.msra.mxu0 0
      %706 = vmatprep.subr.bf16.mxu0 0
      %707 = vmatpush2.bf16.msra.mxu0 0
      %708 = vmatprep.subr.bf16.mxu0 0
      %709 = vmatpush2.bf16.msra.mxu0 0
      %710 = vmatprep.subr.bf16.mxu0 0
      %711 = vmatpush2.bf16.msra.mxu0 0
      %712 = vmatprep.mubr.bf16.mxu0 0
      %713 = vmatmul.mubr.bf16.gmra.mxu0 %v669
      %v714 = vpop.f32.mrf.mxu0
      %v715 = vadd.f32 0.0, %v714
      %v716 = vpop.f32.mrf.mxu0
      %v717 = vpop.f32.mrf.mxu0
      %v718 = vadd.f32 0.0, %v717
      %v719 = vpop.f32.mrf.mxu0
      %720 = vmatprep.mubr.bf16.mxu0 0
      %721 = vmatmul.mubr.bf16.gmra.mxu0 %v672
      %v722 = vpop.f32.mrf.mxu0
      %v723 = vadd.f32 0.0, %v722
      %v724 = vpop.f32.mrf.mxu0
      %v725 = vpop.f32.mrf.mxu0
      %v726 = vadd.f32 0.0, %v725
      %v727 = vpop.f32.mrf.mxu0
      %728 = vmatprep.mubr.bf16.mxu0 0
      %729 = vmatmul.mubr.bf16.gmra.mxu0 %v675
      %v730 = vpop.f32.mrf.mxu0
      %v731 = vadd.f32 0.0, %v730
      %v732 = vpop.f32.mrf.mxu0
      %v733 = vpop.f32.mrf.mxu0
      %v734 = vadd.f32 0.0, %v733
      %v735 = vpop.f32.mrf.mxu0
      %736 = vmatprep.mubr.bf16.mxu0 0
      %737 = vmatmul.mubr.bf16.gmra.mxu0 %v678
      %v738 = vpop.f32.mrf.mxu0
      %v739 = vadd.f32 0.0, %v738
      %v740 = vpop.f32.mrf.mxu0
      %v741 = vpop.f32.mrf.mxu0
      %v742 = vadd.f32 0.0, %v741
      %v743 = vpop.f32.mrf.mxu0
      %744 = vdwg.mxu0
      %v745 = vmul.f32 %v715, %v715
      %v746 = vmul.f32 %v718, %v718
      %v747 = vmul.f32 %v723, %v723
      %v748 = vmul.f32 %v726, %v726
      %v749 = vmul.f32 %v731, %v731
      %v750 = vmul.f32 %v734, %v734
      %v751 = vmul.f32 %v739, %v739
      %v752 = vmul.f32 %v742, %v742
      %v753 = vsel %vm639, %v745, 0.0
      %v754 = vsel %vm639, %v746, 0.0
      %v755 = vadd.f32 %v753, %v754
      %v756 = vsel %vm639, %v747, 0.0
      %v757 = vadd.f32 %v755, %v756
      %v758 = vsel %vm639, %v748, 0.0
      %v759 = vadd.f32 %v757, %v758
      %v760 = vsel %vm639, %v749, 0.0
      %v761 = vadd.f32 %v759, %v760
      %v762 = vsel %vm639, %v750, 0.0
      %v763 = vadd.f32 %v761, %v762
      %v764 = vsel %vm639, %v751, 0.0
      %v765 = vadd.f32 %v763, %v764
      %v766 = vsel %vm639, %v752, 0.0
      %v767 = vadd.f32 %v765, %v766
      %v768 = vrot.slane %v767, 4
      %v769 = vadd.f32 %v767, %v768
      %v770 = vrot.slane %v769, 2
      %v771 = vadd.f32 %v769, %v770
      %v772 = vrot.slane %v771, 1
      %v773 = vadd.f32 %v771, %v772
      %v774 = vrsqrt.pop %v773
      %v775 = vmul.f32 %v773, %v774
      %vm776 = vcmp.eq.f32.partialorder %v773, inf
      %v777 = vsel %vm776, %v773, %v775
      %vm778 = vcmp.eq.f32.partialorder %v773, 0.0
      %v779 = vand.u32 %v773, 2147483648
      %v780 = vsel %vm778, %v779, %v777
      %v781 = vadd.f32 %v780, 1e-05
      %v782 = vrcp.pop %v781
      %v783 = vmul.f32 %v715, %v782
      %v784 = vmul.f32 %v718, %v782
      %v785 = vmul.f32 %v723, %v782
      %v786 = vmul.f32 %v726, %v782
      %v787 = vmul.f32 %v731, %v782
      %v788 = vmul.f32 %v734, %v782
      %v789 = vmul.f32 %v739, %v782
      %v790 = vmul.f32 %v742, %v782
      %791 = vst.msk [vmem:[%s358] sm:$0xff] %vm639, %v783
      %792 = vst.msk [vmem:[%s358 + $0x8] sm:$0xff] %vm639, %v784
      %793 = vst.msk [vmem:[%s358 + $0x10] sm:$0xff] %vm639, %v785
      %794 = vst.msk [vmem:[%s358 + $0x18] sm:$0xff] %vm639, %v786
      %795 = vst.msk [vmem:[%s358 + $0x20] sm:$0xff] %vm639, %v787
      %796 = vst.msk [vmem:[%s358 + $0x28] sm:$0xff] %vm639, %v788
      %797 = vst.msk [vmem:[%s358 + $0x30] sm:$0xff] %vm639, %v789
      %798 = vst.msk [vmem:[%s358 + $0x38] sm:$0xff] %vm639, %v790
      %v799 = vld [vmem:[%s3] sm:$0xff]
      %v800 = vld [vmem:[%s3 + $0x8] sm:$0xff]
      %v801 = vld [vmem:[%s3 + $0x10] sm:$0xff]
      %v802 = vld [vmem:[%s3 + $0x18] sm:$0xff]
      %v803 = vld [vmem:[%s3 + $0x20] sm:$0xff]
      %v804 = vld [vmem:[%s3 + $0x28] sm:$0xff]
      %v805 = vld [vmem:[%s3 + $0x30] sm:$0xff]
      %v806 = vld [vmem:[%s3 + $0x38] sm:$0xff]
      %v807 = vpack.c.bf16 %v800, %v799
      %v808 = vpack.c.bf16 %v802, %v801
      %v809 = vpack.c.bf16 %v804, %v803
      %v810 = vpack.c.bf16 %v806, %v805
      %v811 = vpack.c.bf16 %v624, %v623
      %v812 = vpack.c.bf16 %v626, %v625
      %v813 = vpack.c.bf16 %v628, %v627
      %v814 = vpack.c.bf16 %v630, %v629
      %v815 = vpack.c.bf16 %v632, %v631
      %v816 = vpack.c.bf16 %v634, %v633
      %v817 = vpack.c.bf16 %v636, %v635
      %v818 = vpack.c.bf16 %v638, %v637
      %819 = vmatprep.subr.bf16.mxu0 0
      %820 = vmatpush1.bf16.msra.mxu0 %v818
      %821 = vmatprep.subr.bf16.mxu0 0
      %822 = vmatpush1.bf16.msra.mxu0 %v817
      %823 = vmatprep.subr.bf16.mxu0 0
      %824 = vmatpush1.bf16.msra.mxu0 %v816
      %825 = vmatprep.subr.bf16.mxu0 0
      %826 = vmatpush1.bf16.msra.mxu0 %v815
      %827 = vmatprep.subr.bf16.mxu0 0
      %828 = vmatpush1.bf16.msra.mxu0 %v814
      %829 = vmatprep.subr.bf16.mxu0 0
      %830 = vmatpush1.bf16.msra.mxu0 %v813
      %831 = vmatprep.subr.bf16.mxu0 0
      %832 = vmatpush1.bf16.msra.mxu0 %v812
      %833 = vmatprep.subr.bf16.mxu0 0
      %834 = vmatpush1.bf16.msra.mxu0 %v811
      %835 = vmatprep.subr.bf16.mxu0 0
      %836 = vmatpush2.bf16.msra.mxu0 0
      %837 = vmatprep.subr.bf16.mxu0 0
      %838 = vmatpush2.bf16.msra.mxu0 0
      %839 = vmatprep.subr.bf16.mxu0 0
      %840 = vmatpush2.bf16.msra.mxu0 0
      %841 = vmatprep.subr.bf16.mxu0 0
      %842 = vmatpush2.bf16.msra.mxu0 0
      %843 = vmatprep.subr.bf16.mxu0 0
      %844 = vmatpush2.bf16.msra.mxu0 0
      %845 = vmatprep.subr.bf16.mxu0 0
      %846 = vmatpush2.bf16.msra.mxu0 0
      %847 = vmatprep.subr.bf16.mxu0 0
      %848 = vmatpush2.bf16.msra.mxu0 0
      %849 = vmatprep.subr.bf16.mxu0 0
      %850 = vmatpush2.bf16.msra.mxu0 0
      %851 = vmatprep.mubr.bf16.mxu0 0
      %852 = vmatmul.mubr.bf16.gmra.mxu0 %v807
      %v853 = vpop.f32.mrf.mxu0
      %v854 = vadd.f32 0.0, %v853
      %v855 = vpop.f32.mrf.mxu0
      %v856 = vpop.f32.mrf.mxu0
      %v857 = vadd.f32 0.0, %v856
      %v858 = vpop.f32.mrf.mxu0
      %859 = vmatprep.mubr.bf16.mxu0 0
      %860 = vmatmul.mubr.bf16.gmra.mxu0 %v808
      %v861 = vpop.f32.mrf.mxu0
      %v862 = vadd.f32 0.0, %v861
      %v863 = vpop.f32.mrf.mxu0
      %v864 = vpop.f32.mrf.mxu0
      %v865 = vadd.f32 0.0, %v864
      %v866 = vpop.f32.mrf.mxu0
      %867 = vmatprep.mubr.bf16.mxu0 0
      %868 = vmatmul.mubr.bf16.gmra.mxu0 %v809
      %v869 = vpop.f32.mrf.mxu0
      %v870 = vadd.f32 0.0, %v869
      %v871 = vpop.f32.mrf.mxu0
      %v872 = vpop.f32.mrf.mxu0
      %v873 = vadd.f32 0.0, %v872
      %v874 = vpop.f32.mrf.mxu0
      %875 = vmatprep.mubr.bf16.mxu0 0
      %876 = vmatmul.mubr.bf16.gmra.mxu0 %v810
      %v877 = vpop.f32.mrf.mxu0
      %v878 = vadd.f32 0.0, %v877
      %v879 = vpop.f32.mrf.mxu0
      %v880 = vpop.f32.mrf.mxu0
      %v881 = vadd.f32 0.0, %v880
      %v882 = vpop.f32.mrf.mxu0
      %883 = vdwg.mxu0
      %v884 = vmul.f32 %v854, %v854
      %v885 = vmul.f32 %v857, %v857
      %v886 = vmul.f32 %v862, %v862
      %v887 = vmul.f32 %v865, %v865
      %v888 = vmul.f32 %v870, %v870
      %v889 = vmul.f32 %v873, %v873
      %v890 = vmul.f32 %v878, %v878
      %v891 = vmul.f32 %v881, %v881
      %v892 = vsel %vm639, %v884, 0.0
      %v893 = vsel %vm639, %v885, 0.0
      %v894 = vadd.f32 %v892, %v893
      %v895 = vsel %vm639, %v886, 0.0
      %v896 = vadd.f32 %v894, %v895
      %v897 = vsel %vm639, %v887, 0.0
      %v898 = vadd.f32 %v896, %v897
      %v899 = vsel %vm639, %v888, 0.0
      %v900 = vadd.f32 %v898, %v899
      %v901 = vsel %vm639, %v889, 0.0
      %v902 = vadd.f32 %v900, %v901
      %v903 = vsel %vm639, %v890, 0.0
      %v904 = vadd.f32 %v902, %v903
      %v905 = vsel %vm639, %v891, 0.0
      %v906 = vadd.f32 %v904, %v905
      %v907 = vrot.slane %v906, 4
      %v908 = vadd.f32 %v906, %v907
      %v909 = vrot.slane %v908, 2
      %v910 = vadd.f32 %v908, %v909
      %v911 = vrot.slane %v910, 1
      %v912 = vadd.f32 %v910, %v911
      %v913 = vrsqrt.pop %v912
      %v914 = vmul.f32 %v912, %v913
      %vm915 = vcmp.eq.f32.partialorder %v912, inf
      %v916 = vsel %vm915, %v912, %v914
      %vm917 = vcmp.eq.f32.partialorder %v912, 0.0
      %v918 = vand.u32 %v912, 2147483648
      %v919 = vsel %vm917, %v918, %v916
      %v920 = vadd.f32 %v919, 1e-05
      %v921 = vrcp.pop %v920
      %v922 = vmul.f32 %v854, %v921
      %v923 = vmul.f32 %v857, %v921
      %v924 = vmul.f32 %v862, %v921
      %v925 = vmul.f32 %v865, %v921
      %v926 = vmul.f32 %v870, %v921
      %v927 = vmul.f32 %v873, %v921
      %v928 = vmul.f32 %v878, %v921
      %v929 = vmul.f32 %v881, %v921
      %930 = vst.msk [vmem:[%s363] sm:$0xff] %vm639, %v922
      %931 = vst.msk [vmem:[%s363 + $0x8] sm:$0xff] %vm639, %v923
      %932 = vst.msk [vmem:[%s363 + $0x10] sm:$0xff] %vm639, %v924
      %933 = vst.msk [vmem:[%s363 + $0x18] sm:$0xff] %vm639, %v925
      %934 = vst.msk [vmem:[%s363 + $0x20] sm:$0xff] %vm639, %v926
      %935 = vst.msk [vmem:[%s363 + $0x28] sm:$0xff] %vm639, %v927
      %936 = vst.msk [vmem:[%s363 + $0x30] sm:$0xff] %vm639, %v928
      %937 = vst.msk [vmem:[%s363 + $0x38] sm:$0xff] %vm639, %v929
      %v938 = vld [vmem:[%s4] sm:$0xff]
      %v939 = vpack.c.bf16 %v938, %v938
      %940 = vmatprep.subr.bf16.mxu0 0
      %941 = vmatpush1.bf16.msra.mxu0 %v818
      %942 = vmatprep.subr.bf16.mxu0 0
      %943 = vmatpush1.bf16.msra.mxu0 %v817
      %944 = vmatprep.subr.bf16.mxu0 0
      %945 = vmatpush1.bf16.msra.mxu0 %v816
      %946 = vmatprep.subr.bf16.mxu0 0
      %947 = vmatpush1.bf16.msra.mxu0 %v815
      %948 = vmatprep.subr.bf16.mxu0 0
      %949 = vmatpush1.bf16.msra.mxu0 %v814
      %950 = vmatprep.subr.bf16.mxu0 0
      %951 = vmatpush1.bf16.msra.mxu0 %v813
      %952 = vmatprep.subr.bf16.mxu0 0
      %953 = vmatpush1.bf16.msra.mxu0 %v812
      %954 = vmatprep.subr.bf16.mxu0 0
      %955 = vmatpush1.bf16.msra.mxu0 %v811
      %956 = vmatprep.subr.bf16.mxu0 0
      %957 = vmatpush2.bf16.msra.mxu0 0
      %958 = vmatprep.subr.bf16.mxu0 0
      %959 = vmatpush2.bf16.msra.mxu0 0
      %960 = vmatprep.subr.bf16.mxu0 0
      %961 = vmatpush2.bf16.msra.mxu0 0
      %962 = vmatprep.subr.bf16.mxu0 0
      %963 = vmatpush2.bf16.msra.mxu0 0
      %964 = vmatprep.subr.bf16.mxu0 0
      %965 = vmatpush2.bf16.msra.mxu0 0
      %966 = vmatprep.subr.bf16.mxu0 0
      %967 = vmatpush2.bf16.msra.mxu0 0
      %968 = vmatprep.subr.bf16.mxu0 0
      %969 = vmatpush2.bf16.msra.mxu0 0
      %970 = vmatprep.subr.bf16.mxu0 0
      %971 = vmatpush2.bf16.msra.mxu0 0
      %972 = vmatprep.mubr.bf16.mxu0 0
      %973 = vmatmul.mubr.bf16.gmra.mxu0 %v939
      %v974 = vpop.f32.mrf.mxu0
      %v975 = vadd.f32 0.0, %v974
      %v976 = vpop.f32.mrf.mxu0
      %v977 = vpop.f32.mrf.mxu0
      %v978 = vpop.f32.mrf.mxu0
      %979 = vdwg.mxu0
      %980 = vst.msk [vmem:[%s367] sm:$0xff] %vm639, %v975
      %p981 = scmp.lt.s32.totalorder %s21, 1
      %s982 = scalar_select %p981, %s21, 1
      %s983 = smul.addr %s982, 16
      %s984 = smul.addr %s983, 8
      %s985 = scalar_lea.vmem %s6, %s984
      %p986 = scmp.lt.s32.totalorder %s21, 1
      %s987 = scalar_select %p986, %s21, 1
      %s988 = smul.addr %s987, 8
      %s989 = smul.addr %s988, 8
      %s990 = scalar_lea.vmem %s7, %s989
      %p991 = scmp.lt.s32.totalorder %s21, 1
      %s992 = scalar_select %p991, %s21, 1
      %s993 = smul.addr %s992, 8
      %s994 = smul.addr %s993, 8
      %s995 = scalar_lea.vmem %s8, %s994
      %p996 = scmp.lt.s32.totalorder %s21, 1
      %s997 = scalar_select %p996, %s21, 1
      %s998 = smul.addr %s997, 8
      %s999 = scalar_lea.vmem %s9, %s998
      // Predicated region
      $region45: #{cam_forward.8} parent=43 // pred_check
        %p1000 = pneg %p170
      $region46: #{cam_forward.8} parent=43 // pred_check_branch
        %1002 = sbr.rel (%p1000) target = $region48
      $region47: #{cam_forward.8} parent=43 // pred_region
        _
      $region48: #{cam_forward.8} parent=43 // pred_fallthru
        _
      // Predicated region
      $region49: #{cam_forward.8} parent=43 // pred_check
        %p1003 = pneg %p196
      $region50: #{cam_forward.8} parent=43 // pred_check_branch
        %1005 = sbr.rel (%p1003) target = $region52
      $region51: #{cam_forward.8} parent=43 // pred_region
        _
      $region52: #{cam_forward.8} parent=43 // pred_fallthru
        _
      // Predicated region
      $region53: #{cam_forward.8} parent=43 // pred_check
        %p1006 = pneg %p222
      $region54: #{cam_forward.8} parent=43 // pred_check_branch
        %1008 = sbr.rel (%p1006) target = $region56
      $region55: #{cam_forward.8} parent=43 // pred_region
        _
      $region56: #{cam_forward.8} parent=43 // pred_fallthru
        _
      // Predicated region
      $region57: #{cam_forward.8} parent=43 // pred_check
        %p1009 = pneg %p248
      $region58: #{cam_forward.8} parent=43 // pred_check_branch
        %1011 = sbr.rel (%p1009) target = $region60
      $region59: #{cam_forward.8} parent=43 // pred_region
        _
      $region60: #{cam_forward.8} parent=43 // pred_fallthru
        _
    $region44: #{cam_forward.8} parent=5 // pred_fallthru
      _
    %p1012 = scmp.le.s32.totalorder 2, %s16
    // Predicated region
    $region61: #{cam_forward.8} parent=5 // pred_check
      %p1013 = pneg %p1012
    $region62: #{cam_forward.8} parent=5 // pred_check_branch
      %1015 = sbr.rel (%p1013) target = $region64
    $region63: #{cam_forward.8} parent=5 // pred_region
      %s1016 = ssub.s32 %s16, 2
      // Predicated region
      $region65: #{cam_forward.8} parent=63 // pred_check
        %p1017 = pneg %p176
      $region66: #{cam_forward.8} parent=63 // pred_check_branch
        %1019 = sbr.rel (%p1017) target = $region68
      $region67: #{cam_forward.8} parent=63 // pred_region
        %p1020 = scmp.lt.s32.totalorder %s22, 1
        %s1021 = scalar_select %p1020, %s22, 1
        %s1022 = smul.addr %s1021, 16
        %s1023 = smul.addr %s1022, 8
        %s1024 = scalar_lea.vmem %s6, %s1023
      $region68: #{cam_forward.8} parent=63 // pred_fallthru
        _
      // Predicated region
      $region69: #{cam_forward.8} parent=63 // pred_check
        %p1025 = pneg %p202
      $region70: #{cam_forward.8} parent=63 // pred_check_branch
        %1027 = sbr.rel (%p1025) target = $region72
      $region71: #{cam_forward.8} parent=63 // pred_region
        %p1028 = scmp.lt.s32.totalorder %s22, 1
        %s1029 = scalar_select %p1028, %s22, 1
        %s1030 = smul.addr %s1029, 8
        %s1031 = smul.addr %s1030, 8
        %s1032 = scalar_lea.vmem %s7, %s1031
      $region72: #{cam_forward.8} parent=63 // pred_fallthru
        _
      // Predicated region
      $region73: #{cam_forward.8} parent=63 // pred_check
        %p1033 = pneg %p228
      $region74: #{cam_forward.8} parent=63 // pred_check_branch
        %1035 = sbr.rel (%p1033) target = $region76
      $region75: #{cam_forward.8} parent=63 // pred_region
        %p1036 = scmp.lt.s32.totalorder %s22, 1
        %s1037 = scalar_select %p1036, %s22, 1
        %s1038 = smul.addr %s1037, 8
        %s1039 = smul.addr %s1038, 8
        %s1040 = scalar_lea.vmem %s8, %s1039
      $region76: #{cam_forward.8} parent=63 // pred_fallthru
        _
      // Predicated region
      $region77: #{cam_forward.8} parent=63 // pred_check
        %p1041 = pneg %p254
      $region78: #{cam_forward.8} parent=63 // pred_check_branch
        %1043 = sbr.rel (%p1041) target = $region80
      $region79: #{cam_forward.8} parent=63 // pred_region
        %p1044 = scmp.lt.s32.totalorder %s22, 1
        %s1045 = scalar_select %p1044, %s22, 1
        %s1046 = smul.addr %s1045, 8
        %s1047 = scalar_lea.vmem %s9, %s1046
      $region80: #{cam_forward.8} parent=63 // pred_fallthru
        _
    $region64: #{cam_forward.8} parent=5 // pred_fallthru
      _
  $region6: #{cam_forward.8} parent=0 // loop_footer
    %s20 = sadd.s32 1, %s16
  $region7: #{cam_forward.8} parent=0 // loop_footer_branch
    %15 = sbr.rel target = $region3
  $region8: #{cam_forward.8} parent=0 // loop_exit
    _

// kernel: cam_forward.10
$region0: #{cam_forward.10}
  #allocation0 [shape = 'u32[]', space=smem, size = 0x4, offset = 0x4, fixed_abs, tag = 'smem constant byte address 0x4 - core index']
  #allocation1 [shape = 'u32[144,128]{1,0:T(1,128)}', space=vmem, size = 0x12000, scoped, tag = 'internal scratch']
  %s0 = inlined_call_operand.vmem [shape: f32[128,131], index: 0, kind: input, shape index: {}]
  %s1 = inlined_call_operand.vmem [shape: f32[1,8,16], index: 1, kind: input, shape index: {}]
  %s2 = inlined_call_operand.vmem [shape: f32[1,131,16], index: 2, kind: input, shape index: {}]
  %s3 = inlined_call_operand.vmem [shape: f32[1,8,16], index: 3, kind: output, shape index: {}]
  %s4 = sld [smem:[#allocation0]]
  $region22: #{cam_forward.10} parent=0
    _
  %s6 = ssub.s32 1, %s4
  %s7 = scalar_select 0, %s6, %s4
  // Predicated region
  $region2: #{cam_forward.10} parent=0 // pred_check
    _
  $region3: #{cam_forward.10} parent=0 // pred_check_branch
    %9 = sbr.rel (0) target = $region5
  $region4: #{cam_forward.10} parent=0 // pred_region
    _
  $region5: #{cam_forward.10} parent=0 // pred_fallthru
    _
  // Predicated region
  $region6: #{cam_forward.10} parent=0 // pred_check
    _
  $region7: #{cam_forward.10} parent=0 // pred_check_branch
    %11 = sbr.rel (0) target = $region9
  $region8: #{cam_forward.10} parent=0 // pred_region
    _
  $region9: #{cam_forward.10} parent=0 // pred_fallthru
    _
  // Predicated region
  $region10: #{cam_forward.10} parent=0 // pred_check
    _
  $region11: #{cam_forward.10} parent=0 // pred_check_branch
    %13 = sbr.rel (0) target = $region13
  $region12: #{cam_forward.10} parent=0 // pred_region
    _
  $region13: #{cam_forward.10} parent=0 // pred_fallthru
    _
  %v15 = vld [vmem:[%s0] sm:$0xff]
  %v16 = vld [vmem:[%s0 + $0x8] sm:$0xff]
  %v17 = vld [vmem:[%s0 + $0x10] sm:$0xff]
  %v18 = vld [vmem:[%s0 + $0x18] sm:$0xff]
  %v19 = vld [vmem:[%s0 + $0x20] sm:$0xff]
  %v20 = vld [vmem:[%s0 + $0x28] sm:$0xff]
  %v21 = vld [vmem:[%s0 + $0x30] sm:$0xff]
  %v22 = vld [vmem:[%s0 + $0x38] sm:$0xff]
  %v23 = vld [vmem:[%s0 + $0x40] sm:$0xff]
  %v24 = vld [vmem:[%s0 + $0x48] sm:$0xff]
  %v25 = vld [vmem:[%s0 + $0x50] sm:$0xff]
  %v26 = vld [vmem:[%s0 + $0x58] sm:$0xff]
  %v27 = vld [vmem:[%s0 + $0x60] sm:$0xff]
  %v28 = vld [vmem:[%s0 + $0x68] sm:$0xff]
  %v29 = vld [vmem:[%s0 + $0x70] sm:$0xff]
  %v30 = vld [vmem:[%s0 + $0x78] sm:$0xff]
  %v31 = vld [vmem:[%s0 + $0x80] sm:$0xff]
  %v32 = vld [vmem:[%s0 + $0x88] sm:$0xff]
  %v33 = vld [vmem:[%s0 + $0x90] sm:$0xff]
  %v34 = vld [vmem:[%s0 + $0x98] sm:$0xff]
  %v35 = vld [vmem:[%s0 + $0xa0] sm:$0xff]
  %v36 = vld [vmem:[%s0 + $0xa8] sm:$0xff]
  %v37 = vld [vmem:[%s0 + $0xb0] sm:$0xff]
  %v38 = vld [vmem:[%s0 + $0xb8] sm:$0xff]
  %v39 = vld [vmem:[%s0 + $0xc0] sm:$0xff]
  %v40 = vld [vmem:[%s0 + $0xc8] sm:$0xff]
  %v41 = vld [vmem:[%s0 + $0xd0] sm:$0xff]
  %v42 = vld [vmem:[%s0 + $0xd8] sm:$0xff]
  %v43 = vld [vmem:[%s0 + $0xe0] sm:$0xff]
  %v44 = vld [vmem:[%s0 + $0xe8] sm:$0xff]
  %v45 = vld [vmem:[%s0 + $0xf0] sm:$0xff]
  %v46 = vld [vmem:[%s0 + $0xf8] sm:$0xff]
  %v47 = vld [vmem:[%s2] sm:$0xff]
  %v48 = vld [vmem:[%s2 + $0x8] sm:$0xff]
  %v49 = vld [vmem:[%s2 + $0x10] sm:$0xff]
  %v50 = vld [vmem:[%s2 + $0x18] sm:$0xff]
  %v51 = vld [vmem:[%s2 + $0x20] sm:$0xff]
  %v52 = vld [vmem:[%s2 + $0x28] sm:$0xff]
  %v53 = vld [vmem:[%s2 + $0x30] sm:$0xff]
  %v54 = vld [vmem:[%s2 + $0x38] sm:$0xff]
  %v55 = vld [vmem:[%s2 + $0x40] sm:$0xff]
  %v56 = vld [vmem:[%s2 + $0x48] sm:$0xff]
  %v57 = vld [vmem:[%s2 + $0x50] sm:$0xff]
  %v58 = vld [vmem:[%s2 + $0x58] sm:$0xff]
  %v59 = vld [vmem:[%s2 + $0x60] sm:$0xff]
  %v60 = vld [vmem:[%s2 + $0x68] sm:$0xff]
  %v61 = vld [vmem:[%s2 + $0x70] sm:$0xff]
  %v62 = vld [vmem:[%s2 + $0x78] sm:$0xff]
  %v63 = vld [vmem:[%s2 + $0x80] sm:$0x7]
  %v64 = vpack.c.bf16 %v17, %v15
  %v65 = vpack.c.bf16 %v18, %v16
  %v66 = vpack.c.bf16 %v21, %v19
  %v67 = vpack.c.bf16 %v22, %v20
  %v68 = vpack.c.bf16 %v25, %v23
  %v69 = vpack.c.bf16 %v26, %v24
  %v70 = vpack.c.bf16 %v29, %v27
  %v71 = vpack.c.bf16 %v30, %v28
  %v72 = vpack.c.bf16 %v33, %v31
  %v73 = vpack.c.bf16 %v34, %v32
  %v74 = vpack.c.bf16 %v37, %v35
  %v75 = vpack.c.bf16 %v38, %v36
  %v76 = vpack.c.bf16 %v41, %v39
  %v77 = vpack.c.bf16 %v42, %v40
  %v78 = vpack.c.bf16 %v45, %v43
  %v79 = vpack.c.bf16 %v46, %v44
  %v80 = vpack.c.bf16 %v48, %v47
  %v81 = vpack.c.bf16 %v50, %v49
  %v82 = vpack.c.bf16 %v52, %v51
  %v83 = vpack.c.bf16 %v54, %v53
  %v84 = vpack.c.bf16 %v56, %v55
  %v85 = vpack.c.bf16 %v58, %v57
  %v86 = vpack.c.bf16 %v60, %v59
  %v87 = vpack.c.bf16 %v62, %v61
  %v88 = vpack.c.bf16 %v63, %v63
  %vm89 = vcmask 23552
  %v91 = vsel %vm89, %v65, 0
  %v94 = vsel %vm89, %v67, 0
  %v97 = vsel %vm89, %v69, 0
  %v100 = vsel %vm89, %v71, 0
  %v103 = vsel %vm89, %v73, 0
  %v106 = vsel %vm89, %v75, 0
  %v109 = vsel %vm89, %v77, 0
  %v112 = vsel %vm89, %v79, 0
  %vm114 = vcmask 1040384
  %vm115 = vcmask 1041408
  %v116 = vsel %vm114, 4294967295, 65535
  %v117 = vsel %vm115, %v116, 0
  %v119 = vand.u32 %v88, %v117
  %121 = vmatprep.subr.bf16.mxu0 0
  %122 = vmatpush1.bf16.msra.mxu0 %v87
  %123 = vmatprep.subr.bf16.mxu0 0
  %124 = vmatpush1.bf16.msra.mxu0 %v86
  %125 = vmatprep.subr.bf16.mxu0 0
  %126 = vmatpush1.bf16.msra.mxu0 %v85
  %127 = vmatprep.subr.bf16.mxu0 0
  %128 = vmatpush1.bf16.msra.mxu0 %v84
  %129 = vmatprep.subr.bf16.mxu0 0
  %130 = vmatpush1.bf16.msra.mxu0 %v83
  %131 = vmatprep.subr.bf16.mxu0 0
  %132 = vmatpush1.bf16.msra.mxu0 %v82
  %133 = vmatprep.subr.bf16.mxu0 0
  %134 = vmatpush1.bf16.msra.mxu0 %v81
  %135 = vmatprep.subr.bf16.mxu0 0
  %136 = vmatpush1.bf16.msra.mxu0 %v80
  %137 = vmatprep.subr.bf16.mxu0 0
  %138 = vmatpush2.bf16.msra.mxu0 0
  %139 = vmatprep.subr.bf16.mxu0 0
  %140 = vmatpush2.bf16.msra.mxu0 0
  %141 = vmatprep.subr.bf16.mxu0 0
  %142 = vmatpush2.bf16.msra.mxu0 0
  %143 = vmatprep.subr.bf16.mxu0 0
  %144 = vmatpush2.bf16.msra.mxu0 0
  %145 = vmatprep.subr.bf16.mxu0 0
  %146 = vmatpush2.bf16.msra.mxu0 0
  %147 = vmatprep.subr.bf16.mxu0 0
  %148 = vmatpush2.bf16.msra.mxu0 0
  %149 = vmatprep.subr.bf16.mxu0 0
  %150 = vmatpush2.bf16.msra.mxu0 0
  %151 = vmatprep.subr.bf16.mxu0 0
  %152 = vmatpush2.bf16.msra.mxu0 %v119
  %153 = vmatprep.mubr.bf16.mxu0 %v91
  %154 = vmatmul.mubr.bf16.gmra.mxu0 %v64
  %v155 = vpop.f32.mrf.mxu0
  %v156 = vadd.f32 0.0, %v155
  %v157 = vpop.f32.mrf.mxu0
  %v158 = vpop.f32.mrf.mxu0
  %v159 = vadd.f32 0.0, %v158
  %v160 = vpop.f32.mrf.mxu0
  %161 = vmatprep.mubr.bf16.mxu0 %v94
  %162 = vmatmul.mubr.bf16.gmra.mxu0 %v66
  %v163 = vpop.f32.mrf.mxu0
  %v164 = vadd.f32 0.0, %v163
  %v165 = vpop.f32.mrf.mxu0
  %v166 = vpop.f32.mrf.mxu0
  %v167 = vadd.f32 0.0, %v166
  %v168 = vpop.f32.mrf.mxu0
  %169 = vmatprep.mubr.bf16.mxu0 %v97
  %170 = vmatmul.mubr.bf16.gmra.mxu0 %v68
  %v171 = vpop.f32.mrf.mxu0
  %v172 = vadd.f32 0.0, %v171
  %v173 = vpop.f32.mrf.mxu0
  %v174 = vpop.f32.mrf.mxu0
  %v175 = vadd.f32 0.0, %v174
  %v176 = vpop.f32.mrf.mxu0
  %177 = vmatprep.mubr.bf16.mxu0 %v100
  %178 = vmatmul.mubr.bf16.gmra.mxu0 %v70
  %v179 = vpop.f32.mrf.mxu0
  %v180 = vadd.f32 0.0, %v179
  %v181 = vpop.f32.mrf.mxu0
  %v182 = vpop.f32.mrf.mxu0
  %v183 = vadd.f32 0.0, %v182
  %v184 = vpop.f32.mrf.mxu0
  %185 = vmatprep.mubr.bf16.mxu0 %v103
  %186 = vmatmul.mubr.bf16.gmra.mxu0 %v72
  %v187 = vpop.f32.mrf.mxu0
  %v188 = vadd.f32 0.0, %v187
  %v189 = vpop.f32.mrf.mxu0
  %v190 = vpop.f32.mrf.mxu0
  %v191 = vadd.f32 0.0, %v190
  %v192 = vpop.f32.mrf.mxu0
  %193 = vmatprep.mubr.bf16.mxu0 %v106
  %194 = vmatmul.mubr.bf16.gmra.mxu0 %v74
  %v195 = vpop.f32.mrf.mxu0
  %v196 = vadd.f32 0.0, %v195
  %v197 = vpop.f32.mrf.mxu0
  %v198 = vpop.f32.mrf.mxu0
  %v199 = vadd.f32 0.0, %v198
  %v200 = vpop.f32.mrf.mxu0
  %201 = vmatprep.mubr.bf16.mxu0 %v109
  %202 = vmatmul.mubr.bf16.gmra.mxu0 %v76
  %v203 = vpop.f32.mrf.mxu0
  %v204 = vadd.f32 0.0, %v203
  %v205 = vpop.f32.mrf.mxu0
  %v206 = vpop.f32.mrf.mxu0
  %v207 = vadd.f32 0.0, %v206
  %v208 = vpop.f32.mrf.mxu0
  %209 = vmatprep.mubr.bf16.mxu0 %v112
  %210 = vmatmul.mubr.bf16.gmra.mxu0 %v78
  %v211 = vpop.f32.mrf.mxu0
  %v212 = vadd.f32 0.0, %v211
  %v213 = vpop.f32.mrf.mxu0
  %v214 = vpop.f32.mrf.mxu0
  %v215 = vadd.f32 0.0, %v214
  %v216 = vpop.f32.mrf.mxu0
  %217 = vdwg.mxu0
  %v218 = vmul.f32 %v156, %v156
  %v219 = vmul.f32 %v159, %v159
  %v220 = vmul.f32 %v164, %v164
  %v221 = vmul.f32 %v167, %v167
  %v222 = vmul.f32 %v172, %v172
  %v223 = vmul.f32 %v175, %v175
  %v224 = vmul.f32 %v180, %v180
  %v225 = vmul.f32 %v183, %v183
  %v226 = vmul.f32 %v188, %v188
  %v227 = vmul.f32 %v191, %v191
  %v228 = vmul.f32 %v196, %v196
  %v229 = vmul.f32 %v199, %v199
  %v230 = vmul.f32 %v204, %v204
  %v231 = vmul.f32 %v207, %v207
  %v232 = vmul.f32 %v212, %v212
  %v233 = vmul.f32 %v215, %v215
  %vm234 = vcmask 130048
  %v235 = vsel %vm234, %v218, 0.0
  %v236 = vsel %vm234, %v219, 0.0
  %v237 = vadd.f32 %v235, %v236
  %v238 = vsel %vm234, %v220, 0.0
  %v239 = vadd.f32 %v237, %v238
  %v240 = vsel %vm234, %v221, 0.0
  %v241 = vadd.f32 %v239, %v240
  %v242 = vsel %vm234, %v222, 0.0
  %v243 = vadd.f32 %v241, %v242
  %v244 = vsel %vm234, %v223, 0.0
  %v245 = vadd.f32 %v243, %v244
  %v246 = vsel %vm234, %v224, 0.0
  %v247 = vadd.f32 %v245, %v246
  %v248 = vsel %vm234, %v225, 0.0
  %v249 = vadd.f32 %v247, %v248
  %v250 = vsel %vm234, %v226, 0.0
  %v251 = vadd.f32 %v249, %v250
  %v252 = vsel %vm234, %v227, 0.0
  %v253 = vadd.f32 %v251, %v252
  %v254 = vsel %vm234, %v228, 0.0
  %v255 = vadd.f32 %v253, %v254
  %v256 = vsel %vm234, %v229, 0.0
  %v257 = vadd.f32 %v255, %v256
  %v258 = vsel %vm234, %v230, 0.0
  %v259 = vadd.f32 %v257, %v258
  %v260 = vsel %vm234, %v231, 0.0
  %v261 = vadd.f32 %v259, %v260
  %v262 = vsel %vm234, %v232, 0.0
  %v263 = vadd.f32 %v261, %v262
  %v264 = vsel %vm234, %v233, 0.0
  %v265 = vadd.f32 %v263, %v264
  %v266 = vrot.slane %v265, 4
  %v267 = vadd.f32 %v265, %v266
  %v268 = vrot.slane %v267, 2
  %v269 = vadd.f32 %v267, %v268
  %v270 = vrot.slane %v269, 1
  %v271 = vadd.f32 %v269, %v270
  %v272 = vrsqrt.pop %v271
  %v273 = vmul.f32 %v271, %v272
  %vm274 = vcmp.eq.f32.partialorder %v271, inf
  %v275 = vsel %vm274, %v271, %v273
  %vm276 = vcmp.eq.f32.partialorder %v271, 0.0
  %v277 = vand.u32 %v271, 2147483648
  %v278 = vsel %vm276, %v277, %v275
  %v279 = vadd.f32 %v278, 1e-05
  %v280 = vrcp.pop %v279
  %v281 = vmul.f32 %v156, %v280
  %v282 = vmul.f32 %v159, %v280
  %v283 = vmul.f32 %v164, %v280
  %v284 = vmul.f32 %v167, %v280
  %v285 = vmul.f32 %v172, %v280
  %v286 = vmul.f32 %v175, %v280
  %v287 = vmul.f32 %v180, %v280
  %v288 = vmul.f32 %v183, %v280
  %v289 = vmul.f32 %v188, %v280
  %v290 = vmul.f32 %v191, %v280
  %v291 = vmul.f32 %v196, %v280
  %v292 = vmul.f32 %v199, %v280
  %v293 = vmul.f32 %v204, %v280
  %v294 = vmul.f32 %v207, %v280
  %v295 = vmul.f32 %v212, %v280
  %v296 = vmul.f32 %v215, %v280
  %v297 = vpack.c.bf16 %v282, %v281
  %v298 = vpack.c.bf16 %v284, %v283
  %v299 = vpack.c.bf16 %v286, %v285
  %v300 = vpack.c.bf16 %v288, %v287
  %v301 = vpack.c.bf16 %v290, %v289
  %v302 = vpack.c.bf16 %v292, %v291
  %v303 = vpack.c.bf16 %v294, %v293
  %v304 = vpack.c.bf16 %v296, %v295
  %305 = vxpose.xlu0.c.b16.start [1/8] %v297, 128
  %306 = vxpose.xlu0.c.b16.cont [2/8] %v298, 128
  %307 = vxpose.xlu0.c.b16.cont [3/8] %v299, 128
  %308 = vxpose.xlu0.c.b16.cont [4/8] %v300, 128
  %309 = vxpose.xlu0.c.b16.cont [5/8] %v301, 128
  %310 = vxpose.xlu0.c.b16.cont [6/8] %v302, 128
  %311 = vxpose.xlu0.c.b16.cont [7/8] %v303, 128
  %312 = vxpose.xlu0.c.b16.end [8/8] %v304, 128
  %v313 = vpop.trf.xlu0
  %v314 = vpop.trf.xlu0
  %v315 = vpop.trf.xlu0
  %v316 = vpop.trf.xlu0
  %v317 = vpop.trf.xlu0
  %v318 = vpop.trf.xlu0
  %v319 = vpop.trf.xlu0
  %v320 = vpop.trf.xlu0
  %321 = vmatprep.subr.bf16.mxu0 0
  %322 = vmatpush1.bf16.msra.mxu0 %v304
  %323 = vmatprep.subr.bf16.mxu0 0
  %324 = vmatpush1.bf16.msra.mxu0 %v303
  %325 = vmatprep.subr.bf16.mxu0 0
  %326 = vmatpush1.bf16.msra.mxu0 %v302
  %327 = vmatprep.subr.bf16.mxu0 0
  %328 = vmatpush1.bf16.msra.mxu0 %v301
  %329 = vmatprep.subr.bf16.mxu0 0
  %330 = vmatpush1.bf16.msra.mxu0 %v300
  %331 = vmatprep.subr.bf16.mxu0 0
  %332 = vmatpush1.bf16.msra.mxu0 %v299
  %333 = vmatprep.subr.bf16.mxu0 0
  %334 = vmatpush1.bf16.msra.mxu0 %v298
  %335 = vmatprep.subr.bf16.mxu0 0
  %336 = vmatpush1.bf16.msra.mxu0 %v297
  %337 = vmatprep.subr.bf16.mxu0 0
  %338 = vmatpush2.bf16.msra.mxu0 0
  %339 = vmatprep.subr.bf16.mxu0 0
  %340 = vmatpush2.bf16.msra.mxu0 0
  %341 = vmatprep.subr.bf16.mxu0 0
  %342 = vmatpush2.bf16.msra.mxu0 0
  %343 = vmatprep.subr.bf16.mxu0 0
  %344 = vmatpush2.bf16.msra.mxu0 0
  %345 = vmatprep.subr.bf16.mxu0 0
  %346 = vmatpush2.bf16.msra.mxu0 0
  %347 = vmatprep.subr.bf16.mxu0 0
  %348 = vmatpush2.bf16.msra.mxu0 0
  %349 = vmatprep.subr.bf16.mxu0 0
  %350 = vmatpush2.bf16.msra.mxu0 0
  %351 = vmatprep.subr.bf16.mxu0 0
  %352 = vmatpush2.bf16.msra.mxu0 0
  %353 = vmatprep.mubr.bf16.mxu0 0
  %354 = vmatmul.mubr.bf16.gmra.mxu0 %v313
  %v355 = vpop.f32.mrf.mxu0
  %v356 = vadd.f32 0.0, %v355
  %v357 = vpop.f32.mrf.mxu0
  %v358 = vpop.f32.mrf.mxu0
  %v359 = vadd.f32 0.0, %v358
  %v360 = vpop.f32.mrf.mxu0
  %361 = vdwg.mxu0
  %v362 = vmax.f32 %v356, 0.0
  %v363 = vmax.f32 %v359, 0.0
  %v365 = vsel %vm234, 1.0, 0
  %367 = vmatprep.subr.mxu0 0.0
  %368 = vmatpush1.msra.mxu0 0.0
  %369 = vmatprep.subr.mxu0 0.0
  %370 = vmatpush1.msra.mxu0 0.0
  %371 = vmatprep.subr.mxu0 0.0
  %372 = vmatpush1.msra.mxu0 0.0
  %373 = vmatprep.subr.mxu0 0.0
  %374 = vmatpush1.msra.mxu0 0.0
  %375 = vmatprep.subr.mxu0 0.0
  %376 = vmatpush1.msra.mxu0 0.0
  %377 = vmatprep.subr.mxu0 0.0
  %378 = vmatpush1.msra.mxu0 0.0
  %379 = vmatprep.subr.mxu0 0.0
  %380 = vmatpush1.msra.mxu0 0.0
  %381 = vmatprep.subr.mxu0 0.0
  %382 = vmatpush1.msra.mxu0 0.0
  %383 = vmatprep.subr.mxu0 0.0
  %384 = vmatpush1.msra.mxu0 0.0
  %385 = vmatprep.subr.mxu0 0.0
  %386 = vmatpush1.msra.mxu0 0.0
  %387 = vmatprep.subr.mxu0 0.0
  %388 = vmatpush1.msra.mxu0 0.0
  %389 = vmatprep.subr.mxu0 0.0
  %390 = vmatpush1.msra.mxu0 0.0
  %391 = vmatprep.subr.mxu0 0.0
  %392 = vmatpush1.msra.mxu0 0.0
  %393 = vmatprep.subr.mxu0 0.0
  %394 = vmatpush1.msra.mxu0 0.0
  %395 = vmatprep.subr.mxu0 0.0
  %396 = vmatpush1.msra.mxu0 %v363
  %397 = vmatprep.subr.mxu0 0.0
  %398 = vmatpush1.msra.mxu0 %v362
  %399 = vmatprep.subr.mxu0 0.0
  %400 = vmatpush2.msra.mxu0 0.0
  %401 = vmatprep.subr.mxu0 0.0
  %402 = vmatpush2.msra.mxu0 0.0
  %403 = vmatprep.subr.mxu0 0.0
  %404 = vmatpush2.msra.mxu0 0.0
  %405 = vmatprep.subr.mxu0 0.0
  %406 = vmatpush2.msra.mxu0 0.0
  %407 = vmatprep.subr.mxu0 0.0
  %408 = vmatpush2.msra.mxu0 0.0
  %409 = vmatprep.subr.mxu0 0.0
  %410 = vmatpush2.msra.mxu0 0.0
  %411 = vmatprep.subr.mxu0 0.0
  %412 = vmatpush2.msra.mxu0 0.0
  %413 = vmatprep.subr.mxu0 0.0
  %414 = vmatpush2.msra.mxu0 0.0
  %415 = vmatprep.subr.mxu0 0.0
  %416 = vmatpush2.msra.mxu0 0.0
  %417 = vmatprep.subr.mxu0 0.0
  %418 = vmatpush2.msra.mxu0 0.0
  %419 = vmatprep.subr.mxu0 0.0
  %420 = vmatpush2.msra.mxu0 0.0
  %421 = vmatprep.subr.mxu0 0.0
  %422 = vmatpush2.msra.mxu0 0.0
  %423 = vmatprep.subr.mxu0 0.0
  %424 = vmatpush2.msra.mxu0 0.0
  %425 = vmatprep.subr.mxu0 0.0
  %426 = vmatpush2.msra.mxu0 0.0
  %427 = vmatprep.subr.mxu0 0.0
  %428 = vmatpush2.msra.mxu0 0.0
  %429 = vmatprep.subr.mxu0 0.0
  %430 = vmatpush2.msra.mxu0 0.0
  %431 = vmatprep.mubr.f32.mxu0 0.0
  %432 = vmatmul.mubr.f32.gmra.mxu0 %v365
  %v433 = vpop.f32.mrf.mxu0
  %v434 = vadd.f32 1e-05, %v433
  %v435 = vpop.f32.mrf.mxu0
  %436 = vdwg.mxu0
  %v437 = vrcp.pop %v434
  %v438 = vlaneseq
  %v439 = vshrl.u32 %v438, 7
  %v440 = vsub.s32 0, %v439
  %v441 = vrot.slane %v437, %v440
  %v442 = vmul.f32 %v362, %v441
  %v443 = vmul.f32 %v363, %v441
  %v444 = vpack.c.bf16 %v443, %v442
  %v445 = vld [vmem:[%s1] sm:$0xff]
  %v446 = vpack.c.bf16 %v445, %v445
  %v448 = vsel %vm234, %v446, 0
  %450 = vmatprep.subr.bf16.mxu0 0
  %451 = vmatpush1.bf16.msra.mxu0 0
  %452 = vmatprep.subr.bf16.mxu0 0
  %453 = vmatpush1.bf16.msra.mxu0 0
  %454 = vmatprep.subr.bf16.mxu0 0
  %455 = vmatpush1.bf16.msra.mxu0 0
  %456 = vmatprep.subr.bf16.mxu0 0
  %457 = vmatpush1.bf16.msra.mxu0 0
  %458 = vmatprep.subr.bf16.mxu0 0
  %459 = vmatpush1.bf16.msra.mxu0 0
  %460 = vmatprep.subr.bf16.mxu0 0
  %461 = vmatpush1.bf16.msra.mxu0 0
  %462 = vmatprep.subr.bf16.mxu0 0
  %463 = vmatpush1.bf16.msra.mxu0 0
  %464 = vmatprep.subr.bf16.mxu0 0
  %465 = vmatpush1.bf16.msra.mxu0 %v444
  %466 = vmatprep.subr.bf16.mxu0 0
  %467 = vmatpush2.bf16.msra.mxu0 0
  %468 = vmatprep.subr.bf16.mxu0 0
  %469 = vmatpush2.bf16.msra.mxu0 0
  %470 = vmatprep.subr.bf16.mxu0 0
  %471 = vmatpush2.bf16.msra.mxu0 0
  %472 = vmatprep.subr.bf16.mxu0 0
  %473 = vmatpush2.bf16.msra.mxu0 0
  %474 = vmatprep.subr.bf16.mxu0 0
  %475 = vmatpush2.bf16.msra.mxu0 0
  %476 = vmatprep.subr.bf16.mxu0 0
  %477 = vmatpush2.bf16.msra.mxu0 0
  %478 = vmatprep.subr.bf16.mxu0 0
  %479 = vmatpush2.bf16.msra.mxu0 0
  %480 = vmatprep.subr.bf16.mxu0 0
  %481 = vmatpush2.bf16.msra.mxu0 0
  %482 = vmatprep.mubr.bf16.mxu0 0
  %483 = vmatmul.mubr.bf16.gmra.mxu0 %v448
  %v484 = vpop.f32.mrf.mxu0
  %v485 = vadd.f32 0.0, %v484
  %v486 = vpop.f32.mrf.mxu0
  %v487 = vpop.f32.mrf.mxu0
  %v488 = vpop.f32.mrf.mxu0
  %489 = vdwg.mxu0
  %v490 = vpack.c.bf16 %v485, %v485
  %v492 = vsel %vm234, %v490, 0
  %494 = vmatprep.subr.bf16.mxu0 0
  %495 = vmatpush1.bf16.msra.mxu0 0
  %496 = vmatprep.subr.bf16.mxu0 0
  %497 = vmatpush1.bf16.msra.mxu0 0
  %498 = vmatprep.subr.bf16.mxu0 0
  %499 = vmatpush1.bf16.msra.mxu0 0
  %500 = vmatprep.subr.bf16.mxu0 0
  %501 = vmatpush1.bf16.msra.mxu0 0
  %502 = vmatprep.subr.bf16.mxu0 0
  %503 = vmatpush1.bf16.msra.mxu0 0
  %504 = vmatprep.subr.bf16.mxu0 0
  %505 = vmatpush1.bf16.msra.mxu0 0
  %506 = vmatprep.subr.bf16.mxu0 0
  %507 = vmatpush1.bf16.msra.mxu0 0
  %508 = vmatprep.subr.bf16.mxu0 0
  %509 = vmatpush1.bf16.msra.mxu0 %v444
  %510 = vmatprep.subr.bf16.mxu0 0
  %511 = vmatpush2.bf16.msra.mxu0 0
  %512 = vmatprep.subr.bf16.mxu0 0
  %513 = vmatpush2.bf16.msra.mxu0 0
  %514 = vmatprep.subr.bf16.mxu0 0
  %515 = vmatpush2.bf16.msra.mxu0 0
  %516 = vmatprep.subr.bf16.mxu0 0
  %517 = vmatpush2.bf16.msra.mxu0 0
  %518 = vmatprep.subr.bf16.mxu0 0
  %519 = vmatpush2.bf16.msra.mxu0 0
  %520 = vmatprep.subr.bf16.mxu0 0
  %521 = vmatpush2.bf16.msra.mxu0 0
  %522 = vmatprep.subr.bf16.mxu0 0
  %523 = vmatpush2.bf16.msra.mxu0 0
  %524 = vmatprep.subr.bf16.mxu0 0
  %525 = vmatpush2.bf16.msra.mxu0 0
  %526 = vmatprep.mubr.bf16.mxu0 0
  %527 = vmatmul.mubr.bf16.gmra.mxu0 %v492
  %v528 = vpop.f32.mrf.mxu0
  %v529 = vadd.f32 0.0, %v528
  %v530 = vpop.f32.mrf.mxu0
  %v531 = vpop.f32.mrf.mxu0
  %v532 = vpop.f32.mrf.mxu0
  %533 = vdwg.mxu0
  %534 = vst.msk [vmem:[%s3] sm:$0xff] %vm234, %v529
  // Predicated region
  $region14: #{cam_forward.10} parent=0 // pred_check
    _
  $region15: #{cam_forward.10} parent=0 // pred_check_branch
    %536 = sbr.rel (0) target = $region17
  $region16: #{cam_forward.10} parent=0 // pred_region
    _
  $region17: #{cam_forward.10} parent=0 // pred_fallthru
    _
  // Predicated region
  $region18: #{cam_forward.10} parent=0 // pred_check
    _
  $region19: #{cam_forward.10} parent=0 // pred_check_branch
    %538 = sbr.rel (0) target = $region21
  $region20: #{cam_forward.10} parent=0 // pred_region
    _
  $region21: #{cam_forward.10} parent=0 // pred_fallthru
    _

// kernel: cam_forward.11
$region0: #{cam_forward.11}
  #allocation0 [shape = 'u32[]', space=smem, size = 0x4, offset = 0x4, fixed_abs, tag = 'smem constant byte address 0x4 - core index']
  #allocation1 [shape = 'u32[144,128]{1,0:T(1,128)}', space=vmem, size = 0x12000, scoped, tag = 'internal scratch']
  %s0 = inlined_call_operand.vmem [shape: f32[8], index: 0, kind: input, shape index: {}]
  %s1 = inlined_call_operand.vmem [shape: f32[1,8,16], index: 1, kind: input, shape index: {}]
  %s2 = inlined_call_operand.vmem [shape: f32[1,192,16], index: 2, kind: input, shape index: {}]
  %s3 = inlined_call_operand.vmem [shape: f32[1,8,16], index: 3, kind: output, shape index: {}]
  %s4 = sld [smem:[#allocation0]]
  $region26: #{cam_forward.11} parent=0
    _
  %s6 = ssub.s32 1, %s4
  %s7 = scalar_select 0, %s6, %s4
  $region1: #{cam_forward.11} parent=0
    #allocation2 [shape = 'u8[512]{0}', space=smem, size = 0x200, scoped, tag = 'input window, operand 0, single buffered']
    #allocation3 [shape = 's32[1]{0}', space=sflag, size = 0x4, scoped, tag = 'scoped memory for cam_forward.11']
    %8 = vsyncpa [#allocation3], 0
    // Predicated region
    $region2: #{cam_forward.11} parent=1 // pred_check
      _
    $region3: #{cam_forward.11} parent=1 // pred_check_branch
      %10 = sbr.rel (0) target = $region5
    $region4: #{cam_forward.11} parent=1 // pred_region
      %s12 = ssub.s32 16, 16
      %13 = vsyncadd [#allocation3], %s12
      %s15 = sshll.u32 %s0, 4
      %s16 = int_to_ptr.vmem [resolvable:$true] %s15
      %18 = dma.vmem_to_smem %s16, 16, [#allocation2], [#allocation3]
    $region5: #{cam_forward.11} parent=1 // pred_fallthru
      _
    // Predicated region
    $region6: #{cam_forward.11} parent=1 // pred_check
      _
    $region7: #{cam_forward.11} parent=1 // pred_check_branch
      %20 = sbr.rel (0) target = $region9
    $region8: #{cam_forward.11} parent=1 // pred_region
      _
    $region9: #{cam_forward.11} parent=1 // pred_fallthru
      _
    // Predicated region
    $region10: #{cam_forward.11} parent=1 // pred_check
      _
    $region11: #{cam_forward.11} parent=1 // pred_check_branch
      %22 = sbr.rel (0) target = $region13
    $region12: #{cam_forward.11} parent=1 // pred_region
      _
    $region13: #{cam_forward.11} parent=1 // pred_fallthru
      _
    // Predicated region
    $region14: #{cam_forward.11} parent=1 // pred_check
      _
    $region15: #{cam_forward.11} parent=1 // pred_check_branch
      %24 = sbr.rel (0) target = $region17
    $region16: #{cam_forward.11} parent=1 // pred_region
      %25 = dma.done [#allocation3], 16
    $region17: #{cam_forward.11} parent=1 // pred_fallthru
      _
    %26 = sfence
    %v28 = vld [vmem:[%s1] sm:$0xff]
    %v29 = vlaneseq
    %v30 = vshrl.u32 %v29, 7
    %vm31 = vcmp.eq.s32.totalorder %v30, 0
    %v32 = vsel %vm31, 0.3, 1.0
    %v33 = vmul.f32 %v28, %v32
    %vm34 = vcmask 130048
    %v35 = vsel %vm34, %v33, -inf
    %v36 = vrot.slane %v35, 4
    %v37 = vmax.f32 %v35, %v36
    %v38 = vrot.slane %v37, 2
    %v39 = vmax.f32 %v37, %v38
    %v40 = vrot.slane %v39, 1
    %v41 = vmax.f32 %v39, %v40
    %vm42 = vcmp.eq.f32.partialorder %v33, %v41
    %v43 = vsel %vm42, %v30, 8
    %v44 = vsel %vm34, %v43, 2147483647
    %v45 = vrot.slane %v44, 4
    %vm46 = vcmp.lt.s32.totalorder %v44, %v45
    %v47 = vsel %vm46, %v44, %v45
    %v48 = vrot.slane %v47, 2
    %vm49 = vcmp.lt.s32.totalorder %v47, %v48
    %v50 = vsel %vm49, %v47, %v48
    %v51 = vrot.slane %v50, 1
    %vm52 = vcmp.lt.s32.totalorder %v50, %v51
    %v53 = vsel %vm52, %v50, %v51
    %vm54 = vcmp.eq.s32.totalorder %v30, %v53
    %v55 = vsel %vm54, 1, 0
    %v56 = vcvt.s32.f32 %v55
    %s57 = sld [smem:[#allocation2]]
    %v58 = vstv %s57
    %v59 = vsel %vm31, %v58, 0.0
    %vm60 = vcmp.eq.s32.totalorder %v30, 1
    %s61 = sld [smem:[#allocation2 + $0x1]]
    %v62 = vstv %s61
    %v63 = vsel %vm60, %v62, %v59
    %vm64 = vcmp.eq.s32.totalorder %v30, 2
    %s65 = sld [smem:[#allocation2 + $0x2]]
    %v66 = vstv %s65
    %v67 = vsel %vm64, %v66, %v63
    %vm68 = vcmp.eq.s32.totalorder %v30, 3
    %s69 = sld [smem:[#allocation2 + $0x3]]
    %v70 = vstv %s69
    %v71 = vsel %vm68, %v70, %v67
    %vm72 = vcmp.eq.s32.totalorder %v30, 4
    %s73 = sld [smem:[#allocation2 + $0x4]]
    %v74 = vstv %s73
    %v75 = vsel %vm72, %v74, %v71
    %vm76 = vcmp.eq.s32.totalorder %v30, 5
    %s77 = sld [smem:[#allocation2 + $0x5]]
    %v78 = vstv %s77
    %v79 = vsel %vm76, %v78, %v75
    %vm80 = vcmp.eq.s32.totalorder %v30, 6
    %s81 = sld [smem:[#allocation2 + $0x6]]
    %v82 = vstv %s81
    %v83 = vsel %vm80, %v82, %v79
    %vm84 = vcmp.eq.s32.totalorder %v30, 7
    %s85 = sld [smem:[#allocation2 + $0x7]]
    %v86 = vstv %s85
    %v87 = vsel %vm84, %v86, %v83
    %v88 = vmul.f32 %v56, %v87
    %v89 = vld [vmem:[%s2] sm:$0xff]
    %v90 = vld [vmem:[%s2 + $0x8] sm:$0xff]
    %v91 = vld [vmem:[%s2 + $0x10] sm:$0xff]
    %v92 = vld [vmem:[%s2 + $0x18] sm:$0xff]
    %v93 = vld [vmem:[%s2 + $0x20] sm:$0xff]
    %v94 = vld [vmem:[%s2 + $0x28] sm:$0xff]
    %v95 = vld [vmem:[%s2 + $0x30] sm:$0xff]
    %v96 = vld [vmem:[%s2 + $0x38] sm:$0xff]
    %v97 = vld [vmem:[%s2 + $0x40] sm:$0xff]
    %v98 = vld [vmem:[%s2 + $0x48] sm:$0xff]
    %v99 = vld [vmem:[%s2 + $0x50] sm:$0xff]
    %v100 = vld [vmem:[%s2 + $0x58] sm:$0xff]
    %v101 = vld [vmem:[%s2 + $0x60] sm:$0xff]
    %v102 = vld [vmem:[%s2 + $0x68] sm:$0xff]
    %v103 = vld [vmem:[%s2 + $0x70] sm:$0xff]
    %v104 = vld [vmem:[%s2 + $0x78] sm:$0xff]
    %v105 = vld [vmem:[%s2 + $0x80] sm:$0xff]
    %v106 = vld [vmem:[%s2 + $0x88] sm:$0xff]
    %v107 = vld [vmem:[%s2 + $0x90] sm:$0xff]
    %v108 = vld [vmem:[%s2 + $0x98] sm:$0xff]
    %v109 = vld [vmem:[%s2 + $0xa0] sm:$0xff]
    %v110 = vld [vmem:[%s2 + $0xa8] sm:$0xff]
    %v111 = vld [vmem:[%s2 + $0xb0] sm:$0xff]
    %v112 = vld [vmem:[%s2 + $0xb8] sm:$0xff]
    %v113 = vpack.c.bf16 %v88, %v88
    %v114 = vpack.c.bf16 %v90, %v89
    %v115 = vpack.c.bf16 %v92, %v91
    %v116 = vpack.c.bf16 %v94, %v93
    %v117 = vpack.c.bf16 %v96, %v95
    %v118 = vpack.c.bf16 %v98, %v97
    %v119 = vpack.c.bf16 %v100, %v99
    %v120 = vpack.c.bf16 %v102, %v101
    %v121 = vpack.c.bf16 %v104, %v103
    %v122 = vpack.c.bf16 %v106, %v105
    %v123 = vpack.c.bf16 %v108, %v107
    %v124 = vpack.c.bf16 %v110, %v109
    %v125 = vpack.c.bf16 %v112, %v111
    %v127 = vsel %vm34, %v113, 0
    %v130 = vsel %vm34, %v114, 0
    %v133 = vsel %vm34, %v115, 0
    %v136 = vsel %vm34, %v116, 0
    %v139 = vsel %vm34, %v117, 0
    %v142 = vsel %vm34, %v118, 0
    %v145 = vsel %vm34, %v119, 0
    %v148 = vsel %vm34, %v120, 0
    %v151 = vsel %vm34, %v121, 0
    %v154 = vsel %vm34, %v122, 0
    %v157 = vsel %vm34, %v123, 0
    %v160 = vsel %vm34, %v124, 0
    %v163 = vsel %vm34, %v125, 0
    %165 = vmatprep.subr.bf16.mxu0 0
    %166 = vmatpush1.bf16.xpose.msra.mxu0 %v151
    %167 = vmatprep.subr.bf16.mxu0 0
    %168 = vmatpush1.bf16.xpose.msra.mxu0 %v148
    %169 = vmatprep.subr.bf16.mxu0 0
    %170 = vmatpush1.bf16.xpose.msra.mxu0 %v145
    %171 = vmatprep.subr.bf16.mxu0 0
    %172 = vmatpush1.bf16.xpose.msra.mxu0 %v142
    %173 = vmatprep.subr.bf16.mxu0 0
    %174 = vmatpush1.bf16.xpose.msra.mxu0 %v139
    %175 = vmatprep.subr.bf16.mxu0 0
    %176 = vmatpush1.bf16.xpose.msra.mxu0 %v136
    %177 = vmatprep.subr.bf16.mxu0 0
    %178 = vmatpush1.bf16.xpose.msra.mxu0 %v133
    %179 = vmatprep.subr.bf16.mxu0 0
    %180 = vmatpush1.bf16.xpose.msra.mxu0 %v130
    %181 = vmatprep.subr.bf16.mxu0 0
    %182 = vmatpush2.bf16.xpose.msra.mxu0 0
    %183 = vmatprep.subr.bf16.mxu0 0
    %184 = vmatpush2.bf16.xpose.msra.mxu0 0
    %185 = vmatprep.subr.bf16.mxu0 0
    %186 = vmatpush2.bf16.xpose.msra.mxu0 0
    %187 = vmatprep.subr.bf16.mxu0 0
    %188 = vmatpush2.bf16.xpose.msra.mxu0 0
    %189 = vmatprep.subr.bf16.mxu0 0
    %190 = vmatpush2.bf16.xpose.msra.mxu0 %v163
    %191 = vmatprep.subr.bf16.mxu0 0
    %192 = vmatpush2.bf16.xpose.msra.mxu0 %v160
    %193 = vmatprep.subr.bf16.mxu0 0
    %194 = vmatpush2.bf16.xpose.msra.mxu0 %v157
    %195 = vmatprep.subr.bf16.mxu0 0
    %196 = vmatpush2.bf16.xpose.msra.mxu0 %v154
    %197 = vmatprep.mubr.bf16.mxu0 0
    %198 = vmatmul.mubr.bf16.gmra.mxu0 %v127
    %v199 = vpop.f32.mrf.mxu0
    %v200 = vadd.f32 0.0, %v199
    %v201 = vpop.f32.mrf.mxu0
    %v202 = vadd.f32 0.0, %v201
    %v203 = vpop.f32.mrf.mxu0
    %v204 = vpop.f32.mrf.mxu0
    %205 = vdwg.mxu0
    %v206 = vmul.f32 %v200, 0.0625
    %v207 = vmul.f32 %v202, 0.0625
    %v208 = vpack.c.bf16 %v206, %v206
    %v209 = vpack.c.bf16 %v207, %v207
    %vm210 = vcmask 523264
    %v212 = vsel %vm210, %v209, 0
    %214 = vmatprep.subr.bf16.mxu0 0
    %215 = vmatpush1.bf16.msra.mxu0 %v121
    %216 = vmatprep.subr.bf16.mxu0 0
    %217 = vmatpush1.bf16.msra.mxu0 %v120
    %218 = vmatprep.subr.bf16.mxu0 0
    %219 = vmatpush1.bf16.msra.mxu0 %v119
    %220 = vmatprep.subr.bf16.mxu0 0
    %221 = vmatpush1.bf16.msra.mxu0 %v118
    %222 = vmatprep.subr.bf16.mxu0 0
    %223 = vmatpush1.bf16.msra.mxu0 %v117
    %224 = vmatprep.subr.bf16.mxu0 0
    %225 = vmatpush1.bf16.msra.mxu0 %v116
    %226 = vmatprep.subr.bf16.mxu0 0
    %227 = vmatpush1.bf16.msra.mxu0 %v115
    %228 = vmatprep.subr.bf16.mxu0 0
    %229 = vmatpush1.bf16.msra.mxu0 %v114
    %230 = vmatprep.subr.bf16.mxu0 0
    %231 = vmatpush2.bf16.msra.mxu0 0
    %232 = vmatprep.subr.bf16.mxu0 0
    %233 = vmatpush2.bf16.msra.mxu0 0
    %234 = vmatprep.subr.bf16.mxu0 0
    %235 = vmatpush2.bf16.msra.mxu0 0
    %236 = vmatprep.subr.bf16.mxu0 0
    %237 = vmatpush2.bf16.msra.mxu0 0
    %238 = vmatprep.subr.bf16.mxu0 0
    %239 = vmatpush2.bf16.msra.mxu0 %v125
    %240 = vmatprep.subr.bf16.mxu0 0
    %241 = vmatpush2.bf16.msra.mxu0 %v124
    %242 = vmatprep.subr.bf16.mxu0 0
    %243 = vmatpush2.bf16.msra.mxu0 %v123
    %244 = vmatprep.subr.bf16.mxu0 0
    %245 = vmatpush2.bf16.msra.mxu0 %v122
    %246 = vmatprep.mubr.bf16.mxu0 %v212
    %247 = vmatmul.mubr.bf16.gmra.mxu0 %v208
    %v248 = vpop.f32.mrf.mxu0
    %v249 = vadd.f32 0.0, %v248
    %v250 = vpop.f32.mrf.mxu0
    %v251 = vpop.f32.mrf.mxu0
    %v252 = vpop.f32.mrf.mxu0
    %253 = vdwg.mxu0
    %v254 = vmul.f32 %v206, %v206
    %v255 = vmul.f32 %v207, %v207
    %v256 = vsel %vm210, %v255, 0.0
    %v257 = vadd.f32 %v254, %v256
    %258 = vadd.xlane.f32.xlu0 %v257
    %v259 = vpop.xlane.xlu0 %258
    %v260 = vrsqrt.pop %v259
    %v261 = vmul.f32 %v259, %v260
    %vm262 = vcmp.eq.f32.partialorder %v259, inf
    %v263 = vsel %vm262, %v259, %v261
    %vm264 = vcmp.eq.f32.partialorder %v259, 0.0
    %v265 = vand.u32 %v259, 2147483648
    %v266 = vsel %vm264, %v265, %v263
    %v267 = vmul.f32 %v89, %v89
    %v268 = vmul.f32 %v90, %v90
    %v269 = vmul.f32 %v91, %v91
    %v270 = vmul.f32 %v92, %v92
    %v271 = vmul.f32 %v93, %v93
    %v272 = vmul.f32 %v94, %v94
    %v273 = vmul.f32 %v95, %v95
    %v274 = vmul.f32 %v96, %v96
    %v275 = vmul.f32 %v97, %v97
    %v276 = vmul.f32 %v98, %v98
    %v277 = vmul.f32 %v99, %v99
    %v278 = vmul.f32 %v100, %v100
    %v279 = vmul.f32 %v101, %v101
    %v280 = vmul.f32 %v102, %v102
    %v281 = vmul.f32 %v103, %v103
    %v282 = vmul.f32 %v104, %v104
    %v283 = vmul.f32 %v105, %v105
    %v284 = vmul.f32 %v106, %v106
    %v285 = vmul.f32 %v107, %v107
    %v286 = vmul.f32 %v108, %v108
    %v287 = vmul.f32 %v109, %v109
    %v288 = vmul.f32 %v110, %v110
    %v289 = vmul.f32 %v111, %v111
    %v290 = vmul.f32 %v112, %v112
    %v291 = vsel %vm34, %v267, 0.0
    %v292 = vsel %vm34, %v268, 0.0
    %v293 = vadd.f32 %v291, %v292
    %v294 = vsel %vm34, %v269, 0.0
    %v295 = vadd.f32 %v293, %v294
    %v296 = vsel %vm34, %v270, 0.0
    %v297 = vadd.f32 %v295, %v296
    %v298 = vsel %vm34, %v271, 0.0
    %v299 = vadd.f32 %v297, %v298
    %v300 = vsel %vm34, %v272, 0.0
    %v301 = vadd.f32 %v299, %v300
    %v302 = vsel %vm34, %v273, 0.0
    %v303 = vadd.f32 %v301, %v302
    %v304 = vsel %vm34, %v274, 0.0
    %v305 = vadd.f32 %v303, %v304
    %v306 = vsel %vm34, %v275, 0.0
    %v307 = vadd.f32 %v305, %v306
    %v308 = vsel %vm34, %v276, 0.0
    %v309 = vadd.f32 %v307, %v308
    %v310 = vsel %vm34, %v277, 0.0
    %v311 = vadd.f32 %v309, %v310
    %v312 = vsel %vm34, %v278, 0.0
    %v313 = vadd.f32 %v311, %v312
    %v314 = vsel %vm34, %v279, 0.0
    %v315 = vadd.f32 %v313, %v314
    %v316 = vsel %vm34, %v280, 0.0
    %v317 = vadd.f32 %v315, %v316
    %v318 = vsel %vm34, %v281, 0.0
    %v319 = vadd.f32 %v317, %v318
    %v320 = vsel %vm34, %v282, 0.0
    %v321 = vadd.f32 %v319, %v320
    %v322 = vsel %vm34, %v283, 0.0
    %v323 = vadd.f32 %v321, %v322
    %v324 = vsel %vm34, %v284, 0.0
    %v325 = vadd.f32 %v323, %v324
    %v326 = vsel %vm34, %v285, 0.0
    %v327 = vadd.f32 %v325, %v326
    %v328 = vsel %vm34, %v286, 0.0
    %v329 = vadd.f32 %v327, %v328
    %v330 = vsel %vm34, %v287, 0.0
    %v331 = vadd.f32 %v329, %v330
    %v332 = vsel %vm34, %v288, 0.0
    %v333 = vadd.f32 %v331, %v332
    %v334 = vsel %vm34, %v289, 0.0
    %v335 = vadd.f32 %v333, %v334
    %v336 = vsel %vm34, %v290, 0.0
    %v337 = vadd.f32 %v335, %v336
    %v338 = vrot.slane %v337, 4
    %v339 = vadd.f32 %v337, %v338
    %v340 = vrot.slane %v339, 2
    %v341 = vadd.f32 %v339, %v340
    %v342 = vrot.slane %v341, 1
    %v343 = vadd.f32 %v341, %v342
    %v344 = vrsqrt.pop %v343
    %v345 = vmul.f32 %v343, %v344
    %vm346 = vcmp.eq.f32.partialorder %v343, inf
    %v347 = vsel %vm346, %v343, %v345
    %vm348 = vcmp.eq.f32.partialorder %v343, 0.0
    %v349 = vand.u32 %v343, 2147483648
    %v350 = vsel %vm348, %v349, %v347
    %v351 = vmax.f32 %v266, 1e-08
    %v352 = vmax.f32 %v350, 1e-08
    %v353 = vmul.f32 %v351, %v352
    %v354 = vrcp.pop %v353
    %v355 = vmul.f32 %v249, %v354
    %v356 = vmax.f32 %v355, 0.0
    %357 = vst.msk [vmem:[%s3] sm:$0xff] %vm34, %v356
    // Predicated region
    $region18: #{cam_forward.11} parent=1 // pred_check
      _
    $region19: #{cam_forward.11} parent=1 // pred_check_branch
      %359 = sbr.rel (0) target = $region21
    $region20: #{cam_forward.11} parent=1 // pred_region
      _
    $region21: #{cam_forward.11} parent=1 // pred_fallthru
      _
    // Predicated region
    $region22: #{cam_forward.11} parent=1 // pred_check
      _
    $region23: #{cam_forward.11} parent=1 // pred_check_branch
      %361 = sbr.rel (0) target = $region25
    $region24: #{cam_forward.11} parent=1 // pred_region
      _
    $region25: #{cam_forward.11} parent=1 // pred_fallthru
      _
    %362 = vsyncpa [#allocation3], 1

</llo_original>
